<compile_context>
chip_gen: v5e
topology: v5e:2x2
jax: 0.10.0
libtpu: 0.0.40
codegen_flags: <defaults>
</compile_context>

<pallas_src>
import functools

import numpy as np
import jax
import jax.numpy as jnp
from jax.experimental import pallas as pl
from jax.experimental.pallas import tpu as pltpu


# ----------------------------------------------------------------------------
# Pallas kernel: one grid step == one block of B beads.
#   W          = x*wv0 + y*wv1 + z*wv2                        (complex, per bead)
#   PPM        = exp(-1j * W)
#   PF_{f,q}   = fac_f * PupilMatrix_q   with fac_0 = PPM, fac_{1+k} = -1j*wv_k*PPM
#   FM_{f,q}   = PF_{f,q} @ Op           (combined chirp-z transform)
#   PSF        = 1/(3*normint) * sum_q |FM_{0,q}|^2
#   PSFder_k   = 2/(3*normint) * sum_q Re(conj(FM_{0,q}) * FM_{1+k,q})
#   mu         = I*PSF + bg ;  output slab = [mu | I*PSFder_{0..2} | PSF]
# ----------------------------------------------------------------------------
def _vectorial_psf_kernel(c_ref,              # SMEM (1,)   : 1/(3*normint)
                          theta_ref,          # VMEM (B, 8) : [x,y,z,I,bg,0,0,0]
                          wvr_ref, wvi_ref,   # VMEM (8, P2): rows 0..2 = wavevector
                          pmr_ref, pmi_ref,   # VMEM (8, P2): rows 0..5 = pupil chans
                          opr_ref, opi_ref,   # VMEM (P2, MM): CZT operator re / im
                          ops_ref,            # VMEM (P2, MM): op_re + op_im (Karatsuba)
                          out_ref,            # VMEM (B, 5*MM): [mu|dx|dy|dz|psf]
                          pfr_ref, pfi_ref, pfs_ref,   # VMEM scratch (24*B, P2)
                          t1_ref, t2_ref, t3_ref,      # VMEM scratch (24*B, MM)
                          fm0r_ref, fm0i_ref,          # VMEM scratch (6*B, MM)
                          *, B, MM):
    # NOTE: jnp.dot with f32 operands in Mosaic keeps full f32 accumulation
    # here (deliberate choice over bf16 casting; see header).
    dot = functools.partial(jnp.dot, preferred_element_type=jnp.float32)
    inv3 = c_ref[0]                           # 1/(3*normint)

    th = theta_ref[...]                       # (B, 8)
    x, y, z = th[:, 0:1], th[:, 1:2], th[:, 2:3]
    photons, bg = th[:, 3:4], th[:, 4:5]

    # position phase  W = x*wv0 + y*wv1 + z*wv2   (broadcast FMAs, no MXU)
    w_re = x * wvr_ref[0:1, :] + y * wvr_ref[1:2, :] + z * wvr_ref[2:3, :]
    w_im = x * wvi_ref[0:1, :] + y * wvi_ref[1:2, :] + z * wvi_ref[2:3, :]
    amp = jnp.exp(w_im)                       # exp(-1j*W) = e^{Wim}(cos Wre - 1j sin Wre)
    ppm_re = amp * jnp.cos(w_re)
    ppm_im = -(amp * jnp.sin(w_re))

    # stacked pupil fields: row block (f*6+q)*B .. +B  holds  fac_f * pm_q
    # (pfs rows hold re+im for the Karatsuba third matmul)
    for f in range(4):
        if f == 0:
            fr, fi = ppm_re, ppm_im
        else:
            wr = wvr_ref[f - 1:f, :]          # (1, P2)
            wi = wvi_ref[f - 1:f, :]
            fr = wi * ppm_re + wr * ppm_im    # (-1j * wv_{f-1}) * PPM, real part
            fi = wi * ppm_im - wr * ppm_re    # imag part
        for q in range(6):
            pr = pmr_ref[q:q + 1, :]          # (1, P2)
            pi = pmi_ref[q:q + 1, :]
            r0 = (f * 6 + q) * B
            re = fr * pr - fi * pi
            im = fr * pi + fi * pr
            pfr_ref[r0:r0 + B, :] = re
            pfi_ref[r0:r0 + B, :] = im
            pfs_ref[r0:r0 + B, :] = re + im

    # combined chirp-z transform of all stacked channels, Karatsuba 3-matmul
    # complex product.  Each scratch buffer is written exactly once (no RMW);
    # the complex combine is fused into the reductions below.
    t1_ref[...] = dot(pfr_ref[...], opr_ref[...])     # Ar @ Br
    t2_ref[...] = dot(pfi_ref[...], opi_ref[...])     # Ai @ Bi
    t3_ref[...] = dot(pfs_ref[...], ops_ref[...])     # (Ar+Ai) @ (Br+Bi)

    # field matrix of the f=0 (PSF) channels, kept for all three derivatives
    C0 = 6 * B
    fm0r_ref[...] = t1_ref[0:C0, :] - t2_ref[0:C0, :]
    fm0i_ref[...] = t3_ref[0:C0, :] - t1_ref[0:C0, :] - t2_ref[0:C0, :]

    # PSF = inv3 * sum_q |FM_{0,q}|^2 ;  mu = I*PSF + bg
    psf = None
    for q in range(6):
        ar = fm0r_ref[q * B:(q + 1) * B, :]
        ai = fm0i_ref[q * B:(q + 1) * B, :]
        t = ar * ar + ai * ai
        psf = t if psf is None else psf + t
    psf = psf * inv3
    out_ref[:, 0:MM] = photons * psf + bg             # mu
    out_ref[:, 4 * MM:5 * MM] = psf                   # dmu/dI plane

    # PSF derivatives: 2*inv3 * sum_q Re(conj(FM_{0,q}) * FM_{1+k,q})
    two_inv3 = 2.0 * inv3
    for k in range(3):
        der = None
        for q in range(6):
            r0 = q * B
            rk = ((k + 1) * 6 + q) * B
            m1 = t1_ref[rk:rk + B, :]
            m2 = t2_ref[rk:rk + B, :]
            m3 = t3_ref[rk:rk + B, :]
            fkr = m1 - m2                              # Re FM_{1+k,q}
            fki = m3 - m1 - m2                         # Im FM_{1+k,q}
            a0r = fm0r_ref[r0:r0 + B, :]
            a0i = fm0i_ref[r0:r0 + B, :]
            t = a0r * fkr + a0i * fki
            der = t if der is None else der + t
        out_ref[:, (k + 1) * MM:(k + 2) * MM] = photons * (der * two_inv3)


# ----------------------------------------------------------------------------
# Glue: turn the Bluestein (A, B, D) chirp vectors into the equivalent dense
# CZT operator   out[m] = Bmt[m] * sum_n d[(m-n) mod L] * Amt[n] * in[n],
# where d = ifft(Dmt).  This is exactly what cztfunc2D/3D compute via FFTs.
# ----------------------------------------------------------------------------
def _czt_matrix(Amt, Bmt, Dmt, N, M, L):
    d = jnp.fft.ifft(Dmt.astype(jnp.complex64))
    idx = (jnp.arange(M)[:, None] - jnp.arange(N)[None, :]) % L
    return (Bmt.astype(jnp.complex64)[:, None]
            * Amt.astype(jnp.complex64)[None, :]
            * d[idx])


def _round_up(v, m):
    return ((v + m - 1) // m) * m


def model_vectorial_psf_forward(NA, zvals, refmed, refcov, refimm, refimmnom,
                                Lambda, Npupil, abberations, zmin, zmax, K,
                                N, M, L, Ax, Bx, Dx, Ay, pixelsize, By, Dy,
                                Mx, My, numparams_fit, thetatry, dev, zstack,
                                wavevector, wavevectorzimm, all_zernikes,
                                PupilMatrix):
    # TODO(synk): zstack=True branch (per-z pupil recomputation via
    # get_pupil_matrix + Zernike-aberration derivative channels) is not
    # implemented as a Pallas kernel; only the zstack=False bead path is.
    assert not zstack
    assert int(N) == int(Npupil) and int(Mx) == int(M) and int(My) == int(M)
    del zvals, refmed, refcov, refimm, refimmnom, abberations, zmin, zmax, K
    del dev, wavevectorzimm, all_zernikes

    f32 = jnp.float32
    nb = thetatry.shape[0]
    numparams = int(numparams_fit)
    assert numparams >= 5
    Np = int(Npupil)
    Mx = int(Mx)
    My = int(My)
    P2 = Np * Np
    MM = Mx * My

    # TODO(synk): at large Npupil/ROI the dense Kronecker operator grows as
    # O(Npupil^2 * Mx * My); switch to a two-stage separable stacked CZT there.
    assert 3 * P2 * MM * 4 <= 8 * (1 << 20), \
        "dense Kronecker CZT operator too large; use the separable path"

    # adaptive bead block size: multiple of 8, capped at 32, and preferring
    # >= 2 grid steps (so the 'parallel' axis can use both v7x TensorCores)
    B = min(32, _round_up(nb, 8))
    if nb > 8 and _round_up(nb, B) == B:
        B = max(8, _round_up((nb + 1) // 2, 8))
    nb_pad = _round_up(nb, B)               # padded beads (photons=0) are harmless
    C = 24 * B                              # stacked channel rows per block

    # combined (Kronecker) chirp-z operator: Op[(i,j),(mx,my)] = Tx[mx,i]*Ty[my,j]
    Tx = _czt_matrix(Ax, Bx, Dx, N, Mx, L)                     # (Mx, Np)
    Ty = _czt_matrix(Ay, By, Dy, N, My, L)                     # (My, Np)
    Op = jnp.einsum('xi,yj->ijxy', Tx, Ty).reshape(P2, MM)     # (Np^2, Mx*My)
    op_re = jnp.real(Op).astype(f32)
    op_im = jnp.imag(Op).astype(f32)
    op_sum = op_re + op_im                                     # Karatsuba RHS

    # flattened pupil-plane constants (padded to 8 rows for clean layout)
    wv_flat = jnp.transpose(wavevector.astype(jnp.complex64), (2, 0, 1)).reshape(3, P2)
    wv_re = jnp.zeros((8, P2), f32).at[:3].set(jnp.real(wv_flat).astype(f32))
    wv_im = jnp.zeros((8, P2), f32).at[:3].set(jnp.imag(wv_flat).astype(f32))
    pm_flat = jnp.transpose(PupilMatrix.astype(jnp.complex64),
                            (2, 3, 0, 1)).reshape(6, P2)
    pm_re = jnp.zeros((8, P2), f32).at[:6].set(jnp.real(pm_flat).astype(f32))
    pm_im = jnp.zeros((8, P2), f32).at[:6].set(jnp.imag(pm_flat).astype(f32))

    # bead parameters: [x, y, z, photons, bg, 0, 0, 0], zero-padded to nb_pad rows
    theta8 = jnp.zeros((nb_pad, 8), f32).at[:nb, :5].set(
        thetatry[:, :5].astype(f32))

    # normalization (bead independent) hoisted out of the kernel
    dxy = 2.0 * float(NA) / float(Lambda) / Np
    normfac = dxy * dxy / (float(pixelsize) ** 2)
    normint = normfac * jnp.sum(jnp.abs(PupilMatrix.astype(jnp.complex64)) ** 2) / 3.0
    c_scalar = (1.0 / (3.0 * normint)).astype(f32).reshape((1,))

    kernel = functools.partial(_vectorial_psf_kernel, B=B, MM=MM)

    out_flat = pl.pallas_call(
        kernel,
        out_shape=jax.ShapeDtypeStruct((nb_pad, 5 * MM), f32),
        grid=(nb_pad // B,),
        in_specs=[
            pl.BlockSpec(memory_space=pltpu.MemorySpace.SMEM),   # 1/(3*normint)
            pl.BlockSpec((B, 8), lambda b: (b, 0)),              # theta block
            pl.BlockSpec((8, P2), lambda b: (0, 0)),             # wavevector re
            pl.BlockSpec((8, P2), lambda b: (0, 0)),             # wavevector im
            pl.BlockSpec((8, P2), lambda b: (0, 0)),             # pupil re
            pl.BlockSpec((8, P2), lambda b: (0, 0)),             # pupil im
            pl.BlockSpec((P2, MM), lambda b: (0, 0)),            # Op re
            pl.BlockSpec((P2, MM), lambda b: (0, 0)),            # Op im
            pl.BlockSpec((P2, MM), lambda b: (0, 0)),            # Op re+im
        ],
        out_specs=pl.BlockSpec((B, 5 * MM), lambda b: (b, 0)),   # [mu|dx|dy|dz|psf]
        scratch_shapes=[pltpu.VMEM((C, P2), f32), pltpu.VMEM((C, P2), f32),
                        pltpu.VMEM((C, P2), f32),
                        pltpu.VMEM((C, MM), f32), pltpu.VMEM((C, MM), f32),
                        pltpu.VMEM((C, MM), f32),
                        pltpu.VMEM((6 * B, MM), f32), pltpu.VMEM((6 * B, MM), f32)],
        compiler_params=pltpu.CompilerParams(dimension_semantics=("parallel",)),
    )(c_scalar, theta8, wv_re, wv_im, pm_re, pm_im, op_re, op_im, op_sum)

    r = out_flat[:nb].reshape(nb, 5, Mx, My)
    mu = r[:, 0]
    d4 = jnp.transpose(r[:, 1:5], (0, 2, 3, 1))          # [dx, dy, dz, psf]
    parts = [d4, jnp.ones((nb, Mx, My, 1), f32)]
    if numparams > 5:
        parts.append(jnp.zeros((nb, Mx, My, numparams - 5), f32))
    dmudtheta = jnp.concatenate(parts, axis=-1)
    return mu, dmudtheta


# ----------------------------------------------------------------------------
# Pure-JAX reference mirroring the PyTorch code (zstack=False), used to check
# the kernel.  Uses the same FFT-based chirp-z transform as the torch module.
# ----------------------------------------------------------------------------
def _cztfunc2D_ref(N, M, L, datain, Amt, Bmt, Dmt):
    nb, P = datain.shape[0], datain.shape[1]
    cztin = jnp.zeros((nb, P, L, 2, 3), dtype=jnp.complex64)
    cztin = cztin.at[:, :, 0:N].set(Amt[None, :, None, None] * datain)
    temp = Dmt[None, :, None, None] * jnp.fft.fft(cztin, axis=2)
    cztout = jnp.fft.ifft(temp, axis=2)
    dataout = Bmt[None, :, None, None] * cztout[:, :, 0:M]
    return jnp.swapaxes(dataout, 1, 2)


def _cztfunc3D_ref(N, M, L, datain, Amt, Bmt, Dmt):
    nb, P = datain.shape[0], datain.shape[1]
    cztin = jnp.zeros((nb, P, L, 3, 2, 3), dtype=jnp.complex64)
    cztin = cztin.at[:, :, 0:N].set(Amt[None, :, None, None, None] * datain)
    temp = Dmt[None, :, None, None, None] * jnp.fft.fft(cztin, axis=2)
    cztout = jnp.fft.ifft(temp, axis=2)
    dataout = Bmt[None, :, None, None, None] * cztout[:, :, 0:M]
    return jnp.swapaxes(dataout, 1, 2)


def _forward_ref(NA, Lambda, Npupil, pixelsize, N, M, L, Ax, Bx, Dx, Ay, By, Dy,
                 Mx, My, numparams, theta, wavevector, PupilMatrix):
    nb = theta.shape[0]
    wv = jnp.tile(wavevector.astype(jnp.complex64)[None], (nb, 1, 1, 1))
    xe, ye, ze = theta[:, 0], theta[:, 1], theta[:, 2]
    Wpos = (xe[:, None, None] * wv[..., 0] + ye[:, None, None] * wv[..., 1]
            + ze[:, None, None] * wv[..., 2])
    PPM = jnp.exp(-1j * Wpos)
    PF = PPM[..., None, None] * PupilMatrix.astype(jnp.complex64)[None]
    PFD = jnp.stack([(-1j * wv[..., k])[..., None, None] * PF for k in range(3)], axis=3)
    II = _cztfunc2D_ref(N, M, L, PF, Ay, By, Dy)
    FM = _cztfunc2D_ref(N, M, L, II, Ax, Bx, Dx)
    II3 = _cztfunc3D_ref(N, M, L, PFD, Ay, By, Dy)
    FMD = _cztfunc3D_ref(N, M, L, II3, Ax, Bx, Dx)

    dxy = 2.0 * NA / Lambda / Npupil
    normint = (dxy ** 2 / pixelsize ** 2) * jnp.sum(jnp.abs(PupilMatrix) ** 2) / 3.0
    FreePSF = jnp.sum(jnp.abs(FM) ** 2, axis=(-1, -2)) / 3.0
    tmp = jnp.swapaxes(jnp.swapaxes(FMD, 3, 4), 4, 5)
    FreePSFder = (2.0 / 3.0) * jnp.sum(jnp.real(jnp.conj(FM)[..., None] * tmp),
                                       axis=(-3, -2))
    PSF = FreePSF / normint
    PSFder = FreePSFder / normint
    mu = theta[:, 3, None, None] * PSF + theta[:, 4, None, None]
    dmud = jnp.zeros((nb, Mx, My, numparams), jnp.float32)
    dmud = dmud.at[..., 0:3].set(theta[:, 3, None, None, None] * PSFder)
    dmud = dmud.at[..., 3].set(PSF)
    dmud = dmud.at[..., 4].set(1.0)
    return mu.astype(jnp.float32), dmud


def _check(got, ref):
    got = np.asarray(got)
    ref = np.asarray(ref)
    atol = 1e-4 * float(np.max(np.abs(ref)) + 1e-30)
    np.testing.assert_allclose(got, ref, rtol=5e-3, atol=atol)


if __name__ == "__main__":
    key = jax.random.PRNGKey(0)
    keys = jax.random.split(key, 8)

    nb = 2
    Npupil = 16
    N = Npupil
    M = Mx = My = 16
    L = N + M - 1
    numparams = 5
    NA, Lambda, pixelsize = 1.2, 0.5, 0.1
    K, zmin, zmax = 4, -0.5, 0.5

    # Bluestein chirp vectors (forward inputs of the module)
    def chirp(alpha, n_in, m_out, length):
        n = jnp.arange(n_in)
        m = jnp.arange(m_out)
        Amt = jnp.exp(-1j * jnp.pi * alpha * n ** 2).astype(jnp.complex64)
        Bmt = jnp.exp(-1j * jnp.pi * alpha * m ** 2).astype(jnp.complex64)
        l = jnp.arange(length)
        kk = jnp.where(l < m_out, l, length - l)
        Dmt = jnp.fft.fft(jnp.exp(1j * jnp.pi * alpha * kk ** 2)).astype(jnp.complex64)
        return Amt, Bmt, Dmt

    Ax, Bx, Dx = chirp(0.61 / N, N, Mx, L)
    Ay, By, Dy = chirp(0.43 / N, N, My, L)

    wavevector = (jax.random.normal(keys[0], (Npupil, Npupil, 3), jnp.float32)
                  + 1j * 0.02 * jax.random.normal(keys[1], (Npupil, Npupil, 3),
                                                  jnp.float32)).astype(jnp.complex64)
    PupilMatrix = (jax.random.normal(keys[2], (Npupil, Npupil, 2, 3), jnp.float32)
                   + 1j * jax.random.normal(keys[3], (Npupil, Npupil, 2, 3),
                                            jnp.float32)).astype(jnp.complex64)
    theta = jnp.concatenate([
        0.5 * jax.random.normal(keys[4], (nb, 3), jnp.float32),             # x, y, z
        800.0 + 200.0 * jax.random.uniform(keys[5], (nb, 1), jnp.float32),  # photons
        2.0 + jax.random.uniform(keys[6], (nb, 1), jnp.float32),            # background
    ], axis=1)

    # inputs that are unused in the zstack=False branch (kept for signature parity)
    zvals = jnp.zeros((3,), jnp.float32)
    abberations = jnp.zeros((8, 3), jnp.float32)
    all_zernikes = jnp.zeros((Npupil, Npupil, 8), jnp.float32)
    wavevectorzimm = jnp.zeros((Npupil, Npupil), jnp.complex64)

    mu, dmudtheta = model_vectorial_psf_forward(
        NA, zvals, 1.33, 1.52, 1.52, 1.52, Lambda, Npupil, abberations,
        zmin, zmax, K, N, M, L, Ax, Bx, Dx, Ay, pixelsize, By, Dy,
        Mx, My, numparams, theta, "tpu", False,
        wavevector, wavevectorzimm, all_zernikes, PupilMatrix)
    jax.block_until_ready(mu)
    jax.block_until_ready(dmudtheta)

    mu_ref, dmud_ref = _forward_ref(NA, Lambda, Npupil, pixelsize, N, M, L,
                                    Ax, Bx, Dx, Ay, By, Dy, Mx, My, numparams,
                                    theta, wavevector, PupilMatrix)
    _check(mu, mu_ref)
    _check(dmudtheta, dmud_ref)

    print("KERNEL_OK")
</pallas_src>

<mosaic_0001>
module attributes {stable_mosaic.version = 11 : i64} {
  func.func @_vectorial_psf_kernel(%arg0: i32, %arg1: memref<1xf32, #tpu.memory_space<smem>>, %arg2: memref<8x8xf32, #tpu.memory_space<vmem>>, %arg3: memref<8x256xf32, #tpu.memory_space<vmem>>, %arg4: memref<8x256xf32, #tpu.memory_space<vmem>>, %arg5: memref<8x256xf32, #tpu.memory_space<vmem>>, %arg6: memref<8x256xf32, #tpu.memory_space<vmem>>, %arg7: memref<256x256xf32, #tpu.memory_space<vmem>>, %arg8: memref<256x256xf32, #tpu.memory_space<vmem>>, %arg9: memref<256x256xf32, #tpu.memory_space<vmem>>, %arg10: memref<8x1280xf32, #tpu.memory_space<vmem>>, %arg11: memref<192x256xf32, #tpu.memory_space<vmem>>, %arg12: memref<192x256xf32, #tpu.memory_space<vmem>>, %arg13: memref<192x256xf32, #tpu.memory_space<vmem>>, %arg14: memref<192x256xf32, #tpu.memory_space<vmem>>, %arg15: memref<192x256xf32, #tpu.memory_space<vmem>>, %arg16: memref<192x256xf32, #tpu.memory_space<vmem>>, %arg17: memref<48x256xf32, #tpu.memory_space<vmem>>, %arg18: memref<48x256xf32, #tpu.memory_space<vmem>>) attributes {dimension_semantics = [#tpu.dimension_semantics<parallel>], iteration_bounds = array<i64: 1>, scalar_prefetch = 0 : i64, scratch_operands = 8 : i64, tpu.core_type = #tpu.core_type<tc>, window_params = [{transform_indices = @transform_0, window_bounds = array<i64: 1>}, {transform_indices = @transform_1, window_bounds = array<i64: 8, 8>}, {pipeline_mode = #tpu.pipeline_mode<synchronous>, transform_indices = @transform_2, window_bounds = array<i64: 8, 256>}, {pipeline_mode = #tpu.pipeline_mode<synchronous>, transform_indices = @transform_3, window_bounds = array<i64: 8, 256>}, {pipeline_mode = #tpu.pipeline_mode<synchronous>, transform_indices = @transform_4, window_bounds = array<i64: 8, 256>}, {pipeline_mode = #tpu.pipeline_mode<synchronous>, transform_indices = @transform_5, window_bounds = array<i64: 8, 256>}, {pipeline_mode = #tpu.pipeline_mode<synchronous>, transform_indices = @transform_6, window_bounds = array<i64: 256, 256>}, {pipeline_mode = #tpu.pipeline_mode<synchronous>, transform_indices = @transform_7, window_bounds = array<i64: 256, 256>}, {pipeline_mode = #tpu.pipeline_mode<synchronous>, transform_indices = @transform_8, window_bounds = array<i64: 256, 256>}, {transform_indices = @transform_9, window_bounds = array<i64: 8, 1280>}]} {
    %c0 = arith.constant 0 : index
    %0 = memref.load %arg1[%c0] : memref<1xf32, #tpu.memory_space<smem>>
    %c0_0 = arith.constant 0 : index
    %c0_1 = arith.constant 0 : index
    %1 = vector.load %arg2[%c0_0, %c0_1] : memref<8x8xf32, #tpu.memory_space<vmem>>, vector<8x8xf32>
    %2 = vector.extract_strided_slice %1 {offsets = [0, 0], sizes = [8, 1], strides = [1, 1]} : vector<8x8xf32> to vector<8x1xf32>
    %3 = vector.extract_strided_slice %1 {offsets = [0, 1], sizes = [8, 1], strides = [1, 1]} : vector<8x8xf32> to vector<8x1xf32>
    %4 = vector.extract_strided_slice %1 {offsets = [0, 2], sizes = [8, 1], strides = [1, 1]} : vector<8x8xf32> to vector<8x1xf32>
    %5 = vector.extract_strided_slice %1 {offsets = [0, 3], sizes = [8, 1], strides = [1, 1]} : vector<8x8xf32> to vector<8x1xf32>
    %6 = vector.extract_strided_slice %1 {offsets = [0, 4], sizes = [8, 1], strides = [1, 1]} : vector<8x8xf32> to vector<8x1xf32>
    %c0_2 = arith.constant 0 : index
    %c0_3 = arith.constant 0 : index
    %7 = vector.load %arg3[%c0_2, %c0_3] : memref<8x256xf32, #tpu.memory_space<vmem>>, vector<1x256xf32>
    %8 = vector.broadcast %2 : vector<8x1xf32> to vector<8x256xf32>
    %9 = vector.broadcast %7 : vector<1x256xf32> to vector<8x256xf32>
    %10 = arith.mulf %8, %9 : vector<8x256xf32>
    %c1 = arith.constant 1 : index
    %c0_4 = arith.constant 0 : index
    %11 = vector.load %arg3[%c1, %c0_4] : memref<8x256xf32, #tpu.memory_space<vmem>>, vector<1x256xf32>
    %12 = vector.broadcast %3 : vector<8x1xf32> to vector<8x256xf32>
    %13 = vector.broadcast %11 : vector<1x256xf32> to vector<8x256xf32>
    %14 = arith.mulf %12, %13 : vector<8x256xf32>
    %15 = arith.addf %10, %14 : vector<8x256xf32>
    %c2 = arith.constant 2 : index
    %c0_5 = arith.constant 0 : index
    %16 = vector.load %arg3[%c2, %c0_5] : memref<8x256xf32, #tpu.memory_space<vmem>>, vector<1x256xf32>
    %17 = vector.broadcast %4 : vector<8x1xf32> to vector<8x256xf32>
    %18 = vector.broadcast %16 : vector<1x256xf32> to vector<8x256xf32>
    %19 = arith.mulf %17, %18 : vector<8x256xf32>
    %20 = arith.addf %15, %19 : vector<8x256xf32>
    %c0_6 = arith.constant 0 : index
    %c0_7 = arith.constant 0 : index
    %21 = vector.load %arg4[%c0_6, %c0_7] : memref<8x256xf32, #tpu.memory_space<vmem>>, vector<1x256xf32>
    %22 = vector.broadcast %2 : vector<8x1xf32> to vector<8x256xf32>
    %23 = vector.broadcast %21 : vector<1x256xf32> to vector<8x256xf32>
    %24 = arith.mulf %22, %23 : vector<8x256xf32>
    %c1_8 = arith.constant 1 : index
    %c0_9 = arith.constant 0 : index
    %25 = vector.load %arg4[%c1_8, %c0_9] : memref<8x256xf32, #tpu.memory_space<vmem>>, vector<1x256xf32>
    %26 = vector.broadcast %3 : vector<8x1xf32> to vector<8x256xf32>
    %27 = vector.broadcast %25 : vector<1x256xf32> to vector<8x256xf32>
    %28 = arith.mulf %26, %27 : vector<8x256xf32>
    %29 = arith.addf %24, %28 : vector<8x256xf32>
    %c2_10 = arith.constant 2 : index
    %c0_11 = arith.constant 0 : index
    %30 = vector.load %arg4[%c2_10, %c0_11] : memref<8x256xf32, #tpu.memory_space<vmem>>, vector<1x256xf32>
    %31 = vector.broadcast %4 : vector<8x1xf32> to vector<8x256xf32>
    %32 = vector.broadcast %30 : vector<1x256xf32> to vector<8x256xf32>
    %33 = arith.mulf %31, %32 : vector<8x256xf32>
    %34 = arith.addf %29, %33 : vector<8x256xf32>
    %35 = math.exp %34 : vector<8x256xf32>
    %36 = math.cos %20 : vector<8x256xf32>
    %37 = arith.mulf %35, %36 : vector<8x256xf32>
    %38 = math.sin %20 : vector<8x256xf32>
    %39 = arith.mulf %35, %38 : vector<8x256xf32>
    %cst = arith.constant 0.000000e+00 : f32
    %40 = vector.broadcast %cst : f32 to vector<8x256xf32>
    %41 = arith.subf %40, %39 : vector<8x256xf32>
    %c0_12 = arith.constant 0 : index
    %c0_13 = arith.constant 0 : index
    %42 = vector.load %arg5[%c0_12, %c0_13] : memref<8x256xf32, #tpu.memory_space<vmem>>, vector<1x256xf32>
    %c0_14 = arith.constant 0 : index
    %c0_15 = arith.constant 0 : index
    %43 = vector.load %arg6[%c0_14, %c0_15] : memref<8x256xf32, #tpu.memory_space<vmem>>, vector<1x256xf32>
    %44 = vector.broadcast %42 : vector<1x256xf32> to vector<8x256xf32>
    %45 = arith.mulf %37, %44 : vector<8x256xf32>
    %46 = vector.broadcast %43 : vector<1x256xf32> to vector<8x256xf32>
    %47 = arith.mulf %41, %46 : vector<8x256xf32>
    %48 = arith.subf %45, %47 : vector<8x256xf32>
    %49 = vector.broadcast %43 : vector<1x256xf32> to vector<8x256xf32>
    %50 = arith.mulf %37, %49 : vector<8x256xf32>
    %51 = vector.broadcast %42 : vector<1x256xf32> to vector<8x256xf32>
    %52 = arith.mulf %41, %51 : vector<8x256xf32>
    %53 = arith.addf %50, %52 : vector<8x256xf32>
    %c0_16 = arith.constant 0 : index
    %c0_17 = arith.constant 0 : index
    %54 = vector.load %arg11[%c0_16, %c0_17] : memref<192x256xf32, #tpu.memory_space<vmem>>, vector<8x256xf32>
    tpu.vector_store %arg11[%c0_16, %c0_17], %48 {strides = array<i32>} : memref<192x256xf32, #tpu.memory_space<vmem>>, vector<8x256xf32>,
    %c0_18 = arith.constant 0 : index
    %c0_19 = arith.constant 0 : index
    %55 = vector.load %arg12[%c0_18, %c0_19] : memref<192x256xf32, #tpu.memory_space<vmem>>, vector<8x256xf32>
    tpu.vector_store %arg12[%c0_18, %c0_19], %53 {strides = array<i32>} : memref<192x256xf32, #tpu.memory_space<vmem>>, vector<8x256xf32>,
    %56 = arith.addf %48, %53 : vector<8x256xf32>
    %c0_20 = arith.constant 0 : index
    %c0_21 = arith.constant 0 : index
    %57 = vector.load %arg13[%c0_20, %c0_21] : memref<192x256xf32, #tpu.memory_space<vmem>>, vector<8x256xf32>
    tpu.vector_store %arg13[%c0_20, %c0_21], %56 {strides = array<i32>} : memref<192x256xf32, #tpu.memory_space<vmem>>, vector<8x256xf32>,
    %c1_22 = arith.constant 1 : index
    %c0_23 = arith.constant 0 : index
    %58 = vector.load %arg5[%c1_22, %c0_23] : memref<8x256xf32, #tpu.memory_space<vmem>>, vector<1x256xf32>
    %c1_24 = arith.constant 1 : index
    %c0_25 = arith.constant 0 : index
    %59 = vector.load %arg6[%c1_24, %c0_25] : memref<8x256xf32, #tpu.memory_space<vmem>>, vector<1x256xf32>
    %60 = vector.broadcast %58 : vector<1x256xf32> to vector<8x256xf32>
    %61 = arith.mulf %37, %60 : vector<8x256xf32>
    %62 = vector.broadcast %59 : vector<1x256xf32> to vector<8x256xf32>
    %63 = arith.mulf %41, %62 : vector<8x256xf32>
    %64 = arith.subf %61, %63 : vector<8x256xf32>
    %65 = vector.broadcast %59 : vector<1x256xf32> to vector<8x256xf32>
    %66 = arith.mulf %37, %65 : vector<8x256xf32>
    %67 = vector.broadcast %58 : vector<1x256xf32> to vector<8x256xf32>
    %68 = arith.mulf %41, %67 : vector<8x256xf32>
    %69 = arith.addf %66, %68 : vector<8x256xf32>
    %c8 = arith.constant 8 : index
    %c0_26 = arith.constant 0 : index
    %70 = vector.load %arg11[%c8, %c0_26] : memref<192x256xf32, #tpu.memory_space<vmem>>, vector<8x256xf32>
    tpu.vector_store %arg11[%c8, %c0_26], %64 {strides = array<i32>} : memref<192x256xf32, #tpu.memory_space<vmem>>, vector<8x256xf32>,
    %c8_27 = arith.constant 8 : index
    %c0_28 = arith.constant 0 : index
    %71 = vector.load %arg12[%c8_27, %c0_28] : memref<192x256xf32, #tpu.memory_space<vmem>>, vector<8x256xf32>
    tpu.vector_store %arg12[%c8_27, %c0_28], %69 {strides = array<i32>} : memref<192x256xf32, #tpu.memory_space<vmem>>, vector<8x256xf32>,
    %72 = arith.addf %64, %69 : vector<8x256xf32>
    %c8_29 = arith.constant 8 : index
    %c0_30 = arith.constant 0 : index
    %73 = vector.load %arg13[%c8_29, %c0_30] : memref<192x256xf32, #tpu.memory_space<vmem>>, vector<8x256xf32>
    tpu.vector_store %arg13[%c8_29, %c0_30], %72 {strides = array<i32>} : memref<192x256xf32, #tpu.memory_space<vmem>>, vector<8x256xf32>,
    %c2_31 = arith.constant 2 : index
    %c0_32 = arith.constant 0 : index
    %74 = vector.load %arg5[%c2_31, %c0_32] : memref<8x256xf32, #tpu.memory_space<vmem>>, vector<1x256xf32>
    %c2_33 = arith.constant 2 : index
    %c0_34 = arith.constant 0 : index
    %75 = vector.load %arg6[%c2_33, %c0_34] : memref<8x256xf32, #tpu.memory_space<vmem>>, vector<1x256xf32>
    %76 = vector.broadcast %74 : vector<1x256xf32> to vector<8x256xf32>
    %77 = arith.mulf %37, %76 : vector<8x256xf32>
    %78 = vector.broadcast %75 : vector<1x256xf32> to vector<8x256xf32>
    %79 = arith.mulf %41, %78 : vector<8x256xf32>
    %80 = arith.subf %77, %79 : vector<8x256xf32>
    %81 = vector.broadcast %75 : vector<1x256xf32> to vector<8x256xf32>
    %82 = arith.mulf %37, %81 : vector<8x256xf32>
    %83 = vector.broadcast %74 : vector<1x256xf32> to vector<8x256xf32>
    %84 = arith.mulf %41, %83 : vector<8x256xf32>
    %85 = arith.addf %82, %84 : vector<8x256xf32>
    %c16 = arith.constant 16 : index
    %c0_35 = arith.constant 0 : index
    %86 = vector.load %arg11[%c16, %c0_35] : memref<192x256xf32, #tpu.memory_space<vmem>>, vector<8x256xf32>
    tpu.vector_store %arg11[%c16, %c0_35], %80 {strides = array<i32>} : memref<192x256xf32, #tpu.memory_space<vmem>>, vector<8x256xf32>,
    %c16_36 = arith.constant 16 : index
    %c0_37 = arith.constant 0 : index
    %87 = vector.load %arg12[%c16_36, %c0_37] : memref<192x256xf32, #tpu.memory_space<vmem>>, vector<8x256xf32>
    tpu.vector_store %arg12[%c16_36, %c0_37], %85 {strides = array<i32>} : memref<192x256xf32, #tpu.memory_space<vmem>>, vector<8x256xf32>,
    %88 = arith.addf %80, %85 : vector<8x256xf32>
    %c16_38 = arith.constant 16 : index
    %c0_39 = arith.constant 0 : index
    %89 = vector.load %arg13[%c16_38, %c0_39] : memref<192x256xf32, #tpu.memory_space<vmem>>, vector<8x256xf32>
    tpu.vector_store %arg13[%c16_38, %c0_39], %88 {strides = array<i32>} : memref<192x256xf32, #tpu.memory_space<vmem>>, vector<8x256xf32>,
    %c3 = arith.constant 3 : index
    %c0_40 = arith.constant 0 : index
    %90 = vector.load %arg5[%c3, %c0_40] : memref<8x256xf32, #tpu.memory_space<vmem>>, vector<1x256xf32>
    %c3_41 = arith.constant 3 : index
    %c0_42 = arith.constant 0 : index
    %91 = vector.load %arg6[%c3_41, %c0_42] : memref<8x256xf32, #tpu.memory_space<vmem>>, vector<1x256xf32>
    %92 = vector.broadcast %90 : vector<1x256xf32> to vector<8x256xf32>
    %93 = arith.mulf %37, %92 : vector<8x256xf32>
    %94 = vector.broadcast %91 : vector<1x256xf32> to vector<8x256xf32>
    %95 = arith.mulf %41, %94 : vector<8x256xf32>
    %96 = arith.subf %93, %95 : vector<8x256xf32>
    %97 = vector.broadcast %91 : vector<1x256xf32> to vector<8x256xf32>
    %98 = arith.mulf %37, %97 : vector<8x256xf32>
    %99 = vector.broadcast %90 : vector<1x256xf32> to vector<8x256xf32>
    %100 = arith.mulf %41, %99 : vector<8x256xf32>
    %101 = arith.addf %98, %100 : vector<8x256xf32>
    %c24 = arith.constant 24 : index
    %c0_43 = arith.constant 0 : index
    %102 = vector.load %arg11[%c24, %c0_43] : memref<192x256xf32, #tpu.memory_space<vmem>>, vector<8x256xf32>
    tpu.vector_store %arg11[%c24, %c0_43], %96 {strides = array<i32>} : memref<192x256xf32, #tpu.memory_space<vmem>>, vector<8x256xf32>,
    %c24_44 = arith.constant 24 : index
    %c0_45 = arith.constant 0 : index
    %103 = vector.load %arg12[%c24_44, %c0_45] : memref<192x256xf32, #tpu.memory_space<vmem>>, vector<8x256xf32>
    tpu.vector_store %arg12[%c24_44, %c0_45], %101 {strides = array<i32>} : memref<192x256xf32, #tpu.memory_space<vmem>>, vector<8x256xf32>,
    %104 = arith.addf %96, %101 : vector<8x256xf32>
    %c24_46 = arith.constant 24 : index
    %c0_47 = arith.constant 0 : index
    %105 = vector.load %arg13[%c24_46, %c0_47] : memref<192x256xf32, #tpu.memory_space<vmem>>, vector<8x256xf32>
    tpu.vector_store %arg13[%c24_46, %c0_47], %104 {strides = array<i32>} : memref<192x256xf32, #tpu.memory_space<vmem>>, vector<8x256xf32>,
    %c4 = arith.constant 4 : index
    %c0_48 = arith.constant 0 : index
    %106 = vector.load %arg5[%c4, %c0_48] : memref<8x256xf32, #tpu.memory_space<vmem>>, vector<1x256xf32>
    %c4_49 = arith.constant 4 : index
    %c0_50 = arith.constant 0 : index
    %107 = vector.load %arg6[%c4_49, %c0_50] : memref<8x256xf32, #tpu.memory_space<vmem>>, vector<1x256xf32>
    %108 = vector.broadcast %106 : vector<1x256xf32> to vector<8x256xf32>
    %109 = arith.mulf %37, %108 : vector<8x256xf32>
    %110 = vector.broadcast %107 : vector<1x256xf32> to vector<8x256xf32>
    %111 = arith.mulf %41, %110 : vector<8x256xf32>
    %112 = arith.subf %109, %111 : vector<8x256xf32>
    %113 = vector.broadcast %107 : vector<1x256xf32> to vector<8x256xf32>
    %114 = arith.mulf %37, %113 : vector<8x256xf32>
    %115 = vector.broadcast %106 : vector<1x256xf32> to vector<8x256xf32>
    %116 = arith.mulf %41, %115 : vector<8x256xf32>
    %117 = arith.addf %114, %116 : vector<8x256xf32>
    %c32 = arith.constant 32 : index
    %c0_51 = arith.constant 0 : index
    %118 = vector.load %arg11[%c32, %c0_51] : memref<192x256xf32, #tpu.memory_space<vmem>>, vector<8x256xf32>
    tpu.vector_store %arg11[%c32, %c0_51], %112 {strides = array<i32>} : memref<192x256xf32, #tpu.memory_space<vmem>>, vector<8x256xf32>,
    %c32_52 = arith.constant 32 : index
    %c0_53 = arith.constant 0 : index
    %119 = vector.load %arg12[%c32_52, %c0_53] : memref<192x256xf32, #tpu.memory_space<vmem>>, vector<8x256xf32>
    tpu.vector_store %arg12[%c32_52, %c0_53], %117 {strides = array<i32>} : memref<192x256xf32, #tpu.memory_space<vmem>>, vector<8x256xf32>,
    %120 = arith.addf %112, %117 : vector<8x256xf32>
    %c32_54 = arith.constant 32 : index
    %c0_55 = arith.constant 0 : index
    %121 = vector.load %arg13[%c32_54, %c0_55] : memref<192x256xf32, #tpu.memory_space<vmem>>, vector<8x256xf32>
    tpu.vector_store %arg13[%c32_54, %c0_55], %120 {strides = array<i32>} : memref<192x256xf32, #tpu.memory_space<vmem>>, vector<8x256xf32>,
    %c5 = arith.constant 5 : index
    %c0_56 = arith.constant 0 : index
    %122 = vector.load %arg5[%c5, %c0_56] : memref<8x256xf32, #tpu.memory_space<vmem>>, vector<1x256xf32>
    %c5_57 = arith.constant 5 : index
    %c0_58 = arith.constant 0 : index
    %123 = vector.load %arg6[%c5_57, %c0_58] : memref<8x256xf32, #tpu.memory_space<vmem>>, vector<1x256xf32>
    %124 = vector.broadcast %122 : vector<1x256xf32> to vector<8x256xf32>
    %125 = arith.mulf %37, %124 : vector<8x256xf32>
    %126 = vector.broadcast %123 : vector<1x256xf32> to vector<8x256xf32>
    %127 = arith.mulf %41, %126 : vector<8x256xf32>
    %128 = arith.subf %125, %127 : vector<8x256xf32>
    %129 = vector.broadcast %123 : vector<1x256xf32> to vector<8x256xf32>
    %130 = arith.mulf %37, %129 : vector<8x256xf32>
    %131 = vector.broadcast %122 : vector<1x256xf32> to vector<8x256xf32>
    %132 = arith.mulf %41, %131 : vector<8x256xf32>
    %133 = arith.addf %130, %132 : vector<8x256xf32>
    %c40 = arith.constant 40 : index
    %c0_59 = arith.constant 0 : index
    %134 = vector.load %arg11[%c40, %c0_59] : memref<192x256xf32, #tpu.memory_space<vmem>>, vector<8x256xf32>
    tpu.vector_store %arg11[%c40, %c0_59], %128 {strides = array<i32>} : memref<192x256xf32, #tpu.memory_space<vmem>>, vector<8x256xf32>,
    %c40_60 = arith.constant 40 : index
    %c0_61 = arith.constant 0 : index
    %135 = vector.load %arg12[%c40_60, %c0_61] : memref<192x256xf32, #tpu.memory_space<vmem>>, vector<8x256xf32>
    tpu.vector_store %arg12[%c40_60, %c0_61], %133 {strides = array<i32>} : memref<192x256xf32, #tpu.memory_space<vmem>>, vector<8x256xf32>,
    %136 = arith.addf %128, %133 : vector<8x256xf32>
    %c40_62 = arith.constant 40 : index
    %c0_63 = arith.constant 0 : index
    %137 = vector.load %arg13[%c40_62, %c0_63] : memref<192x256xf32, #tpu.memory_space<vmem>>, vector<8x256xf32>
    tpu.vector_store %arg13[%c40_62, %c0_63], %136 {strides = array<i32>} : memref<192x256xf32, #tpu.memory_space<vmem>>, vector<8x256xf32>,
    %c0_64 = arith.constant 0 : index
    %c0_65 = arith.constant 0 : index
    %138 = vector.load %arg3[%c0_64, %c0_65] : memref<8x256xf32, #tpu.memory_space<vmem>>, vector<1x256xf32>
    %c0_66 = arith.constant 0 : index
    %c0_67 = arith.constant 0 : index
    %139 = vector.load %arg4[%c0_66, %c0_67] : memref<8x256xf32, #tpu.memory_space<vmem>>, vector<1x256xf32>
    %140 = vector.broadcast %139 : vector<1x256xf32> to vector<8x256xf32>
    %141 = arith.mulf %140, %37 : vector<8x256xf32>
    %142 = vector.broadcast %138 : vector<1x256xf32> to vector<8x256xf32>
    %143 = arith.mulf %142, %41 : vector<8x256xf32>
    %144 = arith.addf %141, %143 : vector<8x256xf32>
    %145 = vector.broadcast %139 : vector<1x256xf32> to vector<8x256xf32>
    %146 = arith.mulf %145, %41 : vector<8x256xf32>
    %147 = vector.broadcast %138 : vector<1x256xf32> to vector<8x256xf32>
    %148 = arith.mulf %147, %37 : vector<8x256xf32>
    %149 = arith.subf %146, %148 : vector<8x256xf32>
    %c0_68 = arith.constant 0 : index
    %c0_69 = arith.constant 0 : index
    %150 = vector.load %arg5[%c0_68, %c0_69] : memref<8x256xf32, #tpu.memory_space<vmem>>, vector<1x256xf32>
    %c0_70 = arith.constant 0 : index
    %c0_71 = arith.constant 0 : index
    %151 = vector.load %arg6[%c0_70, %c0_71] : memref<8x256xf32, #tpu.memory_space<vmem>>, vector<1x256xf32>
    %152 = vector.broadcast %150 : vector<1x256xf32> to vector<8x256xf32>
    %153 = arith.mulf %144, %152 : vector<8x256xf32>
    %154 = vector.broadcast %151 : vector<1x256xf32> to vector<8x256xf32>
    %155 = arith.mulf %149, %154 : vector<8x256xf32>
    %156 = arith.subf %153, %155 : vector<8x256xf32>
    %157 = vector.broadcast %151 : vector<1x256xf32> to vector<8x256xf32>
    %158 = arith.mulf %144, %157 : vector<8x256xf32>
    %159 = vector.broadcast %150 : vector<1x256xf32> to vector<8x256xf32>
    %160 = arith.mulf %149, %159 : vector<8x256xf32>
    %161 = arith.addf %158, %160 : vector<8x256xf32>
    %c48 = arith.constant 48 : index
    %c0_72 = arith.constant 0 : index
    %162 = vector.load %arg11[%c48, %c0_72] : memref<192x256xf32, #tpu.memory_space<vmem>>, vector<8x256xf32>
    tpu.vector_store %arg11[%c48, %c0_72], %156 {strides = array<i32>} : memref<192x256xf32, #tpu.memory_space<vmem>>, vector<8x256xf32>,
    %c48_73 = arith.constant 48 : index
    %c0_74 = arith.constant 0 : index
    %163 = vector.load %arg12[%c48_73, %c0_74] : memref<192x256xf32, #tpu.memory_space<vmem>>, vector<8x256xf32>
    tpu.vector_store %arg12[%c48_73, %c0_74], %161 {strides = array<i32>} : memref<192x256xf32, #tpu.memory_space<vmem>>, vector<8x256xf32>,
    %164 = arith.addf %156, %161 : vector<8x256xf32>
    %c48_75 = arith.constant 48 : index
    %c0_76 = arith.constant 0 : index
    %165 = vector.load %arg13[%c48_75, %c0_76] : memref<192x256xf32, #tpu.memory_space<vmem>>, vector<8x256xf32>
    tpu.vector_store %arg13[%c48_75, %c0_76], %164 {strides = array<i32>} : memref<192x256xf32, #tpu.memory_space<vmem>>, vector<8x256xf32>,
    %c1_77 = arith.constant 1 : index
    %c0_78 = arith.constant 0 : index
    %166 = vector.load %arg5[%c1_77, %c0_78] : memref<8x256xf32, #tpu.memory_space<vmem>>, vector<1x256xf32>
    %c1_79 = arith.constant 1 : index
    %c0_80 = arith.constant 0 : index
    %167 = vector.load %arg6[%c1_79, %c0_80] : memref<8x256xf32, #tpu.memory_space<vmem>>, vector<1x256xf32>
    %168 = vector.broadcast %166 : vector<1x256xf32> to vector<8x256xf32>
    %169 = arith.mulf %144, %168 : vector<8x256xf32>
    %170 = vector.broadcast %167 : vector<1x256xf32> to vector<8x256xf32>
    %171 = arith.mulf %149, %170 : vector<8x256xf32>
    %172 = arith.subf %169, %171 : vector<8x256xf32>
    %173 = vector.broadcast %167 : vector<1x256xf32> to vector<8x256xf32>
    %174 = arith.mulf %144, %173 : vector<8x256xf32>
    %175 = vector.broadcast %166 : vector<1x256xf32> to vector<8x256xf32>
    %176 = arith.mulf %149, %175 : vector<8x256xf32>
    %177 = arith.addf %174, %176 : vector<8x256xf32>
    %c56 = arith.constant 56 : index
    %c0_81 = arith.constant 0 : index
    %178 = vector.load %arg11[%c56, %c0_81] : memref<192x256xf32, #tpu.memory_space<vmem>>, vector<8x256xf32>
    tpu.vector_store %arg11[%c56, %c0_81], %172 {strides = array<i32>} : memref<192x256xf32, #tpu.memory_space<vmem>>, vector<8x256xf32>,
    %c56_82 = arith.constant 56 : index
    %c0_83 = arith.constant 0 : index
    %179 = vector.load %arg12[%c56_82, %c0_83] : memref<192x256xf32, #tpu.memory_space<vmem>>, vector<8x256xf32>
    tpu.vector_store %arg12[%c56_82, %c0_83], %177 {strides = array<i32>} : memref<192x256xf32, #tpu.memory_space<vmem>>, vector<8x256xf32>,
    %180 = arith.addf %172, %177 : vector<8x256xf32>
    %c56_84 = arith.constant 56 : index
    %c0_85 = arith.constant 0 : index
    %181 = vector.load %arg13[%c56_84, %c0_85] : memref<192x256xf32, #tpu.memory_space<vmem>>, vector<8x256xf32>
    tpu.vector_store %arg13[%c56_84, %c0_85], %180 {strides = array<i32>} : memref<192x256xf32, #tpu.memory_space<vmem>>, vector<8x256xf32>,
    %c2_86 = arith.constant 2 : index
    %c0_87 = arith.constant 0 : index
    %182 = vector.load %arg5[%c2_86, %c0_87] : memref<8x256xf32, #tpu.memory_space<vmem>>, vector<1x256xf32>
    %c2_88 = arith.constant 2 : index
    %c0_89 = arith.constant 0 : index
    %183 = vector.load %arg6[%c2_88, %c0_89] : memref<8x256xf32, #tpu.memory_space<vmem>>, vector<1x256xf32>
    %184 = vector.broadcast %182 : vector<1x256xf32> to vector<8x256xf32>
    %185 = arith.mulf %144, %184 : vector<8x256xf32>
    %186 = vector.broadcast %183 : vector<1x256xf32> to vector<8x256xf32>
    %187 = arith.mulf %149, %186 : vector<8x256xf32>
    %188 = arith.subf %185, %187 : vector<8x256xf32>
    %189 = vector.broadcast %183 : vector<1x256xf32> to vector<8x256xf32>
    %190 = arith.mulf %144, %189 : vector<8x256xf32>
    %191 = vector.broadcast %182 : vector<1x256xf32> to vector<8x256xf32>
    %192 = arith.mulf %149, %191 : vector<8x256xf32>
    %193 = arith.addf %190, %192 : vector<8x256xf32>
    %c64 = arith.constant 64 : index
    %c0_90 = arith.constant 0 : index
    %194 = vector.load %arg11[%c64, %c0_90] : memref<192x256xf32, #tpu.memory_space<vmem>>, vector<8x256xf32>
    tpu.vector_store %arg11[%c64, %c0_90], %188 {strides = array<i32>} : memref<192x256xf32, #tpu.memory_space<vmem>>, vector<8x256xf32>,
    %c64_91 = arith.constant 64 : index
    %c0_92 = arith.constant 0 : index
    %195 = vector.load %arg12[%c64_91, %c0_92] : memref<192x256xf32, #tpu.memory_space<vmem>>, vector<8x256xf32>
    tpu.vector_store %arg12[%c64_91, %c0_92], %193 {strides = array<i32>} : memref<192x256xf32, #tpu.memory_space<vmem>>, vector<8x256xf32>,
    %196 = arith.addf %188, %193 : vector<8x256xf32>
    %c64_93 = arith.constant 64 : index
    %c0_94 = arith.constant 0 : index
    %197 = vector.load %arg13[%c64_93, %c0_94] : memref<192x256xf32, #tpu.memory_space<vmem>>, vector<8x256xf32>
    tpu.vector_store %arg13[%c64_93, %c0_94], %196 {strides = array<i32>} : memref<192x256xf32, #tpu.memory_space<vmem>>, vector<8x256xf32>,
    %c3_95 = arith.constant 3 : index
    %c0_96 = arith.constant 0 : index
    %198 = vector.load %arg5[%c3_95, %c0_96] : memref<8x256xf32, #tpu.memory_space<vmem>>, vector<1x256xf32>
    %c3_97 = arith.constant 3 : index
    %c0_98 = arith.constant 0 : index
    %199 = vector.load %arg6[%c3_97, %c0_98] : memref<8x256xf32, #tpu.memory_space<vmem>>, vector<1x256xf32>
    %200 = vector.broadcast %198 : vector<1x256xf32> to vector<8x256xf32>
    %201 = arith.mulf %144, %200 : vector<8x256xf32>
    %202 = vector.broadcast %199 : vector<1x256xf32> to vector<8x256xf32>
    %203 = arith.mulf %149, %202 : vector<8x256xf32>
    %204 = arith.subf %201, %203 : vector<8x256xf32>
    %205 = vector.broadcast %199 : vector<1x256xf32> to vector<8x256xf32>
    %206 = arith.mulf %144, %205 : vector<8x256xf32>
    %207 = vector.broadcast %198 : vector<1x256xf32> to vector<8x256xf32>
    %208 = arith.mulf %149, %207 : vector<8x256xf32>
    %209 = arith.addf %206, %208 : vector<8x256xf32>
    %c72 = arith.constant 72 : index
    %c0_99 = arith.constant 0 : index
    %210 = vector.load %arg11[%c72, %c0_99] : memref<192x256xf32, #tpu.memory_space<vmem>>, vector<8x256xf32>
    tpu.vector_store %arg11[%c72, %c0_99], %204 {strides = array<i32>} : memref<192x256xf32, #tpu.memory_space<vmem>>, vector<8x256xf32>,
    %c72_100 = arith.constant 72 : index
    %c0_101 = arith.constant 0 : index
    %211 = vector.load %arg12[%c72_100, %c0_101] : memref<192x256xf32, #tpu.memory_space<vmem>>, vector<8x256xf32>
    tpu.vector_store %arg12[%c72_100, %c0_101], %209 {strides = array<i32>} : memref<192x256xf32, #tpu.memory_space<vmem>>, vector<8x256xf32>,
    %212 = arith.addf %204, %209 : vector<8x256xf32>
    %c72_102 = arith.constant 72 : index
    %c0_103 = arith.constant 0 : index
    %213 = vector.load %arg13[%c72_102, %c0_103] : memref<192x256xf32, #tpu.memory_space<vmem>>, vector<8x256xf32>
    tpu.vector_store %arg13[%c72_102, %c0_103], %212 {strides = array<i32>} : memref<192x256xf32, #tpu.memory_space<vmem>>, vector<8x256xf32>,
    %c4_104 = arith.constant 4 : index
    %c0_105 = arith.constant 0 : index
    %214 = vector.load %arg5[%c4_104, %c0_105] : memref<8x256xf32, #tpu.memory_space<vmem>>, vector<1x256xf32>
    %c4_106 = arith.constant 4 : index
    %c0_107 = arith.constant 0 : index
    %215 = vector.load %arg6[%c4_106, %c0_107] : memref<8x256xf32, #tpu.memory_space<vmem>>, vector<1x256xf32>
    %216 = vector.broadcast %214 : vector<1x256xf32> to vector<8x256xf32>
    %217 = arith.mulf %144, %216 : vector<8x256xf32>
    %218 = vector.broadcast %215 : vector<1x256xf32> to vector<8x256xf32>
    %219 = arith.mulf %149, %218 : vector<8x256xf32>
    %220 = arith.subf %217, %219 : vector<8x256xf32>
    %221 = vector.broadcast %215 : vector<1x256xf32> to vector<8x256xf32>
    %222 = arith.mulf %144, %221 : vector<8x256xf32>
    %223 = vector.broadcast %214 : vector<1x256xf32> to vector<8x256xf32>
    %224 = arith.mulf %149, %223 : vector<8x256xf32>
    %225 = arith.addf %222, %224 : vector<8x256xf32>
    %c80 = arith.constant 80 : index
    %c0_108 = arith.constant 0 : index
    %226 = vector.load %arg11[%c80, %c0_108] : memref<192x256xf32, #tpu.memory_space<vmem>>, vector<8x256xf32>
    tpu.vector_store %arg11[%c80, %c0_108], %220 {strides = array<i32>} : memref<192x256xf32, #tpu.memory_space<vmem>>, vector<8x256xf32>,
    %c80_109 = arith.constant 80 : index
    %c0_110 = arith.constant 0 : index
    %227 = vector.load %arg12[%c80_109, %c0_110] : memref<192x256xf32, #tpu.memory_space<vmem>>, vector<8x256xf32>
    tpu.vector_store %arg12[%c80_109, %c0_110], %225 {strides = array<i32>} : memref<192x256xf32, #tpu.memory_space<vmem>>, vector<8x256xf32>,
    %228 = arith.addf %220, %225 : vector<8x256xf32>
    %c80_111 = arith.constant 80 : index
    %c0_112 = arith.constant 0 : index
    %229 = vector.load %arg13[%c80_111, %c0_112] : memref<192x256xf32, #tpu.memory_space<vmem>>, vector<8x256xf32>
    tpu.vector_store %arg13[%c80_111, %c0_112], %228 {strides = array<i32>} : memref<192x256xf32, #tpu.memory_space<vmem>>, vector<8x256xf32>,
    %c5_113 = arith.constant 5 : index
    %c0_114 = arith.constant 0 : index
    %230 = vector.load %arg5[%c5_113, %c0_114] : memref<8x256xf32, #tpu.memory_space<vmem>>, vector<1x256xf32>
    %c5_115 = arith.constant 5 : index
    %c0_116 = arith.constant 0 : index
    %231 = vector.load %arg6[%c5_115, %c0_116] : memref<8x256xf32, #tpu.memory_space<vmem>>, vector<1x256xf32>
    %232 = vector.broadcast %230 : vector<1x256xf32> to vector<8x256xf32>
    %233 = arith.mulf %144, %232 : vector<8x256xf32>
    %234 = vector.broadcast %231 : vector<1x256xf32> to vector<8x256xf32>
    %235 = arith.mulf %149, %234 : vector<8x256xf32>
    %236 = arith.subf %233, %235 : vector<8x256xf32>
    %237 = vector.broadcast %231 : vector<1x256xf32> to vector<8x256xf32>
    %238 = arith.mulf %144, %237 : vector<8x256xf32>
    %239 = vector.broadcast %230 : vector<1x256xf32> to vector<8x256xf32>
    %240 = arith.mulf %149, %239 : vector<8x256xf32>
    %241 = arith.addf %238, %240 : vector<8x256xf32>
    %c88 = arith.constant 88 : index
    %c0_117 = arith.constant 0 : index
    %242 = vector.load %arg11[%c88, %c0_117] : memref<192x256xf32, #tpu.memory_space<vmem>>, vector<8x256xf32>
    tpu.vector_store %arg11[%c88, %c0_117], %236 {strides = array<i32>} : memref<192x256xf32, #tpu.memory_space<vmem>>, vector<8x256xf32>,
    %c88_118 = arith.constant 88 : index
    %c0_119 = arith.constant 0 : index
    %243 = vector.load %arg12[%c88_118, %c0_119] : memref<192x256xf32, #tpu.memory_space<vmem>>, vector<8x256xf32>
    tpu.vector_store %arg12[%c88_118, %c0_119], %241 {strides = array<i32>} : memref<192x256xf32, #tpu.memory_space<vmem>>, vector<8x256xf32>,
    %244 = arith.addf %236, %241 : vector<8x256xf32>
    %c88_120 = arith.constant 88 : index
    %c0_121 = arith.constant 0 : index
    %245 = vector.load %arg13[%c88_120, %c0_121] : memref<192x256xf32, #tpu.memory_space<vmem>>, vector<8x256xf32>
    tpu.vector_store %arg13[%c88_120, %c0_121], %244 {strides = array<i32>} : memref<192x256xf32, #tpu.memory_space<vmem>>, vector<8x256xf32>,
    %c1_122 = arith.constant 1 : index
    %c0_123 = arith.constant 0 : index
    %246 = vector.load %arg3[%c1_122, %c0_123] : memref<8x256xf32, #tpu.memory_space<vmem>>, vector<1x256xf32>
    %c1_124 = arith.constant 1 : index
    %c0_125 = arith.constant 0 : index
    %247 = vector.load %arg4[%c1_124, %c0_125] : memref<8x256xf32, #tpu.memory_space<vmem>>, vector<1x256xf32>
    %248 = vector.broadcast %247 : vector<1x256xf32> to vector<8x256xf32>
    %249 = arith.mulf %248, %37 : vector<8x256xf32>
    %250 = vector.broadcast %246 : vector<1x256xf32> to vector<8x256xf32>
    %251 = arith.mulf %250, %41 : vector<8x256xf32>
    %252 = arith.addf %249, %251 : vector<8x256xf32>
    %253 = vector.broadcast %247 : vector<1x256xf32> to vector<8x256xf32>
    %254 = arith.mulf %253, %41 : vector<8x256xf32>
    %255 = vector.broadcast %246 : vector<1x256xf32> to vector<8x256xf32>
    %256 = arith.mulf %255, %37 : vector<8x256xf32>
    %257 = arith.subf %254, %256 : vector<8x256xf32>
    %c0_126 = arith.constant 0 : index
    %c0_127 = arith.constant 0 : index
    %258 = vector.load %arg5[%c0_126, %c0_127] : memref<8x256xf32, #tpu.memory_space<vmem>>, vector<1x256xf32>
    %c0_128 = arith.constant 0 : index
    %c0_129 = arith.constant 0 : index
    %259 = vector.load %arg6[%c0_128, %c0_129] : memref<8x256xf32, #tpu.memory_space<vmem>>, vector<1x256xf32>
    %260 = vector.broadcast %258 : vector<1x256xf32> to vector<8x256xf32>
    %261 = arith.mulf %252, %260 : vector<8x256xf32>
    %262 = vector.broadcast %259 : vector<1x256xf32> to vector<8x256xf32>
    %263 = arith.mulf %257, %262 : vector<8x256xf32>
    %264 = arith.subf %261, %263 : vector<8x256xf32>
    %265 = vector.broadcast %259 : vector<1x256xf32> to vector<8x256xf32>
    %266 = arith.mulf %252, %265 : vector<8x256xf32>
    %267 = vector.broadcast %258 : vector<1x256xf32> to vector<8x256xf32>
    %268 = arith.mulf %257, %267 : vector<8x256xf32>
    %269 = arith.addf %266, %268 : vector<8x256xf32>
    %c96 = arith.constant 96 : index
    %c0_130 = arith.constant 0 : index
    %270 = vector.load %arg11[%c96, %c0_130] : memref<192x256xf32, #tpu.memory_space<vmem>>, vector<8x256xf32>
    tpu.vector_store %arg11[%c96, %c0_130], %264 {strides = array<i32>} : memref<192x256xf32, #tpu.memory_space<vmem>>, vector<8x256xf32>,
    %c96_131 = arith.constant 96 : index
    %c0_132 = arith.constant 0 : index
    %271 = vector.load %arg12[%c96_131, %c0_132] : memref<192x256xf32, #tpu.memory_space<vmem>>, vector<8x256xf32>
    tpu.vector_store %arg12[%c96_131, %c0_132], %269 {strides = array<i32>} : memref<192x256xf32, #tpu.memory_space<vmem>>, vector<8x256xf32>,
    %272 = arith.addf %264, %269 : vector<8x256xf32>
    %c96_133 = arith.constant 96 : index
    %c0_134 = arith.constant 0 : index
    %273 = vector.load %arg13[%c96_133, %c0_134] : memref<192x256xf32, #tpu.memory_space<vmem>>, vector<8x256xf32>
    tpu.vector_store %arg13[%c96_133, %c0_134], %272 {strides = array<i32>} : memref<192x256xf32, #tpu.memory_space<vmem>>, vector<8x256xf32>,
    %c1_135 = arith.constant 1 : index
    %c0_136 = arith.constant 0 : index
    %274 = vector.load %arg5[%c1_135, %c0_136] : memref<8x256xf32, #tpu.memory_space<vmem>>, vector<1x256xf32>
    %c1_137 = arith.constant 1 : index
    %c0_138 = arith.constant 0 : index
    %275 = vector.load %arg6[%c1_137, %c0_138] : memref<8x256xf32, #tpu.memory_space<vmem>>, vector<1x256xf32>
    %276 = vector.broadcast %274 : vector<1x256xf32> to vector<8x256xf32>
    %277 = arith.mulf %252, %276 : vector<8x256xf32>
    %278 = vector.broadcast %275 : vector<1x256xf32> to vector<8x256xf32>
    %279 = arith.mulf %257, %278 : vector<8x256xf32>
    %280 = arith.subf %277, %279 : vector<8x256xf32>
    %281 = vector.broadcast %275 : vector<1x256xf32> to vector<8x256xf32>
    %282 = arith.mulf %252, %281 : vector<8x256xf32>
    %283 = vector.broadcast %274 : vector<1x256xf32> to vector<8x256xf32>
    %284 = arith.mulf %257, %283 : vector<8x256xf32>
    %285 = arith.addf %282, %284 : vector<8x256xf32>
    %c104 = arith.constant 104 : index
    %c0_139 = arith.constant 0 : index
    %286 = vector.load %arg11[%c104, %c0_139] : memref<192x256xf32, #tpu.memory_space<vmem>>, vector<8x256xf32>
    tpu.vector_store %arg11[%c104, %c0_139], %280 {strides = array<i32>} : memref<192x256xf32, #tpu.memory_space<vmem>>, vector<8x256xf32>,
    %c104_140 = arith.constant 104 : index
    %c0_141 = arith.constant 0 : index
    %287 = vector.load %arg12[%c104_140, %c0_141] : memref<192x256xf32, #tpu.memory_space<vmem>>, vector<8x256xf32>
    tpu.vector_store %arg12[%c104_140, %c0_141], %285 {strides = array<i32>} : memref<192x256xf32, #tpu.memory_space<vmem>>, vector<8x256xf32>,
    %288 = arith.addf %280, %285 : vector<8x256xf32>
    %c104_142 = arith.constant 104 : index
    %c0_143 = arith.constant 0 : index
    %289 = vector.load %arg13[%c104_142, %c0_143] : memref<192x256xf32, #tpu.memory_space<vmem>>, vector<8x256xf32>
    tpu.vector_store %arg13[%c104_142, %c0_143], %288 {strides = array<i32>} : memref<192x256xf32, #tpu.memory_space<vmem>>, vector<8x256xf32>,
    %c2_144 = arith.constant 2 : index
    %c0_145 = arith.constant 0 : index
    %290 = vector.load %arg5[%c2_144, %c0_145] : memref<8x256xf32, #tpu.memory_space<vmem>>, vector<1x256xf32>
    %c2_146 = arith.constant 2 : index
    %c0_147 = arith.constant 0 : index
    %291 = vector.load %arg6[%c2_146, %c0_147] : memref<8x256xf32, #tpu.memory_space<vmem>>, vector<1x256xf32>
    %292 = vector.broadcast %290 : vector<1x256xf32> to vector<8x256xf32>
    %293 = arith.mulf %252, %292 : vector<8x256xf32>
    %294 = vector.broadcast %291 : vector<1x256xf32> to vector<8x256xf32>
    %295 = arith.mulf %257, %294 : vector<8x256xf32>
    %296 = arith.subf %293, %295 : vector<8x256xf32>
    %297 = vector.broadcast %291 : vector<1x256xf32> to vector<8x256xf32>
    %298 = arith.mulf %252, %297 : vector<8x256xf32>
    %299 = vector.broadcast %290 : vector<1x256xf32> to vector<8x256xf32>
    %300 = arith.mulf %257, %299 : vector<8x256xf32>
    %301 = arith.addf %298, %300 : vector<8x256xf32>
    %c112 = arith.constant 112 : index
    %c0_148 = arith.constant 0 : index
    %302 = vector.load %arg11[%c112, %c0_148] : memref<192x256xf32, #tpu.memory_space<vmem>>, vector<8x256xf32>
    tpu.vector_store %arg11[%c112, %c0_148], %296 {strides = array<i32>} : memref<192x256xf32, #tpu.memory_space<vmem>>, vector<8x256xf32>,
    %c112_149 = arith.constant 112 : index
    %c0_150 = arith.constant 0 : index
    %303 = vector.load %arg12[%c112_149, %c0_150] : memref<192x256xf32, #tpu.memory_space<vmem>>, vector<8x256xf32>
    tpu.vector_store %arg12[%c112_149, %c0_150], %301 {strides = array<i32>} : memref<192x256xf32, #tpu.memory_space<vmem>>, vector<8x256xf32>,
    %304 = arith.addf %296, %301 : vector<8x256xf32>
    %c112_151 = arith.constant 112 : index
    %c0_152 = arith.constant 0 : index
    %305 = vector.load %arg13[%c112_151, %c0_152] : memref<192x256xf32, #tpu.memory_space<vmem>>, vector<8x256xf32>
    tpu.vector_store %arg13[%c112_151, %c0_152], %304 {strides = array<i32>} : memref<192x256xf32, #tpu.memory_space<vmem>>, vector<8x256xf32>,
    %c3_153 = arith.constant 3 : index
    %c0_154 = arith.constant 0 : index
    %306 = vector.load %arg5[%c3_153, %c0_154] : memref<8x256xf32, #tpu.memory_space<vmem>>, vector<1x256xf32>
    %c3_155 = arith.constant 3 : index
    %c0_156 = arith.constant 0 : index
    %307 = vector.load %arg6[%c3_155, %c0_156] : memref<8x256xf32, #tpu.memory_space<vmem>>, vector<1x256xf32>
    %308 = vector.broadcast %306 : vector<1x256xf32> to vector<8x256xf32>
    %309 = arith.mulf %252, %308 : vector<8x256xf32>
    %310 = vector.broadcast %307 : vector<1x256xf32> to vector<8x256xf32>
    %311 = arith.mulf %257, %310 : vector<8x256xf32>
    %312 = arith.subf %309, %311 : vector<8x256xf32>
    %313 = vector.broadcast %307 : vector<1x256xf32> to vector<8x256xf32>
    %314 = arith.mulf %252, %313 : vector<8x256xf32>
    %315 = vector.broadcast %306 : vector<1x256xf32> to vector<8x256xf32>
    %316 = arith.mulf %257, %315 : vector<8x256xf32>
    %317 = arith.addf %314, %316 : vector<8x256xf32>
    %c120 = arith.constant 120 : index
    %c0_157 = arith.constant 0 : index
    %318 = vector.load %arg11[%c120, %c0_157] : memref<192x256xf32, #tpu.memory_space<vmem>>, vector<8x256xf32>
    tpu.vector_store %arg11[%c120, %c0_157], %312 {strides = array<i32>} : memref<192x256xf32, #tpu.memory_space<vmem>>, vector<8x256xf32>,
    %c120_158 = arith.constant 120 : index
    %c0_159 = arith.constant 0 : index
    %319 = vector.load %arg12[%c120_158, %c0_159] : memref<192x256xf32, #tpu.memory_space<vmem>>, vector<8x256xf32>
    tpu.vector_store %arg12[%c120_158, %c0_159], %317 {strides = array<i32>} : memref<192x256xf32, #tpu.memory_space<vmem>>, vector<8x256xf32>,
    %320 = arith.addf %312, %317 : vector<8x256xf32>
    %c120_160 = arith.constant 120 : index
    %c0_161 = arith.constant 0 : index
    %321 = vector.load %arg13[%c120_160, %c0_161] : memref<192x256xf32, #tpu.memory_space<vmem>>, vector<8x256xf32>
    tpu.vector_store %arg13[%c120_160, %c0_161], %320 {strides = array<i32>} : memref<192x256xf32, #tpu.memory_space<vmem>>, vector<8x256xf32>,
    %c4_162 = arith.constant 4 : index
    %c0_163 = arith.constant 0 : index
    %322 = vector.load %arg5[%c4_162, %c0_163] : memref<8x256xf32, #tpu.memory_space<vmem>>, vector<1x256xf32>
    %c4_164 = arith.constant 4 : index
    %c0_165 = arith.constant 0 : index
    %323 = vector.load %arg6[%c4_164, %c0_165] : memref<8x256xf32, #tpu.memory_space<vmem>>, vector<1x256xf32>
    %324 = vector.broadcast %322 : vector<1x256xf32> to vector<8x256xf32>
    %325 = arith.mulf %252, %324 : vector<8x256xf32>
    %326 = vector.broadcast %323 : vector<1x256xf32> to vector<8x256xf32>
    %327 = arith.mulf %257, %326 : vector<8x256xf32>
    %328 = arith.subf %325, %327 : vector<8x256xf32>
    %329 = vector.broadcast %323 : vector<1x256xf32> to vector<8x256xf32>
    %330 = arith.mulf %252, %329 : vector<8x256xf32>
    %331 = vector.broadcast %322 : vector<1x256xf32> to vector<8x256xf32>
    %332 = arith.mulf %257, %331 : vector<8x256xf32>
    %333 = arith.addf %330, %332 : vector<8x256xf32>
    %c128 = arith.constant 128 : index
    %c0_166 = arith.constant 0 : index
    %334 = vector.load %arg11[%c128, %c0_166] : memref<192x256xf32, #tpu.memory_space<vmem>>, vector<8x256xf32>
    tpu.vector_store %arg11[%c128, %c0_166], %328 {strides = array<i32>} : memref<192x256xf32, #tpu.memory_space<vmem>>, vector<8x256xf32>,
    %c128_167 = arith.constant 128 : index
    %c0_168 = arith.constant 0 : index
    %335 = vector.load %arg12[%c128_167, %c0_168] : memref<192x256xf32, #tpu.memory_space<vmem>>, vector<8x256xf32>
    tpu.vector_store %arg12[%c128_167, %c0_168], %333 {strides = array<i32>} : memref<192x256xf32, #tpu.memory_space<vmem>>, vector<8x256xf32>,
    %336 = arith.addf %328, %333 : vector<8x256xf32>
    %c128_169 = arith.constant 128 : index
    %c0_170 = arith.constant 0 : index
    %337 = vector.load %arg13[%c128_169, %c0_170] : memref<192x256xf32, #tpu.memory_space<vmem>>, vector<8x256xf32>
    tpu.vector_store %arg13[%c128_169, %c0_170], %336 {strides = array<i32>} : memref<192x256xf32, #tpu.memory_space<vmem>>, vector<8x256xf32>,
    %c5_171 = arith.constant 5 : index
    %c0_172 = arith.constant 0 : index
    %338 = vector.load %arg5[%c5_171, %c0_172] : memref<8x256xf32, #tpu.memory_space<vmem>>, vector<1x256xf32>
    %c5_173 = arith.constant 5 : index
    %c0_174 = arith.constant 0 : index
    %339 = vector.load %arg6[%c5_173, %c0_174] : memref<8x256xf32, #tpu.memory_space<vmem>>, vector<1x256xf32>
    %340 = vector.broadcast %338 : vector<1x256xf32> to vector<8x256xf32>
    %341 = arith.mulf %252, %340 : vector<8x256xf32>
    %342 = vector.broadcast %339 : vector<1x256xf32> to vector<8x256xf32>
    %343 = arith.mulf %257, %342 : vector<8x256xf32>
    %344 = arith.subf %341, %343 : vector<8x256xf32>
    %345 = vector.broadcast %339 : vector<1x256xf32> to vector<8x256xf32>
    %346 = arith.mulf %252, %345 : vector<8x256xf32>
    %347 = vector.broadcast %338 : vector<1x256xf32> to vector<8x256xf32>
    %348 = arith.mulf %257, %347 : vector<8x256xf32>
    %349 = arith.addf %346, %348 : vector<8x256xf32>
    %c136 = arith.constant 136 : index
    %c0_175 = arith.constant 0 : index
    %350 = vector.load %arg11[%c136, %c0_175] : memref<192x256xf32, #tpu.memory_space<vmem>>, vector<8x256xf32>
    tpu.vector_store %arg11[%c136, %c0_175], %344 {strides = array<i32>} : memref<192x256xf32, #tpu.memory_space<vmem>>, vector<8x256xf32>,
    %c136_176 = arith.constant 136 : index
    %c0_177 = arith.constant 0 : index
    %351 = vector.load %arg12[%c136_176, %c0_177] : memref<192x256xf32, #tpu.memory_space<vmem>>, vector<8x256xf32>
    tpu.vector_store %arg12[%c136_176, %c0_177], %349 {strides = array<i32>} : memref<192x256xf32, #tpu.memory_space<vmem>>, vector<8x256xf32>,
    %352 = arith.addf %344, %349 : vector<8x256xf32>
    %c136_178 = arith.constant 136 : index
    %c0_179 = arith.constant 0 : index
    %353 = vector.load %arg13[%c136_178, %c0_179] : memref<192x256xf32, #tpu.memory_space<vmem>>, vector<8x256xf32>
    tpu.vector_store %arg13[%c136_178, %c0_179], %352 {strides = array<i32>} : memref<192x256xf32, #tpu.memory_space<vmem>>, vector<8x256xf32>,
    %c2_180 = arith.constant 2 : index
    %c0_181 = arith.constant 0 : index
    %354 = vector.load %arg3[%c2_180, %c0_181] : memref<8x256xf32, #tpu.memory_space<vmem>>, vector<1x256xf32>
    %c2_182 = arith.constant 2 : index
    %c0_183 = arith.constant 0 : index
    %355 = vector.load %arg4[%c2_182, %c0_183] : memref<8x256xf32, #tpu.memory_space<vmem>>, vector<1x256xf32>
    %356 = vector.broadcast %355 : vector<1x256xf32> to vector<8x256xf32>
    %357 = arith.mulf %356, %37 : vector<8x256xf32>
    %358 = vector.broadcast %354 : vector<1x256xf32> to vector<8x256xf32>
    %359 = arith.mulf %358, %41 : vector<8x256xf32>
    %360 = arith.addf %357, %359 : vector<8x256xf32>
    %361 = vector.broadcast %355 : vector<1x256xf32> to vector<8x256xf32>
    %362 = arith.mulf %361, %41 : vector<8x256xf32>
    %363 = vector.broadcast %354 : vector<1x256xf32> to vector<8x256xf32>
    %364 = arith.mulf %363, %37 : vector<8x256xf32>
    %365 = arith.subf %362, %364 : vector<8x256xf32>
    %c0_184 = arith.constant 0 : index
    %c0_185 = arith.constant 0 : index
    %366 = vector.load %arg5[%c0_184, %c0_185] : memref<8x256xf32, #tpu.memory_space<vmem>>, vector<1x256xf32>
    %c0_186 = arith.constant 0 : index
    %c0_187 = arith.constant 0 : index
    %367 = vector.load %arg6[%c0_186, %c0_187] : memref<8x256xf32, #tpu.memory_space<vmem>>, vector<1x256xf32>
    %368 = vector.broadcast %366 : vector<1x256xf32> to vector<8x256xf32>
    %369 = arith.mulf %360, %368 : vector<8x256xf32>
    %370 = vector.broadcast %367 : vector<1x256xf32> to vector<8x256xf32>
    %371 = arith.mulf %365, %370 : vector<8x256xf32>
    %372 = arith.subf %369, %371 : vector<8x256xf32>
    %373 = vector.broadcast %367 : vector<1x256xf32> to vector<8x256xf32>
    %374 = arith.mulf %360, %373 : vector<8x256xf32>
    %375 = vector.broadcast %366 : vector<1x256xf32> to vector<8x256xf32>
    %376 = arith.mulf %365, %375 : vector<8x256xf32>
    %377 = arith.addf %374, %376 : vector<8x256xf32>
    %c144 = arith.constant 144 : index
    %c0_188 = arith.constant 0 : index
    %378 = vector.load %arg11[%c144, %c0_188] : memref<192x256xf32, #tpu.memory_space<vmem>>, vector<8x256xf32>
    tpu.vector_store %arg11[%c144, %c0_188], %372 {strides = array<i32>} : memref<192x256xf32, #tpu.memory_space<vmem>>, vector<8x256xf32>,
    %c144_189 = arith.constant 144 : index
    %c0_190 = arith.constant 0 : index
    %379 = vector.load %arg12[%c144_189, %c0_190] : memref<192x256xf32, #tpu.memory_space<vmem>>, vector<8x256xf32>
    tpu.vector_store %arg12[%c144_189, %c0_190], %377 {strides = array<i32>} : memref<192x256xf32, #tpu.memory_space<vmem>>, vector<8x256xf32>,
    %380 = arith.addf %372, %377 : vector<8x256xf32>
    %c144_191 = arith.constant 144 : index
    %c0_192 = arith.constant 0 : index
    %381 = vector.load %arg13[%c144_191, %c0_192] : memref<192x256xf32, #tpu.memory_space<vmem>>, vector<8x256xf32>
    tpu.vector_store %arg13[%c144_191, %c0_192], %380 {strides = array<i32>} : memref<192x256xf32, #tpu.memory_space<vmem>>, vector<8x256xf32>,
    %c1_193 = arith.constant 1 : index
    %c0_194 = arith.constant 0 : index
    %382 = vector.load %arg5[%c1_193, %c0_194] : memref<8x256xf32, #tpu.memory_space<vmem>>, vector<1x256xf32>
    %c1_195 = arith.constant 1 : index
    %c0_196 = arith.constant 0 : index
    %383 = vector.load %arg6[%c1_195, %c0_196] : memref<8x256xf32, #tpu.memory_space<vmem>>, vector<1x256xf32>
    %384 = vector.broadcast %382 : vector<1x256xf32> to vector<8x256xf32>
    %385 = arith.mulf %360, %384 : vector<8x256xf32>
    %386 = vector.broadcast %383 : vector<1x256xf32> to vector<8x256xf32>
    %387 = arith.mulf %365, %386 : vector<8x256xf32>
    %388 = arith.subf %385, %387 : vector<8x256xf32>
    %389 = vector.broadcast %383 : vector<1x256xf32> to vector<8x256xf32>
    %390 = arith.mulf %360, %389 : vector<8x256xf32>
    %391 = vector.broadcast %382 : vector<1x256xf32> to vector<8x256xf32>
    %392 = arith.mulf %365, %391 : vector<8x256xf32>
    %393 = arith.addf %390, %392 : vector<8x256xf32>
    %c152 = arith.constant 152 : index
    %c0_197 = arith.constant 0 : index
    %394 = vector.load %arg11[%c152, %c0_197] : memref<192x256xf32, #tpu.memory_space<vmem>>, vector<8x256xf32>
    tpu.vector_store %arg11[%c152, %c0_197], %388 {strides = array<i32>} : memref<192x256xf32, #tpu.memory_space<vmem>>, vector<8x256xf32>,
    %c152_198 = arith.constant 152 : index
    %c0_199 = arith.constant 0 : index
    %395 = vector.load %arg12[%c152_198, %c0_199] : memref<192x256xf32, #tpu.memory_space<vmem>>, vector<8x256xf32>
    tpu.vector_store %arg12[%c152_198, %c0_199], %393 {strides = array<i32>} : memref<192x256xf32, #tpu.memory_space<vmem>>, vector<8x256xf32>,
    %396 = arith.addf %388, %393 : vector<8x256xf32>
    %c152_200 = arith.constant 152 : index
    %c0_201 = arith.constant 0 : index
    %397 = vector.load %arg13[%c152_200, %c0_201] : memref<192x256xf32, #tpu.memory_space<vmem>>, vector<8x256xf32>
    tpu.vector_store %arg13[%c152_200, %c0_201], %396 {strides = array<i32>} : memref<192x256xf32, #tpu.memory_space<vmem>>, vector<8x256xf32>,
    %c2_202 = arith.constant 2 : index
    %c0_203 = arith.constant 0 : index
    %398 = vector.load %arg5[%c2_202, %c0_203] : memref<8x256xf32, #tpu.memory_space<vmem>>, vector<1x256xf32>
    %c2_204 = arith.constant 2 : index
    %c0_205 = arith.constant 0 : index
    %399 = vector.load %arg6[%c2_204, %c0_205] : memref<8x256xf32, #tpu.memory_space<vmem>>, vector<1x256xf32>
    %400 = vector.broadcast %398 : vector<1x256xf32> to vector<8x256xf32>
    %401 = arith.mulf %360, %400 : vector<8x256xf32>
    %402 = vector.broadcast %399 : vector<1x256xf32> to vector<8x256xf32>
    %403 = arith.mulf %365, %402 : vector<8x256xf32>
    %404 = arith.subf %401, %403 : vector<8x256xf32>
    %405 = vector.broadcast %399 : vector<1x256xf32> to vector<8x256xf32>
    %406 = arith.mulf %360, %405 : vector<8x256xf32>
    %407 = vector.broadcast %398 : vector<1x256xf32> to vector<8x256xf32>
    %408 = arith.mulf %365, %407 : vector<8x256xf32>
    %409 = arith.addf %406, %408 : vector<8x256xf32>
    %c160 = arith.constant 160 : index
    %c0_206 = arith.constant 0 : index
    %410 = vector.load %arg11[%c160, %c0_206] : memref<192x256xf32, #tpu.memory_space<vmem>>, vector<8x256xf32>
    tpu.vector_store %arg11[%c160, %c0_206], %404 {strides = array<i32>} : memref<192x256xf32, #tpu.memory_space<vmem>>, vector<8x256xf32>,
    %c160_207 = arith.constant 160 : index
    %c0_208 = arith.constant 0 : index
    %411 = vector.load %arg12[%c160_207, %c0_208] : memref<192x256xf32, #tpu.memory_space<vmem>>, vector<8x256xf32>
    tpu.vector_store %arg12[%c160_207, %c0_208], %409 {strides = array<i32>} : memref<192x256xf32, #tpu.memory_space<vmem>>, vector<8x256xf32>,
    %412 = arith.addf %404, %409 : vector<8x256xf32>
    %c160_209 = arith.constant 160 : index
    %c0_210 = arith.constant 0 : index
    %413 = vector.load %arg13[%c160_209, %c0_210] : memref<192x256xf32, #tpu.memory_space<vmem>>, vector<8x256xf32>
    tpu.vector_store %arg13[%c160_209, %c0_210], %412 {strides = array<i32>} : memref<192x256xf32, #tpu.memory_space<vmem>>, vector<8x256xf32>,
    %c3_211 = arith.constant 3 : index
    %c0_212 = arith.constant 0 : index
    %414 = vector.load %arg5[%c3_211, %c0_212] : memref<8x256xf32, #tpu.memory_space<vmem>>, vector<1x256xf32>
    %c3_213 = arith.constant 3 : index
    %c0_214 = arith.constant 0 : index
    %415 = vector.load %arg6[%c3_213, %c0_214] : memref<8x256xf32, #tpu.memory_space<vmem>>, vector<1x256xf32>
    %416 = vector.broadcast %414 : vector<1x256xf32> to vector<8x256xf32>
    %417 = arith.mulf %360, %416 : vector<8x256xf32>
    %418 = vector.broadcast %415 : vector<1x256xf32> to vector<8x256xf32>
    %419 = arith.mulf %365, %418 : vector<8x256xf32>
    %420 = arith.subf %417, %419 : vector<8x256xf32>
    %421 = vector.broadcast %415 : vector<1x256xf32> to vector<8x256xf32>
    %422 = arith.mulf %360, %421 : vector<8x256xf32>
    %423 = vector.broadcast %414 : vector<1x256xf32> to vector<8x256xf32>
    %424 = arith.mulf %365, %423 : vector<8x256xf32>
    %425 = arith.addf %422, %424 : vector<8x256xf32>
    %c168 = arith.constant 168 : index
    %c0_215 = arith.constant 0 : index
    %426 = vector.load %arg11[%c168, %c0_215] : memref<192x256xf32, #tpu.memory_space<vmem>>, vector<8x256xf32>
    tpu.vector_store %arg11[%c168, %c0_215], %420 {strides = array<i32>} : memref<192x256xf32, #tpu.memory_space<vmem>>, vector<8x256xf32>,
    %c168_216 = arith.constant 168 : index
    %c0_217 = arith.constant 0 : index
    %427 = vector.load %arg12[%c168_216, %c0_217] : memref<192x256xf32, #tpu.memory_space<vmem>>, vector<8x256xf32>
    tpu.vector_store %arg12[%c168_216, %c0_217], %425 {strides = array<i32>} : memref<192x256xf32, #tpu.memory_space<vmem>>, vector<8x256xf32>,
    %428 = arith.addf %420, %425 : vector<8x256xf32>
    %c168_218 = arith.constant 168 : index
    %c0_219 = arith.constant 0 : index
    %429 = vector.load %arg13[%c168_218, %c0_219] : memref<192x256xf32, #tpu.memory_space<vmem>>, vector<8x256xf32>
    tpu.vector_store %arg13[%c168_218, %c0_219], %428 {strides = array<i32>} : memref<192x256xf32, #tpu.memory_space<vmem>>, vector<8x256xf32>,
    %c4_220 = arith.constant 4 : index
    %c0_221 = arith.constant 0 : index
    %430 = vector.load %arg5[%c4_220, %c0_221] : memref<8x256xf32, #tpu.memory_space<vmem>>, vector<1x256xf32>
    %c4_222 = arith.constant 4 : index
    %c0_223 = arith.constant 0 : index
    %431 = vector.load %arg6[%c4_222, %c0_223] : memref<8x256xf32, #tpu.memory_space<vmem>>, vector<1x256xf32>
    %432 = vector.broadcast %430 : vector<1x256xf32> to vector<8x256xf32>
    %433 = arith.mulf %360, %432 : vector<8x256xf32>
    %434 = vector.broadcast %431 : vector<1x256xf32> to vector<8x256xf32>
    %435 = arith.mulf %365, %434 : vector<8x256xf32>
    %436 = arith.subf %433, %435 : vector<8x256xf32>
    %437 = vector.broadcast %431 : vector<1x256xf32> to vector<8x256xf32>
    %438 = arith.mulf %360, %437 : vector<8x256xf32>
    %439 = vector.broadcast %430 : vector<1x256xf32> to vector<8x256xf32>
    %440 = arith.mulf %365, %439 : vector<8x256xf32>
    %441 = arith.addf %438, %440 : vector<8x256xf32>
    %c176 = arith.constant 176 : index
    %c0_224 = arith.constant 0 : index
    %442 = vector.load %arg11[%c176, %c0_224] : memref<192x256xf32, #tpu.memory_space<vmem>>, vector<8x256xf32>
    tpu.vector_store %arg11[%c176, %c0_224], %436 {strides = array<i32>} : memref<192x256xf32, #tpu.memory_space<vmem>>, vector<8x256xf32>,
    %c176_225 = arith.constant 176 : index
    %c0_226 = arith.constant 0 : index
    %443 = vector.load %arg12[%c176_225, %c0_226] : memref<192x256xf32, #tpu.memory_space<vmem>>, vector<8x256xf32>
    tpu.vector_store %arg12[%c176_225, %c0_226], %441 {strides = array<i32>} : memref<192x256xf32, #tpu.memory_space<vmem>>, vector<8x256xf32>,
    %444 = arith.addf %436, %441 : vector<8x256xf32>
    %c176_227 = arith.constant 176 : index
    %c0_228 = arith.constant 0 : index
    %445 = vector.load %arg13[%c176_227, %c0_228] : memref<192x256xf32, #tpu.memory_space<vmem>>, vector<8x256xf32>
    tpu.vector_store %arg13[%c176_227, %c0_228], %444 {strides = array<i32>} : memref<192x256xf32, #tpu.memory_space<vmem>>, vector<8x256xf32>,
    %c5_229 = arith.constant 5 : index
    %c0_230 = arith.constant 0 : index
    %446 = vector.load %arg5[%c5_229, %c0_230] : memref<8x256xf32, #tpu.memory_space<vmem>>, vector<1x256xf32>
    %c5_231 = arith.constant 5 : index
    %c0_232 = arith.constant 0 : index
    %447 = vector.load %arg6[%c5_231, %c0_232] : memref<8x256xf32, #tpu.memory_space<vmem>>, vector<1x256xf32>
    %448 = vector.broadcast %446 : vector<1x256xf32> to vector<8x256xf32>
    %449 = arith.mulf %360, %448 : vector<8x256xf32>
    %450 = vector.broadcast %447 : vector<1x256xf32> to vector<8x256xf32>
    %451 = arith.mulf %365, %450 : vector<8x256xf32>
    %452 = arith.subf %449, %451 : vector<8x256xf32>
    %453 = vector.broadcast %447 : vector<1x256xf32> to vector<8x256xf32>
    %454 = arith.mulf %360, %453 : vector<8x256xf32>
    %455 = vector.broadcast %446 : vector<1x256xf32> to vector<8x256xf32>
    %456 = arith.mulf %365, %455 : vector<8x256xf32>
    %457 = arith.addf %454, %456 : vector<8x256xf32>
    %c184 = arith.constant 184 : index
    %c0_233 = arith.constant 0 : index
    %458 = vector.load %arg11[%c184, %c0_233] : memref<192x256xf32, #tpu.memory_space<vmem>>, vector<8x256xf32>
    tpu.vector_store %arg11[%c184, %c0_233], %452 {strides = array<i32>} : memref<192x256xf32, #tpu.memory_space<vmem>>, vector<8x256xf32>,
    %c184_234 = arith.constant 184 : index
    %c0_235 = arith.constant 0 : index
    %459 = vector.load %arg12[%c184_234, %c0_235] : memref<192x256xf32, #tpu.memory_space<vmem>>, vector<8x256xf32>
    tpu.vector_store %arg12[%c184_234, %c0_235], %457 {strides = array<i32>} : memref<192x256xf32, #tpu.memory_space<vmem>>, vector<8x256xf32>,
    %460 = arith.addf %452, %457 : vector<8x256xf32>
    %c184_236 = arith.constant 184 : index
    %c0_237 = arith.constant 0 : index
    %461 = vector.load %arg13[%c184_236, %c0_237] : memref<192x256xf32, #tpu.memory_space<vmem>>, vector<8x256xf32>
    tpu.vector_store %arg13[%c184_236, %c0_237], %460 {strides = array<i32>} : memref<192x256xf32, #tpu.memory_space<vmem>>, vector<8x256xf32>,
    %c0_238 = arith.constant 0 : index
    %c0_239 = arith.constant 0 : index
    %462 = vector.load %arg11[%c0_238, %c0_239] : memref<192x256xf32, #tpu.memory_space<vmem>>, vector<192x256xf32>
    %c0_240 = arith.constant 0 : index
    %c0_241 = arith.constant 0 : index
    %463 = vector.load %arg7[%c0_240, %c0_241] : memref<256x256xf32, #tpu.memory_space<vmem>>, vector<256x256xf32>
    %cst_242 = arith.constant dense<0.000000e+00> : vector<192x256xf32>
    %464 = tpu.matmul %462, %463, %cst_242 {dimension_numbers = #tpu.dot_dimension_numbers<[1], [0], [0], [1], [0, 0, 1, 1], [], []>} : vector<192x256xf32>, vector<256x256xf32>, vector<192x256xf32> -> vector<192x256xf32>
    %c0_243 = arith.constant 0 : index
    %c0_244 = arith.constant 0 : index
    %465 = vector.load %arg14[%c0_243, %c0_244] : memref<192x256xf32, #tpu.memory_space<vmem>>, vector<192x256xf32>
    tpu.vector_store %arg14[%c0_243, %c0_244], %464 {strides = array<i32>} : memref<192x256xf32, #tpu.memory_space<vmem>>, vector<192x256xf32>,
    %c0_245 = arith.constant 0 : index
    %c0_246 = arith.constant 0 : index
    %466 = vector.load %arg12[%c0_245, %c0_246] : memref<192x256xf32, #tpu.memory_space<vmem>>, vector<192x256xf32>
    %c0_247 = arith.constant 0 : index
    %c0_248 = arith.constant 0 : index
    %467 = vector.load %arg8[%c0_247, %c0_248] : memref<256x256xf32, #tpu.memory_space<vmem>>, vector<256x256xf32>
    %cst_249 = arith.constant dense<0.000000e+00> : vector<192x256xf32>
    %468 = tpu.matmul %466, %467, %cst_249 {dimension_numbers = #tpu.dot_dimension_numbers<[1], [0], [0], [1], [0, 0, 1, 1], [], []>} : vector<192x256xf32>, vector<256x256xf32>, vector<192x256xf32> -> vector<192x256xf32>
    %c0_250 = arith.constant 0 : index
    %c0_251 = arith.constant 0 : index
    %469 = vector.load %arg15[%c0_250, %c0_251] : memref<192x256xf32, #tpu.memory_space<vmem>>, vector<192x256xf32>
    tpu.vector_store %arg15[%c0_250, %c0_251], %468 {strides = array<i32>} : memref<192x256xf32, #tpu.memory_space<vmem>>, vector<192x256xf32>,
    %c0_252 = arith.constant 0 : index
    %c0_253 = arith.constant 0 : index
    %470 = vector.load %arg13[%c0_252, %c0_253] : memref<192x256xf32, #tpu.memory_space<vmem>>, vector<192x256xf32>
    %c0_254 = arith.constant 0 : index
    %c0_255 = arith.constant 0 : index
    %471 = vector.load %arg9[%c0_254, %c0_255] : memref<256x256xf32, #tpu.memory_space<vmem>>, vector<256x256xf32>
    %cst_256 = arith.constant dense<0.000000e+00> : vector<192x256xf32>
    %472 = tpu.matmul %470, %471, %cst_256 {dimension_numbers = #tpu.dot_dimension_numbers<[1], [0], [0], [1], [0, 0, 1, 1], [], []>} : vector<192x256xf32>, vector<256x256xf32>, vector<192x256xf32> -> vector<192x256xf32>
    %c0_257 = arith.constant 0 : index
    %c0_258 = arith.constant 0 : index
    %473 = vector.load %arg16[%c0_257, %c0_258] : memref<192x256xf32, #tpu.memory_space<vmem>>, vector<192x256xf32>
    tpu.vector_store %arg16[%c0_257, %c0_258], %472 {strides = array<i32>} : memref<192x256xf32, #tpu.memory_space<vmem>>, vector<192x256xf32>,
    %c0_259 = arith.constant 0 : index
    %c0_260 = arith.constant 0 : index
    %474 = vector.load %arg14[%c0_259, %c0_260] : memref<192x256xf32, #tpu.memory_space<vmem>>, vector<48x256xf32>
    %c0_261 = arith.constant 0 : index
    %c0_262 = arith.constant 0 : index
    %475 = vector.load %arg15[%c0_261, %c0_262] : memref<192x256xf32, #tpu.memory_space<vmem>>, vector<48x256xf32>
    %476 = arith.subf %474, %475 : vector<48x256xf32>
    %c0_263 = arith.constant 0 : index
    %c0_264 = arith.constant 0 : index
    %477 = vector.load %arg17[%c0_263, %c0_264] : memref<48x256xf32, #tpu.memory_space<vmem>>, vector<48x256xf32>
    tpu.vector_store %arg17[%c0_263, %c0_264], %476 {strides = array<i32>} : memref<48x256xf32, #tpu.memory_space<vmem>>, vector<48x256xf32>,
    %c0_265 = arith.constant 0 : index
    %c0_266 = arith.constant 0 : index
    %478 = vector.load %arg16[%c0_265, %c0_266] : memref<192x256xf32, #tpu.memory_space<vmem>>, vector<48x256xf32>
    %c0_267 = arith.constant 0 : index
    %c0_268 = arith.constant 0 : index
    %479 = vector.load %arg14[%c0_267, %c0_268] : memref<192x256xf32, #tpu.memory_space<vmem>>, vector<48x256xf32>
    %480 = arith.subf %478, %479 : vector<48x256xf32>
    %c0_269 = arith.constant 0 : index
    %c0_270 = arith.constant 0 : index
    %481 = vector.load %arg15[%c0_269, %c0_270] : memref<192x256xf32, #tpu.memory_space<vmem>>, vector<48x256xf32>
    %482 = arith.subf %480, %481 : vector<48x256xf32>
    %c0_271 = arith.constant 0 : index
    %c0_272 = arith.constant 0 : index
    %483 = vector.load %arg18[%c0_271, %c0_272] : memref<48x256xf32, #tpu.memory_space<vmem>>, vector<48x256xf32>
    tpu.vector_store %arg18[%c0_271, %c0_272], %482 {strides = array<i32>} : memref<48x256xf32, #tpu.memory_space<vmem>>, vector<48x256xf32>,
    %c0_273 = arith.constant 0 : index
    %c0_274 = arith.constant 0 : index
    %484 = vector.load %arg17[%c0_273, %c0_274] : memref<48x256xf32, #tpu.memory_space<vmem>>, vector<8x256xf32>
    %c0_275 = arith.constant 0 : index
    %c0_276 = arith.constant 0 : index
    %485 = vector.load %arg18[%c0_275, %c0_276] : memref<48x256xf32, #tpu.memory_space<vmem>>, vector<8x256xf32>
    %486 = arith.mulf %484, %484 : vector<8x256xf32>
    %487 = arith.mulf %485, %485 : vector<8x256xf32>
    %488 = arith.addf %486, %487 : vector<8x256xf32>
    %c8_277 = arith.constant 8 : index
    %c0_278 = arith.constant 0 : index
    %489 = vector.load %arg17[%c8_277, %c0_278] : memref<48x256xf32, #tpu.memory_space<vmem>>, vector<8x256xf32>
    %c8_279 = arith.constant 8 : index
    %c0_280 = arith.constant 0 : index
    %490 = vector.load %arg18[%c8_279, %c0_280] : memref<48x256xf32, #tpu.memory_space<vmem>>, vector<8x256xf32>
    %491 = arith.mulf %489, %489 : vector<8x256xf32>
    %492 = arith.mulf %490, %490 : vector<8x256xf32>
    %493 = arith.addf %491, %492 : vector<8x256xf32>
    %494 = arith.addf %488, %493 : vector<8x256xf32>
    %c16_281 = arith.constant 16 : index
    %c0_282 = arith.constant 0 : index
    %495 = vector.load %arg17[%c16_281, %c0_282] : memref<48x256xf32, #tpu.memory_space<vmem>>, vector<8x256xf32>
    %c16_283 = arith.constant 16 : index
    %c0_284 = arith.constant 0 : index
    %496 = vector.load %arg18[%c16_283, %c0_284] : memref<48x256xf32, #tpu.memory_space<vmem>>, vector<8x256xf32>
    %497 = arith.mulf %495, %495 : vector<8x256xf32>
    %498 = arith.mulf %496, %496 : vector<8x256xf32>
    %499 = arith.addf %497, %498 : vector<8x256xf32>
    %500 = arith.addf %494, %499 : vector<8x256xf32>
    %c24_285 = arith.constant 24 : index
    %c0_286 = arith.constant 0 : index
    %501 = vector.load %arg17[%c24_285, %c0_286] : memref<48x256xf32, #tpu.memory_space<vmem>>, vector<8x256xf32>
    %c24_287 = arith.constant 24 : index
    %c0_288 = arith.constant 0 : index
    %502 = vector.load %arg18[%c24_287, %c0_288] : memref<48x256xf32, #tpu.memory_space<vmem>>, vector<8x256xf32>
    %503 = arith.mulf %501, %501 : vector<8x256xf32>
    %504 = arith.mulf %502, %502 : vector<8x256xf32>
    %505 = arith.addf %503, %504 : vector<8x256xf32>
    %506 = arith.addf %500, %505 : vector<8x256xf32>
    %c32_289 = arith.constant 32 : index
    %c0_290 = arith.constant 0 : index
    %507 = vector.load %arg17[%c32_289, %c0_290] : memref<48x256xf32, #tpu.memory_space<vmem>>, vector<8x256xf32>
    %c32_291 = arith.constant 32 : index
    %c0_292 = arith.constant 0 : index
    %508 = vector.load %arg18[%c32_291, %c0_292] : memref<48x256xf32, #tpu.memory_space<vmem>>, vector<8x256xf32>
    %509 = arith.mulf %507, %507 : vector<8x256xf32>
    %510 = arith.mulf %508, %508 : vector<8x256xf32>
    %511 = arith.addf %509, %510 : vector<8x256xf32>
    %512 = arith.addf %506, %511 : vector<8x256xf32>
    %c40_293 = arith.constant 40 : index
    %c0_294 = arith.constant 0 : index
    %513 = vector.load %arg17[%c40_293, %c0_294] : memref<48x256xf32, #tpu.memory_space<vmem>>, vector<8x256xf32>
    %c40_295 = arith.constant 40 : index
    %c0_296 = arith.constant 0 : index
    %514 = vector.load %arg18[%c40_295, %c0_296] : memref<48x256xf32, #tpu.memory_space<vmem>>, vector<8x256xf32>
    %515 = arith.mulf %513, %513 : vector<8x256xf32>
    %516 = arith.mulf %514, %514 : vector<8x256xf32>
    %517 = arith.addf %515, %516 : vector<8x256xf32>
    %518 = arith.addf %512, %517 : vector<8x256xf32>
    %519 = vector.broadcast %0 : f32 to vector<8x256xf32>
    %520 = arith.mulf %518, %519 : vector<8x256xf32>
    %521 = vector.broadcast %5 : vector<8x1xf32> to vector<8x256xf32>
    %522 = arith.mulf %521, %520 : vector<8x256xf32>
    %523 = vector.broadcast %6 : vector<8x1xf32> to vector<8x256xf32>
    %524 = arith.addf %522, %523 : vector<8x256xf32>
    %c0_297 = arith.constant 0 : index
    %c0_298 = arith.constant 0 : index
    %525 = vector.load %arg10[%c0_297, %c0_298] : memref<8x1280xf32, #tpu.memory_space<vmem>>, vector<8x256xf32>
    tpu.vector_store %arg10[%c0_297, %c0_298], %524 {strides = array<i32>} : memref<8x1280xf32, #tpu.memory_space<vmem>>, vector<8x256xf32>,
    %c0_299 = arith.constant 0 : index
    %c1024 = arith.constant 1024 : index
    %526 = vector.load %arg10[%c0_299, %c1024] : memref<8x1280xf32, #tpu.memory_space<vmem>>, vector<8x256xf32>
    tpu.vector_store %arg10[%c0_299, %c1024], %520 {strides = array<i32>} : memref<8x1280xf32, #tpu.memory_space<vmem>>, vector<8x256xf32>,
    %cst_300 = arith.constant 2.000000e+00 : f32
    %527 = arith.mulf %cst_300, %0 : f32
    %c48_301 = arith.constant 48 : index
    %c0_302 = arith.constant 0 : index
    %528 = vector.load %arg14[%c48_301, %c0_302] : memref<192x256xf32, #tpu.memory_space<vmem>>, vector<8x256xf32>
    %c48_303 = arith.constant 48 : index
    %c0_304 = arith.constant 0 : index
    %529 = vector.load %arg15[%c48_303, %c0_304] : memref<192x256xf32, #tpu.memory_space<vmem>>, vector<8x256xf32>
    %c48_305 = arith.constant 48 : index
    %c0_306 = arith.constant 0 : index
    %530 = vector.load %arg16[%c48_305, %c0_306] : memref<192x256xf32, #tpu.memory_space<vmem>>, vector<8x256xf32>
    %531 = arith.subf %528, %529 : vector<8x256xf32>
    %532 = arith.subf %530, %528 : vector<8x256xf32>
    %533 = arith.subf %532, %529 : vector<8x256xf32>
    %c0_307 = arith.constant 0 : index
    %c0_308 = arith.constant 0 : index
    %534 = vector.load %arg17[%c0_307, %c0_308] : memref<48x256xf32, #tpu.memory_space<vmem>>, vector<8x256xf32>
    %c0_309 = arith.constant 0 : index
    %c0_310 = arith.constant 0 : index
    %535 = vector.load %arg18[%c0_309, %c0_310] : memref<48x256xf32, #tpu.memory_space<vmem>>, vector<8x256xf32>
    %536 = arith.mulf %534, %531 : vector<8x256xf32>
    %537 = arith.mulf %535, %533 : vector<8x256xf32>
    %538 = arith.addf %536, %537 : vector<8x256xf32>
    %c56_311 = arith.constant 56 : index
    %c0_312 = arith.constant 0 : index
    %539 = vector.load %arg14[%c56_311, %c0_312] : memref<192x256xf32, #tpu.memory_space<vmem>>, vector<8x256xf32>
    %c56_313 = arith.constant 56 : index
    %c0_314 = arith.constant 0 : index
    %540 = vector.load %arg15[%c56_313, %c0_314] : memref<192x256xf32, #tpu.memory_space<vmem>>, vector<8x256xf32>
    %c56_315 = arith.constant 56 : index
    %c0_316 = arith.constant 0 : index
    %541 = vector.load %arg16[%c56_315, %c0_316] : memref<192x256xf32, #tpu.memory_space<vmem>>, vector<8x256xf32>
    %542 = arith.subf %539, %540 : vector<8x256xf32>
    %543 = arith.subf %541, %539 : vector<8x256xf32>
    %544 = arith.subf %543, %540 : vector<8x256xf32>
    %c8_317 = arith.constant 8 : index
    %c0_318 = arith.constant 0 : index
    %545 = vector.load %arg17[%c8_317, %c0_318] : memref<48x256xf32, #tpu.memory_space<vmem>>, vector<8x256xf32>
    %c8_319 = arith.constant 8 : index
    %c0_320 = arith.constant 0 : index
    %546 = vector.load %arg18[%c8_319, %c0_320] : memref<48x256xf32, #tpu.memory_space<vmem>>, vector<8x256xf32>
    %547 = arith.mulf %545, %542 : vector<8x256xf32>
    %548 = arith.mulf %546, %544 : vector<8x256xf32>
    %549 = arith.addf %547, %548 : vector<8x256xf32>
    %550 = arith.addf %538, %549 : vector<8x256xf32>
    %c64_321 = arith.constant 64 : index
    %c0_322 = arith.constant 0 : index
    %551 = vector.load %arg14[%c64_321, %c0_322] : memref<192x256xf32, #tpu.memory_space<vmem>>, vector<8x256xf32>
    %c64_323 = arith.constant 64 : index
    %c0_324 = arith.constant 0 : index
    %552 = vector.load %arg15[%c64_323, %c0_324] : memref<192x256xf32, #tpu.memory_space<vmem>>, vector<8x256xf32>
    %c64_325 = arith.constant 64 : index
    %c0_326 = arith.constant 0 : index
    %553 = vector.load %arg16[%c64_325, %c0_326] : memref<192x256xf32, #tpu.memory_space<vmem>>, vector<8x256xf32>
    %554 = arith.subf %551, %552 : vector<8x256xf32>
    %555 = arith.subf %553, %551 : vector<8x256xf32>
    %556 = arith.subf %555, %552 : vector<8x256xf32>
    %c16_327 = arith.constant 16 : index
    %c0_328 = arith.constant 0 : index
    %557 = vector.load %arg17[%c16_327, %c0_328] : memref<48x256xf32, #tpu.memory_space<vmem>>, vector<8x256xf32>
    %c16_329 = arith.constant 16 : index
    %c0_330 = arith.constant 0 : index
    %558 = vector.load %arg18[%c16_329, %c0_330] : memref<48x256xf32, #tpu.memory_space<vmem>>, vector<8x256xf32>
    %559 = arith.mulf %557, %554 : vector<8x256xf32>
    %560 = arith.mulf %558, %556 : vector<8x256xf32>
    %561 = arith.addf %559, %560 : vector<8x256xf32>
    %562 = arith.addf %550, %561 : vector<8x256xf32>
    %c72_331 = arith.constant 72 : index
    %c0_332 = arith.constant 0 : index
    %563 = vector.load %arg14[%c72_331, %c0_332] : memref<192x256xf32, #tpu.memory_space<vmem>>, vector<8x256xf32>
    %c72_333 = arith.constant 72 : index
    %c0_334 = arith.constant 0 : index
    %564 = vector.load %arg15[%c72_333, %c0_334] : memref<192x256xf32, #tpu.memory_space<vmem>>, vector<8x256xf32>
    %c72_335 = arith.constant 72 : index
    %c0_336 = arith.constant 0 : index
    %565 = vector.load %arg16[%c72_335, %c0_336] : memref<192x256xf32, #tpu.memory_space<vmem>>, vector<8x256xf32>
    %566 = arith.subf %563, %564 : vector<8x256xf32>
    %567 = arith.subf %565, %563 : vector<8x256xf32>
    %568 = arith.subf %567, %564 : vector<8x256xf32>
    %c24_337 = arith.constant 24 : index
    %c0_338 = arith.constant 0 : index
    %569 = vector.load %arg17[%c24_337, %c0_338] : memref<48x256xf32, #tpu.memory_space<vmem>>, vector<8x256xf32>
    %c24_339 = arith.constant 24 : index
    %c0_340 = arith.constant 0 : index
    %570 = vector.load %arg18[%c24_339, %c0_340] : memref<48x256xf32, #tpu.memory_space<vmem>>, vector<8x256xf32>
    %571 = arith.mulf %569, %566 : vector<8x256xf32>
    %572 = arith.mulf %570, %568 : vector<8x256xf32>
    %573 = arith.addf %571, %572 : vector<8x256xf32>
    %574 = arith.addf %562, %573 : vector<8x256xf32>
    %c80_341 = arith.constant 80 : index
    %c0_342 = arith.constant 0 : index
    %575 = vector.load %arg14[%c80_341, %c0_342] : memref<192x256xf32, #tpu.memory_space<vmem>>, vector<8x256xf32>
    %c80_343 = arith.constant 80 : index
    %c0_344 = arith.constant 0 : index
    %576 = vector.load %arg15[%c80_343, %c0_344] : memref<192x256xf32, #tpu.memory_space<vmem>>, vector<8x256xf32>
    %c80_345 = arith.constant 80 : index
    %c0_346 = arith.constant 0 : index
    %577 = vector.load %arg16[%c80_345, %c0_346] : memref<192x256xf32, #tpu.memory_space<vmem>>, vector<8x256xf32>
    %578 = arith.subf %575, %576 : vector<8x256xf32>
    %579 = arith.subf %577, %575 : vector<8x256xf32>
    %580 = arith.subf %579, %576 : vector<8x256xf32>
    %c32_347 = arith.constant 32 : index
    %c0_348 = arith.constant 0 : index
    %581 = vector.load %arg17[%c32_347, %c0_348] : memref<48x256xf32, #tpu.memory_space<vmem>>, vector<8x256xf32>
    %c32_349 = arith.constant 32 : index
    %c0_350 = arith.constant 0 : index
    %582 = vector.load %arg18[%c32_349, %c0_350] : memref<48x256xf32, #tpu.memory_space<vmem>>, vector<8x256xf32>
    %583 = arith.mulf %581, %578 : vector<8x256xf32>
    %584 = arith.mulf %582, %580 : vector<8x256xf32>
    %585 = arith.addf %583, %584 : vector<8x256xf32>
    %586 = arith.addf %574, %585 : vector<8x256xf32>
    %c88_351 = arith.constant 88 : index
    %c0_352 = arith.constant 0 : index
    %587 = vector.load %arg14[%c88_351, %c0_352] : memref<192x256xf32, #tpu.memory_space<vmem>>, vector<8x256xf32>
    %c88_353 = arith.constant 88 : index
    %c0_354 = arith.constant 0 : index
    %588 = vector.load %arg15[%c88_353, %c0_354] : memref<192x256xf32, #tpu.memory_space<vmem>>, vector<8x256xf32>
    %c88_355 = arith.constant 88 : index
    %c0_356 = arith.constant 0 : index
    %589 = vector.load %arg16[%c88_355, %c0_356] : memref<192x256xf32, #tpu.memory_space<vmem>>, vector<8x256xf32>
    %590 = arith.subf %587, %588 : vector<8x256xf32>
    %591 = arith.subf %589, %587 : vector<8x256xf32>
    %592 = arith.subf %591, %588 : vector<8x256xf32>
    %c40_357 = arith.constant 40 : index
    %c0_358 = arith.constant 0 : index
    %593 = vector.load %arg17[%c40_357, %c0_358] : memref<48x256xf32, #tpu.memory_space<vmem>>, vector<8x256xf32>
    %c40_359 = arith.constant 40 : index
    %c0_360 = arith.constant 0 : index
    %594 = vector.load %arg18[%c40_359, %c0_360] : memref<48x256xf32, #tpu.memory_space<vmem>>, vector<8x256xf32>
    %595 = arith.mulf %593, %590 : vector<8x256xf32>
    %596 = arith.mulf %594, %592 : vector<8x256xf32>
    %597 = arith.addf %595, %596 : vector<8x256xf32>
    %598 = arith.addf %586, %597 : vector<8x256xf32>
    %599 = vector.broadcast %527 : f32 to vector<8x256xf32>
    %600 = arith.mulf %598, %599 : vector<8x256xf32>
    %601 = vector.broadcast %5 : vector<8x1xf32> to vector<8x256xf32>
    %602 = arith.mulf %601, %600 : vector<8x256xf32>
    %c0_361 = arith.constant 0 : index
    %c256 = arith.constant 256 : index
    %603 = vector.load %arg10[%c0_361, %c256] : memref<8x1280xf32, #tpu.memory_space<vmem>>, vector<8x256xf32>
    tpu.vector_store %arg10[%c0_361, %c256], %602 {strides = array<i32>} : memref<8x1280xf32, #tpu.memory_space<vmem>>, vector<8x256xf32>,
    %c96_362 = arith.constant 96 : index
    %c0_363 = arith.constant 0 : index
    %604 = vector.load %arg14[%c96_362, %c0_363] : memref<192x256xf32, #tpu.memory_space<vmem>>, vector<8x256xf32>
    %c96_364 = arith.constant 96 : index
    %c0_365 = arith.constant 0 : index
    %605 = vector.load %arg15[%c96_364, %c0_365] : memref<192x256xf32, #tpu.memory_space<vmem>>, vector<8x256xf32>
    %c96_366 = arith.constant 96 : index
    %c0_367 = arith.constant 0 : index
    %606 = vector.load %arg16[%c96_366, %c0_367] : memref<192x256xf32, #tpu.memory_space<vmem>>, vector<8x256xf32>
    %607 = arith.subf %604, %605 : vector<8x256xf32>
    %608 = arith.subf %606, %604 : vector<8x256xf32>
    %609 = arith.subf %608, %605 : vector<8x256xf32>
    %c0_368 = arith.constant 0 : index
    %c0_369 = arith.constant 0 : index
    %610 = vector.load %arg17[%c0_368, %c0_369] : memref<48x256xf32, #tpu.memory_space<vmem>>, vector<8x256xf32>
    %c0_370 = arith.constant 0 : index
    %c0_371 = arith.constant 0 : index
    %611 = vector.load %arg18[%c0_370, %c0_371] : memref<48x256xf32, #tpu.memory_space<vmem>>, vector<8x256xf32>
    %612 = arith.mulf %610, %607 : vector<8x256xf32>
    %613 = arith.mulf %611, %609 : vector<8x256xf32>
    %614 = arith.addf %612, %613 : vector<8x256xf32>
    %c104_372 = arith.constant 104 : index
    %c0_373 = arith.constant 0 : index
    %615 = vector.load %arg14[%c104_372, %c0_373] : memref<192x256xf32, #tpu.memory_space<vmem>>, vector<8x256xf32>
    %c104_374 = arith.constant 104 : index
    %c0_375 = arith.constant 0 : index
    %616 = vector.load %arg15[%c104_374, %c0_375] : memref<192x256xf32, #tpu.memory_space<vmem>>, vector<8x256xf32>
    %c104_376 = arith.constant 104 : index
    %c0_377 = arith.constant 0 : index
    %617 = vector.load %arg16[%c104_376, %c0_377] : memref<192x256xf32, #tpu.memory_space<vmem>>, vector<8x256xf32>
    %618 = arith.subf %615, %616 : vector<8x256xf32>
    %619 = arith.subf %617, %615 : vector<8x256xf32>
    %620 = arith.subf %619, %616 : vector<8x256xf32>
    %c8_378 = arith.constant 8 : index
    %c0_379 = arith.constant 0 : index
    %621 = vector.load %arg17[%c8_378, %c0_379] : memref<48x256xf32, #tpu.memory_space<vmem>>, vector<8x256xf32>
    %c8_380 = arith.constant 8 : index
    %c0_381 = arith.constant 0 : index
    %622 = vector.load %arg18[%c8_380, %c0_381] : memref<48x256xf32, #tpu.memory_space<vmem>>, vector<8x256xf32>
    %623 = arith.mulf %621, %618 : vector<8x256xf32>
    %624 = arith.mulf %622, %620 : vector<8x256xf32>
    %625 = arith.addf %623, %624 : vector<8x256xf32>
    %626 = arith.addf %614, %625 : vector<8x256xf32>
    %c112_382 = arith.constant 112 : index
    %c0_383 = arith.constant 0 : index
    %627 = vector.load %arg14[%c112_382, %c0_383] : memref<192x256xf32, #tpu.memory_space<vmem>>, vector<8x256xf32>
    %c112_384 = arith.constant 112 : index
    %c0_385 = arith.constant 0 : index
    %628 = vector.load %arg15[%c112_384, %c0_385] : memref<192x256xf32, #tpu.memory_space<vmem>>, vector<8x256xf32>
    %c112_386 = arith.constant 112 : index
    %c0_387 = arith.constant 0 : index
    %629 = vector.load %arg16[%c112_386, %c0_387] : memref<192x256xf32, #tpu.memory_space<vmem>>, vector<8x256xf32>
    %630 = arith.subf %627, %628 : vector<8x256xf32>
    %631 = arith.subf %629, %627 : vector<8x256xf32>
    %632 = arith.subf %631, %628 : vector<8x256xf32>
    %c16_388 = arith.constant 16 : index
    %c0_389 = arith.constant 0 : index
    %633 = vector.load %arg17[%c16_388, %c0_389] : memref<48x256xf32, #tpu.memory_space<vmem>>, vector<8x256xf32>
    %c16_390 = arith.constant 16 : index
    %c0_391 = arith.constant 0 : index
    %634 = vector.load %arg18[%c16_390, %c0_391] : memref<48x256xf32, #tpu.memory_space<vmem>>, vector<8x256xf32>
    %635 = arith.mulf %633, %630 : vector<8x256xf32>
    %636 = arith.mulf %634, %632 : vector<8x256xf32>
    %637 = arith.addf %635, %636 : vector<8x256xf32>
    %638 = arith.addf %626, %637 : vector<8x256xf32>
    %c120_392 = arith.constant 120 : index
    %c0_393 = arith.constant 0 : index
    %639 = vector.load %arg14[%c120_392, %c0_393] : memref<192x256xf32, #tpu.memory_space<vmem>>, vector<8x256xf32>
    %c120_394 = arith.constant 120 : index
    %c0_395 = arith.constant 0 : index
    %640 = vector.load %arg15[%c120_394, %c0_395] : memref<192x256xf32, #tpu.memory_space<vmem>>, vector<8x256xf32>
    %c120_396 = arith.constant 120 : index
    %c0_397 = arith.constant 0 : index
    %641 = vector.load %arg16[%c120_396, %c0_397] : memref<192x256xf32, #tpu.memory_space<vmem>>, vector<8x256xf32>
    %642 = arith.subf %639, %640 : vector<8x256xf32>
    %643 = arith.subf %641, %639 : vector<8x256xf32>
    %644 = arith.subf %643, %640 : vector<8x256xf32>
    %c24_398 = arith.constant 24 : index
    %c0_399 = arith.constant 0 : index
    %645 = vector.load %arg17[%c24_398, %c0_399] : memref<48x256xf32, #tpu.memory_space<vmem>>, vector<8x256xf32>
    %c24_400 = arith.constant 24 : index
    %c0_401 = arith.constant 0 : index
    %646 = vector.load %arg18[%c24_400, %c0_401] : memref<48x256xf32, #tpu.memory_space<vmem>>, vector<8x256xf32>
    %647 = arith.mulf %645, %642 : vector<8x256xf32>
    %648 = arith.mulf %646, %644 : vector<8x256xf32>
    %649 = arith.addf %647, %648 : vector<8x256xf32>
    %650 = arith.addf %638, %649 : vector<8x256xf32>
    %c128_402 = arith.constant 128 : index
    %c0_403 = arith.constant 0 : index
    %651 = vector.load %arg14[%c128_402, %c0_403] : memref<192x256xf32, #tpu.memory_space<vmem>>, vector<8x256xf32>
    %c128_404 = arith.constant 128 : index
    %c0_405 = arith.constant 0 : index
    %652 = vector.load %arg15[%c128_404, %c0_405] : memref<192x256xf32, #tpu.memory_space<vmem>>, vector<8x256xf32>
    %c128_406 = arith.constant 128 : index
    %c0_407 = arith.constant 0 : index
    %653 = vector.load %arg16[%c128_406, %c0_407] : memref<192x256xf32, #tpu.memory_space<vmem>>, vector<8x256xf32>
    %654 = arith.subf %651, %652 : vector<8x256xf32>
    %655 = arith.subf %653, %651 : vector<8x256xf32>
    %656 = arith.subf %655, %652 : vector<8x256xf32>
    %c32_408 = arith.constant 32 : index
    %c0_409 = arith.constant 0 : index
    %657 = vector.load %arg17[%c32_408, %c0_409] : memref<48x256xf32, #tpu.memory_space<vmem>>, vector<8x256xf32>
    %c32_410 = arith.constant 32 : index
    %c0_411 = arith.constant 0 : index
    %658 = vector.load %arg18[%c32_410, %c0_411] : memref<48x256xf32, #tpu.memory_space<vmem>>, vector<8x256xf32>
    %659 = arith.mulf %657, %654 : vector<8x256xf32>
    %660 = arith.mulf %658, %656 : vector<8x256xf32>
    %661 = arith.addf %659, %660 : vector<8x256xf32>
    %662 = arith.addf %650, %661 : vector<8x256xf32>
    %c136_412 = arith.constant 136 : index
    %c0_413 = arith.constant 0 : index
    %663 = vector.load %arg14[%c136_412, %c0_413] : memref<192x256xf32, #tpu.memory_space<vmem>>, vector<8x256xf32>
    %c136_414 = arith.constant 136 : index
    %c0_415 = arith.constant 0 : index
    %664 = vector.load %arg15[%c136_414, %c0_415] : memref<192x256xf32, #tpu.memory_space<vmem>>, vector<8x256xf32>
    %c136_416 = arith.constant 136 : index
    %c0_417 = arith.constant 0 : index
    %665 = vector.load %arg16[%c136_416, %c0_417] : memref<192x256xf32, #tpu.memory_space<vmem>>, vector<8x256xf32>
    %666 = arith.subf %663, %664 : vector<8x256xf32>
    %667 = arith.subf %665, %663 : vector<8x256xf32>
    %668 = arith.subf %667, %664 : vector<8x256xf32>
    %c40_418 = arith.constant 40 : index
    %c0_419 = arith.constant 0 : index
    %669 = vector.load %arg17[%c40_418, %c0_419] : memref<48x256xf32, #tpu.memory_space<vmem>>, vector<8x256xf32>
    %c40_420 = arith.constant 40 : index
    %c0_421 = arith.constant 0 : index
    %670 = vector.load %arg18[%c40_420, %c0_421] : memref<48x256xf32, #tpu.memory_space<vmem>>, vector<8x256xf32>
    %671 = arith.mulf %669, %666 : vector<8x256xf32>
    %672 = arith.mulf %670, %668 : vector<8x256xf32>
    %673 = arith.addf %671, %672 : vector<8x256xf32>
    %674 = arith.addf %662, %673 : vector<8x256xf32>
    %675 = vector.broadcast %527 : f32 to vector<8x256xf32>
    %676 = arith.mulf %674, %675 : vector<8x256xf32>
    %677 = vector.broadcast %5 : vector<8x1xf32> to vector<8x256xf32>
    %678 = arith.mulf %677, %676 : vector<8x256xf32>
    %c0_422 = arith.constant 0 : index
    %c512 = arith.constant 512 : index
    %679 = vector.load %arg10[%c0_422, %c512] : memref<8x1280xf32, #tpu.memory_space<vmem>>, vector<8x256xf32>
    tpu.vector_store %arg10[%c0_422, %c512], %678 {strides = array<i32>} : memref<8x1280xf32, #tpu.memory_space<vmem>>, vector<8x256xf32>,
    %c144_423 = arith.constant 144 : index
    %c0_424 = arith.constant 0 : index
    %680 = vector.load %arg14[%c144_423, %c0_424] : memref<192x256xf32, #tpu.memory_space<vmem>>, vector<8x256xf32>
    %c144_425 = arith.constant 144 : index
    %c0_426 = arith.constant 0 : index
    %681 = vector.load %arg15[%c144_425, %c0_426] : memref<192x256xf32, #tpu.memory_space<vmem>>, vector<8x256xf32>
    %c144_427 = arith.constant 144 : index
    %c0_428 = arith.constant 0 : index
    %682 = vector.load %arg16[%c144_427, %c0_428] : memref<192x256xf32, #tpu.memory_space<vmem>>, vector<8x256xf32>
    %683 = arith.subf %680, %681 : vector<8x256xf32>
    %684 = arith.subf %682, %680 : vector<8x256xf32>
    %685 = arith.subf %684, %681 : vector<8x256xf32>
    %c0_429 = arith.constant 0 : index
    %c0_430 = arith.constant 0 : index
    %686 = vector.load %arg17[%c0_429, %c0_430] : memref<48x256xf32, #tpu.memory_space<vmem>>, vector<8x256xf32>
    %c0_431 = arith.constant 0 : index
    %c0_432 = arith.constant 0 : index
    %687 = vector.load %arg18[%c0_431, %c0_432] : memref<48x256xf32, #tpu.memory_space<vmem>>, vector<8x256xf32>
    %688 = arith.mulf %686, %683 : vector<8x256xf32>
    %689 = arith.mulf %687, %685 : vector<8x256xf32>
    %690 = arith.addf %688, %689 : vector<8x256xf32>
    %c152_433 = arith.constant 152 : index
    %c0_434 = arith.constant 0 : index
    %691 = vector.load %arg14[%c152_433, %c0_434] : memref<192x256xf32, #tpu.memory_space<vmem>>, vector<8x256xf32>
    %c152_435 = arith.constant 152 : index
    %c0_436 = arith.constant 0 : index
    %692 = vector.load %arg15[%c152_435, %c0_436] : memref<192x256xf32, #tpu.memory_space<vmem>>, vector<8x256xf32>
    %c152_437 = arith.constant 152 : index
    %c0_438 = arith.constant 0 : index
    %693 = vector.load %arg16[%c152_437, %c0_438] : memref<192x256xf32, #tpu.memory_space<vmem>>, vector<8x256xf32>
    %694 = arith.subf %691, %692 : vector<8x256xf32>
    %695 = arith.subf %693, %691 : vector<8x256xf32>
    %696 = arith.subf %695, %692 : vector<8x256xf32>
    %c8_439 = arith.constant 8 : index
    %c0_440 = arith.constant 0 : index
    %697 = vector.load %arg17[%c8_439, %c0_440] : memref<48x256xf32, #tpu.memory_space<vmem>>, vector<8x256xf32>
    %c8_441 = arith.constant 8 : index
    %c0_442 = arith.constant 0 : index
    %698 = vector.load %arg18[%c8_441, %c0_442] : memref<48x256xf32, #tpu.memory_space<vmem>>, vector<8x256xf32>
    %699 = arith.mulf %697, %694 : vector<8x256xf32>
    %700 = arith.mulf %698, %696 : vector<8x256xf32>
    %701 = arith.addf %699, %700 : vector<8x256xf32>
    %702 = arith.addf %690, %701 : vector<8x256xf32>
    %c160_443 = arith.constant 160 : index
    %c0_444 = arith.constant 0 : index
    %703 = vector.load %arg14[%c160_443, %c0_444] : memref<192x256xf32, #tpu.memory_space<vmem>>, vector<8x256xf32>
    %c160_445 = arith.constant 160 : index
    %c0_446 = arith.constant 0 : index
    %704 = vector.load %arg15[%c160_445, %c0_446] : memref<192x256xf32, #tpu.memory_space<vmem>>, vector<8x256xf32>
    %c160_447 = arith.constant 160 : index
    %c0_448 = arith.constant 0 : index
    %705 = vector.load %arg16[%c160_447, %c0_448] : memref<192x256xf32, #tpu.memory_space<vmem>>, vector<8x256xf32>
    %706 = arith.subf %703, %704 : vector<8x256xf32>
    %707 = arith.subf %705, %703 : vector<8x256xf32>
    %708 = arith.subf %707, %704 : vector<8x256xf32>
    %c16_449 = arith.constant 16 : index
    %c0_450 = arith.constant 0 : index
    %709 = vector.load %arg17[%c16_449, %c0_450] : memref<48x256xf32, #tpu.memory_space<vmem>>, vector<8x256xf32>
    %c16_451 = arith.constant 16 : index
    %c0_452 = arith.constant 0 : index
    %710 = vector.load %arg18[%c16_451, %c0_452] : memref<48x256xf32, #tpu.memory_space<vmem>>, vector<8x256xf32>
    %711 = arith.mulf %709, %706 : vector<8x256xf32>
    %712 = arith.mulf %710, %708 : vector<8x256xf32>
    %713 = arith.addf %711, %712 : vector<8x256xf32>
    %714 = arith.addf %702, %713 : vector<8x256xf32>
    %c168_453 = arith.constant 168 : index
    %c0_454 = arith.constant 0 : index
    %715 = vector.load %arg14[%c168_453, %c0_454] : memref<192x256xf32, #tpu.memory_space<vmem>>, vector<8x256xf32>
    %c168_455 = arith.constant 168 : index
    %c0_456 = arith.constant 0 : index
    %716 = vector.load %arg15[%c168_455, %c0_456] : memref<192x256xf32, #tpu.memory_space<vmem>>, vector<8x256xf32>
    %c168_457 = arith.constant 168 : index
    %c0_458 = arith.constant 0 : index
    %717 = vector.load %arg16[%c168_457, %c0_458] : memref<192x256xf32, #tpu.memory_space<vmem>>, vector<8x256xf32>
    %718 = arith.subf %715, %716 : vector<8x256xf32>
    %719 = arith.subf %717, %715 : vector<8x256xf32>
    %720 = arith.subf %719, %716 : vector<8x256xf32>
    %c24_459 = arith.constant 24 : index
    %c0_460 = arith.constant 0 : index
    %721 = vector.load %arg17[%c24_459, %c0_460] : memref<48x256xf32, #tpu.memory_space<vmem>>, vector<8x256xf32>
    %c24_461 = arith.constant 24 : index
    %c0_462 = arith.constant 0 : index
    %722 = vector.load %arg18[%c24_461, %c0_462] : memref<48x256xf32, #tpu.memory_space<vmem>>, vector<8x256xf32>
    %723 = arith.mulf %721, %718 : vector<8x256xf32>
    %724 = arith.mulf %722, %720 : vector<8x256xf32>
    %725 = arith.addf %723, %724 : vector<8x256xf32>
    %726 = arith.addf %714, %725 : vector<8x256xf32>
    %c176_463 = arith.constant 176 : index
    %c0_464 = arith.constant 0 : index
    %727 = vector.load %arg14[%c176_463, %c0_464] : memref<192x256xf32, #tpu.memory_space<vmem>>, vector<8x256xf32>
    %c176_465 = arith.constant 176 : index
    %c0_466 = arith.constant 0 : index
    %728 = vector.load %arg15[%c176_465, %c0_466] : memref<192x256xf32, #tpu.memory_space<vmem>>, vector<8x256xf32>
    %c176_467 = arith.constant 176 : index
    %c0_468 = arith.constant 0 : index
    %729 = vector.load %arg16[%c176_467, %c0_468] : memref<192x256xf32, #tpu.memory_space<vmem>>, vector<8x256xf32>
    %730 = arith.subf %727, %728 : vector<8x256xf32>
    %731 = arith.subf %729, %727 : vector<8x256xf32>
    %732 = arith.subf %731, %728 : vector<8x256xf32>
    %c32_469 = arith.constant 32 : index
    %c0_470 = arith.constant 0 : index
    %733 = vector.load %arg17[%c32_469, %c0_470] : memref<48x256xf32, #tpu.memory_space<vmem>>, vector<8x256xf32>
    %c32_471 = arith.constant 32 : index
    %c0_472 = arith.constant 0 : index
    %734 = vector.load %arg18[%c32_471, %c0_472] : memref<48x256xf32, #tpu.memory_space<vmem>>, vector<8x256xf32>
    %735 = arith.mulf %733, %730 : vector<8x256xf32>
    %736 = arith.mulf %734, %732 : vector<8x256xf32>
    %737 = arith.addf %735, %736 : vector<8x256xf32>
    %738 = arith.addf %726, %737 : vector<8x256xf32>
    %c184_473 = arith.constant 184 : index
    %c0_474 = arith.constant 0 : index
    %739 = vector.load %arg14[%c184_473, %c0_474] : memref<192x256xf32, #tpu.memory_space<vmem>>, vector<8x256xf32>
    %c184_475 = arith.constant 184 : index
    %c0_476 = arith.constant 0 : index
    %740 = vector.load %arg15[%c184_475, %c0_476] : memref<192x256xf32, #tpu.memory_space<vmem>>, vector<8x256xf32>
    %c184_477 = arith.constant 184 : index
    %c0_478 = arith.constant 0 : index
    %741 = vector.load %arg16[%c184_477, %c0_478] : memref<192x256xf32, #tpu.memory_space<vmem>>, vector<8x256xf32>
    %742 = arith.subf %739, %740 : vector<8x256xf32>
    %743 = arith.subf %741, %739 : vector<8x256xf32>
    %744 = arith.subf %743, %740 : vector<8x256xf32>
    %c40_479 = arith.constant 40 : index
    %c0_480 = arith.constant 0 : index
    %745 = vector.load %arg17[%c40_479, %c0_480] : memref<48x256xf32, #tpu.memory_space<vmem>>, vector<8x256xf32>
    %c40_481 = arith.constant 40 : index
    %c0_482 = arith.constant 0 : index
    %746 = vector.load %arg18[%c40_481, %c0_482] : memref<48x256xf32, #tpu.memory_space<vmem>>, vector<8x256xf32>
    %747 = arith.mulf %745, %742 : vector<8x256xf32>
    %748 = arith.mulf %746, %744 : vector<8x256xf32>
    %749 = arith.addf %747, %748 : vector<8x256xf32>
    %750 = arith.addf %738, %749 : vector<8x256xf32>
    %751 = vector.broadcast %527 : f32 to vector<8x256xf32>
    %752 = arith.mulf %750, %751 : vector<8x256xf32>
    %753 = vector.broadcast %5 : vector<8x1xf32> to vector<8x256xf32>
    %754 = arith.mulf %753, %752 : vector<8x256xf32>
    %c0_483 = arith.constant 0 : index
    %c768 = arith.constant 768 : index
    %755 = vector.load %arg10[%c0_483, %c768] : memref<8x1280xf32, #tpu.memory_space<vmem>>, vector<8x256xf32>
    tpu.vector_store %arg10[%c0_483, %c768], %754 {strides = array<i32>} : memref<8x1280xf32, #tpu.memory_space<vmem>>, vector<8x256xf32>,
    return
  }
  func.func @transform_0(%arg0: i32) -> i32 {
    %c0_i32 = arith.constant 0 : i32
    %c0_i32_0 = arith.constant 0 : i32
    return %c0_i32 : i32
  }
  func.func @transform_1(%arg0: i32) -> (i32, i32) {
    %c0_i32 = arith.constant 0 : i32
    %c0_i32_0 = arith.constant 0 : i32
    return %arg0, %c0_i32 : i32, i32
  }
  func.func @transform_2(%arg0: i32) -> (i32, i32) {
    %c0_i32 = arith.constant 0 : i32
    %c0_i32_0 = arith.constant 0 : i32
    %c0_i32_1 = arith.constant 0 : i32
    return %c0_i32, %c0_i32_0 : i32, i32
  }
  func.func @transform_3(%arg0: i32) -> (i32, i32) {
    %c0_i32 = arith.constant 0 : i32
    %c0_i32_0 = arith.constant 0 : i32
    %c0_i32_1 = arith.constant 0 : i32
    return %c0_i32, %c0_i32_0 : i32, i32
  }
  func.func @transform_4(%arg0: i32) -> (i32, i32) {
    %c0_i32 = arith.constant 0 : i32
    %c0_i32_0 = arith.constant 0 : i32
    %c0_i32_1 = arith.constant 0 : i32
    return %c0_i32, %c0_i32_0 : i32, i32
  }
  func.func @transform_5(%arg0: i32) -> (i32, i32) {
    %c0_i32 = arith.constant 0 : i32
    %c0_i32_0 = arith.constant 0 : i32
    %c0_i32_1 = arith.constant 0 : i32
    return %c0_i32, %c0_i32_0 : i32, i32
  }
  func.func @transform_6(%arg0: i32) -> (i32, i32) {
    %c0_i32 = arith.constant 0 : i32
    %c0_i32_0 = arith.constant 0 : i32
    %c0_i32_1 = arith.constant 0 : i32
    return %c0_i32, %c0_i32_0 : i32, i32
  }
  func.func @transform_7(%arg0: i32) -> (i32, i32) {
    %c0_i32 = arith.constant 0 : i32
    %c0_i32_0 = arith.constant 0 : i32
    %c0_i32_1 = arith.constant 0 : i32
    return %c0_i32, %c0_i32_0 : i32, i32
  }
  func.func @transform_8(%arg0: i32) -> (i32, i32) {
    %c0_i32 = arith.constant 0 : i32
    %c0_i32_0 = arith.constant 0 : i32
    %c0_i32_1 = arith.constant 0 : i32
    return %c0_i32, %c0_i32_0 : i32, i32
  }
  func.func @transform_9(%arg0: i32) -> (i32, i32) {
    %c0_i32 = arith.constant 0 : i32
    %c0_i32_0 = arith.constant 0 : i32
    return %arg0, %c0_i32 : i32, i32
  }
}

</mosaic_0001>

<llo_original>
// kernel: tpu_custom_call.1
$region0: #{tpu_custom_call.1}
  #allocation0 [shape = 'u32[]', space=smem, size = 0x4, offset = 0x4, fixed_abs, tag = 'smem constant byte address 0x4 - core index']
  #allocation1 [shape = 'u32[72,128]{1,0:T(1,128)}', space=vmem, size = 0x9000, scoped, tag = 'internal scratch']
  #allocation2 [shape = 'f32[192,256]{1,0:T(8,128)}', space=vmem, size = 0x30000, scoped, tag = 'scratch operand']
  #allocation3 [shape = 'f32[192,256]{1,0:T(8,128)}', space=vmem, size = 0x30000, scoped, tag = 'scratch operand']
  #allocation4 [shape = 'f32[192,256]{1,0:T(8,128)}', space=vmem, size = 0x30000, scoped, tag = 'scratch operand']
  #allocation5 [shape = 'f32[192,256]{1,0:T(8,128)}', space=vmem, size = 0x30000, scoped, tag = 'scratch operand']
  #allocation6 [shape = 'f32[192,256]{1,0:T(8,128)}', space=vmem, size = 0x30000, scoped, tag = 'scratch operand']
  #allocation7 [shape = 'f32[192,256]{1,0:T(8,128)}', space=vmem, size = 0x30000, scoped, tag = 'scratch operand']
  #allocation8 [shape = 'f32[48,256]{1,0:T(8,128)}', space=vmem, size = 0xc000, scoped, tag = 'scratch operand']
  #allocation9 [shape = 'f32[48,256]{1,0:T(8,128)}', space=vmem, size = 0xc000, scoped, tag = 'scratch operand']
  #allocation10 [shape = 'f32[1]{0:T(128)S(6)}', space=smem, size = 0x200, scoped, tag = 'scoped memory for tpu_custom_call.1']
  %s0 = inlined_call_operand.<no memory space> [shape: f32[1], index: 0, kind: input, shape index: {}]
  %s1 = inlined_call_operand.hbm [shape: f32[8,8], index: 1, kind: input, shape index: {}]
  %s2 = inlined_call_operand.hbm [shape: f32[8,256], index: 2, kind: input, shape index: {}]
  %s3 = inlined_call_operand.hbm [shape: f32[8,256], index: 3, kind: input, shape index: {}]
  %s4 = inlined_call_operand.hbm [shape: f32[8,256], index: 4, kind: input, shape index: {}]
  %s5 = inlined_call_operand.hbm [shape: f32[8,256], index: 5, kind: input, shape index: {}]
  %s6 = inlined_call_operand.hbm [shape: f32[256,256], index: 6, kind: input, shape index: {}]
  %s7 = inlined_call_operand.hbm [shape: f32[256,256], index: 7, kind: input, shape index: {}]
  %s8 = inlined_call_operand.hbm [shape: f32[256,256], index: 8, kind: input, shape index: {}]
  %s9 = inlined_call_operand.hbm [shape: f32[8,1280], index: 9, kind: output, shape index: {}]
  %s10 = sld [smem:[#allocation0]]
  $region78: #{tpu_custom_call.1} parent=0
    _
  %s12 = ssub.s32 1, %s10
  %s13 = scalar_select 0, %s12, %s10
  %14 = sst [smem:[#allocation10]] %s0
  $region1: #{tpu_custom_call.1} parent=0
    #allocation11 [shape = 'u8[4096]{0}', space=vmem, size = 0x1000, scoped, tag = 'input window, operand 1, single buffered']
    #allocation12 [shape = 's32[1]{0}', space=sflag, size = 0x4, scoped, tag = 'scoped memory for tpu_custom_call.1']
    #allocation13 [shape = 's32[1]{0}', space=sflag, size = 0x4, scoped, tag = 'scoped memory for tpu_custom_call.1']
    #allocation14 [shape = 'u8[8192]{0}', space=vmem, size = 0x2000, scoped, tag = 'input window, operand 2, single buffered']
    #allocation15 [shape = 's32[1]{0}', space=sflag, size = 0x4, scoped, tag = 'scoped memory for tpu_custom_call.1']
    #allocation16 [shape = 'u8[8192]{0}', space=vmem, size = 0x2000, scoped, tag = 'input window, operand 3, single buffered']
    #allocation17 [shape = 'u8[8192]{0}', space=vmem, size = 0x2000, scoped, tag = 'input window, operand 4, single buffered']
    #allocation18 [shape = 's32[1]{0}', space=sflag, size = 0x4, scoped, tag = 'scoped memory for tpu_custom_call.1']
    #allocation19 [shape = 'u8[8192]{0}', space=vmem, size = 0x2000, scoped, tag = 'input window, operand 5, single buffered']
    #allocation20 [shape = 'u8[262144]{0}', space=vmem, size = 0x40000, scoped, tag = 'input window, operand 6, single buffered']
    #allocation21 [shape = 's32[1]{0}', space=sflag, size = 0x4, scoped, tag = 'scoped memory for tpu_custom_call.1']
    #allocation22 [shape = 'u8[262144]{0}', space=vmem, size = 0x40000, scoped, tag = 'input window, operand 7, single buffered']
    #allocation23 [shape = 'u8[262144]{0}', space=vmem, size = 0x40000, scoped, tag = 'input window, operand 8, single buffered']
    #allocation24 [shape = 's32[1]{0}', space=sflag, size = 0x4, scoped, tag = 'scoped memory for tpu_custom_call.1']
    #allocation25 [shape = 'u8[40960]{0}', space=vmem, size = 0xa000, scoped, tag = 'output window, operand 0, single buffered']
    %15 = vsyncpa [#allocation12], 0
    %16 = vsyncpa [#allocation15], 0
    %17 = vsyncpa [#allocation18], 0
    %18 = vsyncpa [#allocation21], 0
    %19 = vsyncpa [#allocation24], 0
    %20 = vsyncpa [#allocation13], 0
    // Predicated region
    $region2: #{tpu_custom_call.1} parent=1 // pred_check
      _
    $region3: #{tpu_custom_call.1} parent=1 // pred_check_branch
      %22 = sbr.rel (0) target = $region5
    $region4: #{tpu_custom_call.1} parent=1 // pred_region
      _
    $region5: #{tpu_custom_call.1} parent=1 // pred_fallthru
      _
    // Predicated region
    $region6: #{tpu_custom_call.1} parent=1 // pred_check
      _
    $region7: #{tpu_custom_call.1} parent=1 // pred_check_branch
      %24 = sbr.rel (0) target = $region9
    $region8: #{tpu_custom_call.1} parent=1 // pred_region
      %26 = vsyncadd [#allocation12], 0
      %s28 = sshll.u32 %s1, 4
      %s29 = int_to_ptr.hbm [resolvable:$true] %s28
      %s30 = sshll.u32 [#allocation11], 4
      %s31 = int_to_ptr.vmem [resolvable:$true] %s30
      %33 = dma.hbm_to_vmem [thread:$0]  %s29, 128, %s31, [#allocation12]
    $region9: #{tpu_custom_call.1} parent=1 // pred_fallthru
      _
    // Predicated region
    $region10: #{tpu_custom_call.1} parent=1 // pred_check
      _
    $region11: #{tpu_custom_call.1} parent=1 // pred_check_branch
      %35 = sbr.rel (0) target = $region13
    $region12: #{tpu_custom_call.1} parent=1 // pred_region
      %37 = vsyncadd [#allocation15], 0
      %s39 = sshll.u32 %s2, 4
      %s40 = int_to_ptr.hbm [resolvable:$true] %s39
      %s41 = sshll.u32 [#allocation14], 4
      %s42 = int_to_ptr.vmem [resolvable:$true] %s41
      %44 = dma.hbm_to_vmem [thread:$0]  %s40, 256, %s42, [#allocation15]
    $region13: #{tpu_custom_call.1} parent=1 // pred_fallthru
      _
    // Predicated region
    $region14: #{tpu_custom_call.1} parent=1 // pred_check
      _
    $region15: #{tpu_custom_call.1} parent=1 // pred_check_branch
      %46 = sbr.rel (0) target = $region17
    $region16: #{tpu_custom_call.1} parent=1 // pred_region
      %48 = vsyncadd [#allocation15], 0
      %s50 = sshll.u32 %s3, 4
      %s51 = int_to_ptr.hbm [resolvable:$true] %s50
      %s52 = sshll.u32 [#allocation16], 4
      %s53 = int_to_ptr.vmem [resolvable:$true] %s52
      %55 = dma.hbm_to_vmem [thread:$0]  %s51, 256, %s53, [#allocation15]
    $region17: #{tpu_custom_call.1} parent=1 // pred_fallthru
      _
    // Predicated region
    $region18: #{tpu_custom_call.1} parent=1 // pred_check
      _
    $region19: #{tpu_custom_call.1} parent=1 // pred_check_branch
      %57 = sbr.rel (0) target = $region21
    $region20: #{tpu_custom_call.1} parent=1 // pred_region
      %59 = vsyncadd [#allocation18], 0
      %s61 = sshll.u32 %s4, 4
      %s62 = int_to_ptr.hbm [resolvable:$true] %s61
      %s63 = sshll.u32 [#allocation17], 4
      %s64 = int_to_ptr.vmem [resolvable:$true] %s63
      %66 = dma.hbm_to_vmem [thread:$0]  %s62, 256, %s64, [#allocation18]
    $region21: #{tpu_custom_call.1} parent=1 // pred_fallthru
      _
    // Predicated region
    $region22: #{tpu_custom_call.1} parent=1 // pred_check
      _
    $region23: #{tpu_custom_call.1} parent=1 // pred_check_branch
      %68 = sbr.rel (0) target = $region25
    $region24: #{tpu_custom_call.1} parent=1 // pred_region
      %70 = vsyncadd [#allocation18], 0
      %s72 = sshll.u32 %s5, 4
      %s73 = int_to_ptr.hbm [resolvable:$true] %s72
      %s74 = sshll.u32 [#allocation19], 4
      %s75 = int_to_ptr.vmem [resolvable:$true] %s74
      %77 = dma.hbm_to_vmem [thread:$0]  %s73, 256, %s75, [#allocation18]
    $region25: #{tpu_custom_call.1} parent=1 // pred_fallthru
      _
    // Predicated region
    $region26: #{tpu_custom_call.1} parent=1 // pred_check
      _
    $region27: #{tpu_custom_call.1} parent=1 // pred_check_branch
      %79 = sbr.rel (0) target = $region29
    $region28: #{tpu_custom_call.1} parent=1 // pred_region
      %81 = vsyncadd [#allocation21], 0
      %s82 = sshll.u32 %s6, 4
      %s83 = int_to_ptr.hbm [resolvable:$true] %s82
      %s84 = sshll.u32 [#allocation20], 4
      %s85 = int_to_ptr.vmem [resolvable:$true] %s84
      %90 = dma.hbm_to_vmem [thread:$0]  %s83, 8192, %s85, [#allocation21], 256, 256, 16
    $region29: #{tpu_custom_call.1} parent=1 // pred_fallthru
      _
    // Predicated region
    $region30: #{tpu_custom_call.1} parent=1 // pred_check
      _
    $region31: #{tpu_custom_call.1} parent=1 // pred_check_branch
      %92 = sbr.rel (0) target = $region33
    $region32: #{tpu_custom_call.1} parent=1 // pred_region
      %94 = vsyncadd [#allocation21], 0
      %s95 = sshll.u32 %s7, 4
      %s96 = int_to_ptr.hbm [resolvable:$true] %s95
      %s97 = sshll.u32 [#allocation22], 4
      %s98 = int_to_ptr.vmem [resolvable:$true] %s97
      %103 = dma.hbm_to_vmem [thread:$0]  %s96, 8192, %s98, [#allocation21], 256, 256, 16
    $region33: #{tpu_custom_call.1} parent=1 // pred_fallthru
      _
    // Predicated region
    $region34: #{tpu_custom_call.1} parent=1 // pred_check
      _
    $region35: #{tpu_custom_call.1} parent=1 // pred_check_branch
      %105 = sbr.rel (0) target = $region37
    $region36: #{tpu_custom_call.1} parent=1 // pred_region
      %107 = vsyncadd [#allocation24], 0
      %s108 = sshll.u32 %s8, 4
      %s109 = int_to_ptr.hbm [resolvable:$true] %s108
      %s110 = sshll.u32 [#allocation23], 4
      %s111 = int_to_ptr.vmem [resolvable:$true] %s110
      %116 = dma.hbm_to_vmem [thread:$0]  %s109, 8192, %s111, [#allocation24], 256, 256, 16
    $region37: #{tpu_custom_call.1} parent=1 // pred_fallthru
      _
    // Predicated region
    $region38: #{tpu_custom_call.1} parent=1 // pred_check
      _
    $region39: #{tpu_custom_call.1} parent=1 // pred_check_branch
      %118 = sbr.rel (0) target = $region41
    $region40: #{tpu_custom_call.1} parent=1 // pred_region
      %120 = dma.done [#allocation12], 128
    $region41: #{tpu_custom_call.1} parent=1 // pred_fallthru
      _
    // Predicated region
    $region42: #{tpu_custom_call.1} parent=1 // pred_check
      _
    $region43: #{tpu_custom_call.1} parent=1 // pred_check_branch
      %122 = sbr.rel (0) target = $region45
    $region44: #{tpu_custom_call.1} parent=1 // pred_region
      %124 = dma.done [#allocation15], 256
    $region45: #{tpu_custom_call.1} parent=1 // pred_fallthru
      _
    // Predicated region
    $region46: #{tpu_custom_call.1} parent=1 // pred_check
      _
    $region47: #{tpu_custom_call.1} parent=1 // pred_check_branch
      %126 = sbr.rel (0) target = $region49
    $region48: #{tpu_custom_call.1} parent=1 // pred_region
      %128 = dma.done [#allocation15], 256
    $region49: #{tpu_custom_call.1} parent=1 // pred_fallthru
      _
    // Predicated region
    $region50: #{tpu_custom_call.1} parent=1 // pred_check
      _
    $region51: #{tpu_custom_call.1} parent=1 // pred_check_branch
      %130 = sbr.rel (0) target = $region53
    $region52: #{tpu_custom_call.1} parent=1 // pred_region
      %132 = dma.done [#allocation18], 256
    $region53: #{tpu_custom_call.1} parent=1 // pred_fallthru
      _
    // Predicated region
    $region54: #{tpu_custom_call.1} parent=1 // pred_check
      _
    $region55: #{tpu_custom_call.1} parent=1 // pred_check_branch
      %134 = sbr.rel (0) target = $region57
    $region56: #{tpu_custom_call.1} parent=1 // pred_region
      %136 = dma.done [#allocation18], 256
    $region57: #{tpu_custom_call.1} parent=1 // pred_fallthru
      _
    // Predicated region
    $region58: #{tpu_custom_call.1} parent=1 // pred_check
      _
    $region59: #{tpu_custom_call.1} parent=1 // pred_check_branch
      %138 = sbr.rel (0) target = $region61
    $region60: #{tpu_custom_call.1} parent=1 // pred_region
      %140 = dma.done [#allocation21], 8192
    $region61: #{tpu_custom_call.1} parent=1 // pred_fallthru
      _
    // Predicated region
    $region62: #{tpu_custom_call.1} parent=1 // pred_check
      _
    $region63: #{tpu_custom_call.1} parent=1 // pred_check_branch
      %142 = sbr.rel (0) target = $region65
    $region64: #{tpu_custom_call.1} parent=1 // pred_region
      %144 = dma.done [#allocation21], 8192
    $region65: #{tpu_custom_call.1} parent=1 // pred_fallthru
      _
    // Predicated region
    $region66: #{tpu_custom_call.1} parent=1 // pred_check
      _
    $region67: #{tpu_custom_call.1} parent=1 // pred_check_branch
      %146 = sbr.rel (0) target = $region69
    $region68: #{tpu_custom_call.1} parent=1 // pred_region
      %148 = dma.done [#allocation24], 8192
    $region69: #{tpu_custom_call.1} parent=1 // pred_fallthru
      _
    %s149 = sld [smem:[#allocation10]]
    %v150 = vld [vmem:[#allocation11] sm:$0xff]
    %v151 = vld [vmem:[#allocation14] ss:$8 sm:$0x3]
    %153 = vset.pattern.permute.xlu0 0
    %154 = vperm.xlu0 %153, %v150
    %v155 = vpop.permute.xlu0 %154
    %v158 = vperm.slane %v151, 0
    %v159 = vperm.slane %v151, 1
    %v162 = vmul.f32 %v155, %v158
    %v163 = vmul.f32 %v155, %v159
    %s164 = scalar_lea.vmem [#allocation14], 1
    %v165 = vld [vmem:[%s164] ss:$8 sm:$0x3]
    %166 = vset.pattern.permute.xlu0 1
    %167 = vperm.xlu0 %166, %v150
    %v168 = vpop.permute.xlu0 %167
    %v171 = vperm.slane %v165, 0
    %v172 = vperm.slane %v165, 1
    %v175 = vmul.f32 %v168, %v171
    %v176 = vmul.f32 %v168, %v172
    %v177 = vadd.f32 %v162, %v175
    %v178 = vadd.f32 %v163, %v176
    %s179 = scalar_lea.vmem [#allocation14], 2
    %v180 = vld [vmem:[%s179] ss:$8 sm:$0x3]
    %181 = vset.pattern.permute.xlu0 2
    %182 = vperm.xlu0 %181, %v150
    %v183 = vpop.permute.xlu0 %182
    %v186 = vperm.slane %v180, 0
    %v187 = vperm.slane %v180, 1
    %v190 = vmul.f32 %v183, %v186
    %v191 = vmul.f32 %v183, %v187
    %v192 = vadd.f32 %v177, %v190
    %v193 = vadd.f32 %v178, %v191
    %v194 = vld [vmem:[#allocation16] ss:$8 sm:$0x3]
    %v196 = vperm.slane %v194, 0
    %v197 = vperm.slane %v194, 1
    %v200 = vmul.f32 %v155, %v196
    %v201 = vmul.f32 %v155, %v197
    %s202 = scalar_lea.vmem [#allocation16], 1
    %v203 = vld [vmem:[%s202] ss:$8 sm:$0x3]
    %v205 = vperm.slane %v203, 0
    %v206 = vperm.slane %v203, 1
    %v209 = vmul.f32 %v168, %v205
    %v210 = vmul.f32 %v168, %v206
    %v211 = vadd.f32 %v200, %v209
    %v212 = vadd.f32 %v201, %v210
    %s213 = scalar_lea.vmem [#allocation16], 2
    %v214 = vld [vmem:[%s213] ss:$8 sm:$0x3]
    %v216 = vperm.slane %v214, 0
    %v217 = vperm.slane %v214, 1
    %v220 = vmul.f32 %v183, %v216
    %v221 = vmul.f32 %v183, %v217
    %v222 = vadd.f32 %v211, %v220
    %v223 = vadd.f32 %v212, %v221
    %v224 = vmul.f32 %v222, 1.442695
    %v225 = vpow.pop %v224
    %v226 = vmul.f32 %v223, 1.442695
    %v227 = vpow.pop %v226
    %v228 = vand.u32 2147483647, %v192
    %vm229 = vcmp.le.f32.partialorder %v228, 0.7853982
    %vm230 = vcmp.lt.s32.totalorder %v192, 0
    %v231 = vand.u32 %v192, 2139095040
    %v232 = vshrl.u32 %v231, 23
    %v233 = vsub.s32 %v232, 127
    %v234 = vand.u32 2147483647, %v192
    %v235 = vand.u32 %v234, 8388607
    %v236 = vor.u32 %v235, 8388608
    %v237 = vsub.s32 0, %v236
    %v238 = vadd.s32 %v233, 1
    %vm239 = vcmp.gt.s32.totalorder %v238, 0
    %v240 = vsel %vm239, %v238, 0
    %v241 = vshrl.u32 %v240, 5
    %v242 = vand.u32 %v240, 31
    %v243 = vsub.s32 32, %v242
    %v244 = vshrl.u32 683565275, %v243
    %v245 = vshll.u32 683565275, %v242
    %v246 = vshrl.u32 2475754826, %v243
    %v247 = vor.u32 %v245, %v246
    %v248 = vshll.u32 2475754826, %v242
    %v249 = vshrl.u32 2131351028, %v243
    %v250 = vor.u32 %v248, %v249
    %v251 = vshll.u32 2131351028, %v242
    %v252 = vshrl.u32 2102212464, %v243
    %v253 = vor.u32 %v251, %v252
    %v254 = vshll.u32 2102212464, %v242
    %v255 = vshrl.u32 920167782, %v243
    %v256 = vor.u32 %v254, %v255
    %v257 = vshll.u32 920167782, %v242
    %v258 = vshrl.u32 1326507024, %v243
    %v259 = vor.u32 %v257, %v258
    %vm260 = vcmp.lt.s32.totalorder %v241, 1
    %vm261 = vcmp.lt.s32.totalorder %v241, 2
    %vm262 = vcmp.lt.s32.totalorder %v241, 3
    %vm263 = vcmp.lt.s32.totalorder %v241, 4
    %v264 = vsel %vm260, %v244, %v247
    %v265 = vsel %vm263, %v253, 2102212464
    %v266 = vsel %vm262, %v250, %v265
    %v267 = vsel %vm261, %v264, %v266
    %v268 = vsel %vm260, %v247, %v250
    %v269 = vsel %vm263, %v256, 920167782
    %v270 = vsel %vm262, %v253, %v269
    %v271 = vsel %vm261, %v268, %v270
    %v272 = vsel %vm260, %v250, %v253
    %v273 = vsel %vm263, %v259, 1326507024
    %v274 = vsel %vm262, %v256, %v273
    %v275 = vsel %vm261, %v272, %v274
    %v276 = vshll.u32 %v236, 8
    %v277 = vand.u32 %v276, 65535
    %v278 = vshrl.u32 %v276, 16
    %v279 = vand.u32 %v275, 65535
    %v280 = vshrl.u32 %v275, 16
    %v281 = vmul.u32 %v277, %v279
    %v282 = vmul.u32 %v277, %v280
    %v283 = vmul.u32 %v278, %v279
    %v284 = vmul.u32 %v278, %v280
    %v285 = vshll.u32 %v282, 16
    %v286 = vshrl.u32 %v282, 16
    %v287 = vshll.u32 %v283, 16
    %v288 = vshrl.u32 %v283, 16
    %vm289 = vc.u32 %v281, %v285
    %v290 = vsel %vm289, 1, 0
    %v291 = vadd.s32 %v281, %v285
    %v292 = vadd.s32 %v284, %v290
    %vm293 = vc.u32 %v291, %v287
    %v294 = vsel %vm293, 1, 0
    %v295 = vadd.s32 %v291, %v287
    %v296 = vadd.s32 %v292, %v294
    %v297 = vadd.s32 %v296, %v286
    %v298 = vadd.s32 %v297, %v288
    %v299 = vand.u32 %v276, 65535
    %v300 = vshrl.u32 %v276, 16
    %v301 = vand.u32 %v271, 65535
    %v302 = vshrl.u32 %v271, 16
    %v303 = vmul.u32 %v299, %v301
    %v304 = vmul.u32 %v299, %v302
    %v305 = vmul.u32 %v300, %v301
    %v306 = vmul.u32 %v300, %v302
    %v307 = vshll.u32 %v304, 16
    %v308 = vshrl.u32 %v304, 16
    %v309 = vshll.u32 %v305, 16
    %v310 = vshrl.u32 %v305, 16
    %vm311 = vc.u32 %v303, %v307
    %v312 = vsel %vm311, 1, 0
    %v313 = vadd.s32 %v303, %v307
    %v314 = vadd.s32 %v306, %v312
    %vm315 = vc.u32 %v313, %v309
    %v316 = vsel %vm315, 1, 0
    %v317 = vadd.s32 %v313, %v309
    %v318 = vadd.s32 %v314, %v316
    %v319 = vadd.s32 %v318, %v308
    %v320 = vadd.s32 %v319, %v310
    %v321 = vmul.u32 %v276, %v267
    %v322 = vadd.s32 %v298, %v317
    %vm323 = vc.u32 %v298, %v317
    %v324 = vadd.s32 %v320, 1
    %v325 = vsel %vm323, %v324, %v320
    %v326 = vadd.s32 %v321, %v325
    %v327 = vadd.s32 %v326, 536870912
    %v328 = vshrl.u32 %v327, 30
    %v329 = vshll.u32 %v328, 30
    %v330 = vsub.s32 %v326, %v329
    %vm331 = vcmp.lt.s32.totalorder %v330, 0
    %v332 = vsub.s32 0, %v330
    %v333 = vsel %vm331, %v332, %v330
    %v334 = vclz %v333
    %v335 = vsub.s32 %v334, 2
    %vm336 = vcmp.gt.s32.totalorder 0, %v335
    %v337 = vsel %vm336, 0, %v335
    %v338 = vsub.s32 32, %v337
    %v339 = vshll.u32 %v330, %v337
    %v340 = vshrl.u32 %v322, %v338
    %v341 = vor.u32 %v339, %v340
    %v342 = vsub.s32 4294967266, %v337
    %v343 = vadd.s32 %v342, 127
    %v344 = vshll.u32 %v343, 23
    %v345 = vor.u32 4788187, %v344
    %v346 = vand.u32 2147483647, %v345
    %v348 = vcvt.s32.f32 %v341
    %v349 = vmul.f32 %v348, %v346
    %v350 = vxor.u32 %v349, 2147483648
    %v351 = vsel %vm230, %v350, %v349
    %v352 = vsub.s32 4, %v328
    %v353 = vsel %vm230, %v352, %v328
    %v354 = vsel %vm229, %v192, %v351
    %v355 = vsel %vm229, 0, %v353
    %v356 = vmul.f32 %v354, %v354
    %v357 = vmul.f32 %v356, -0.001358992
    %v358 = vadd.f32 %v357, 0.041655596
    %v359 = vmul.f32 %v356, %v358
    %v360 = vadd.f32 %v359, -0.4999988
    %v361 = vmul.f32 %v356, %v360
    %v362 = vadd.f32 1.0, %v361
    %v363 = vmul.f32 %v354, %v354
    %v364 = vmul.f32 %v363, -0.00019511016
    %v365 = vadd.f32 %v364, 0.008332121
    %v366 = vmul.f32 %v363, %v365
    %v367 = vadd.f32 %v366, -0.16666654
    %v368 = vmul.f32 %v363, %v367
    %v369 = vadd.f32 %v368, 1.0
    %v370 = vmul.f32 %v369, %v354
    %vm371 = vweird.f32 %v192
    %v372 = vand.u32 %v355, 3
    %vm373 = vcmp.lt.s32.totalorder %v372, 2
    %vm374 = vcmp.eq.s32.totalorder %v372, 0
    %v375 = vxor.u32 %v370, 2147483648
    %v376 = vsel %vm374, %v362, %v375
    %vm377 = vcmp.eq.s32.totalorder %v372, 2
    %v378 = vxor.u32 %v362, 2147483648
    %v379 = vsel %vm377, %v378, %v370
    %v380 = vsel %vm373, %v376, %v379
    %v381 = vsel %vm371, nan, %v380
    %v382 = vand.u32 2147483647, %v193
    %vm383 = vcmp.le.f32.partialorder %v382, 0.7853982
    %vm384 = vcmp.lt.s32.totalorder %v193, 0
    %v385 = vand.u32 %v193, 2139095040
    %v386 = vshrl.u32 %v385, 23
    %v387 = vsub.s32 %v386, 127
    %v388 = vand.u32 2147483647, %v193
    %v389 = vand.u32 %v388, 8388607
    %v390 = vor.u32 %v389, 8388608
    %v391 = vsub.s32 0, %v390
    %v392 = vadd.s32 %v387, 1
    %vm393 = vcmp.gt.s32.totalorder %v392, 0
    %v394 = vsel %vm393, %v392, 0
    %v395 = vshrl.u32 %v394, 5
    %v396 = vand.u32 %v394, 31
    %v397 = vsub.s32 32, %v396
    %v398 = vshrl.u32 683565275, %v397
    %v399 = vshll.u32 683565275, %v396
    %v400 = vshrl.u32 2475754826, %v397
    %v401 = vor.u32 %v399, %v400
    %v402 = vshll.u32 2475754826, %v396
    %v403 = vshrl.u32 2131351028, %v397
    %v404 = vor.u32 %v402, %v403
    %v405 = vshll.u32 2131351028, %v396
    %v406 = vshrl.u32 2102212464, %v397
    %v407 = vor.u32 %v405, %v406
    %v408 = vshll.u32 2102212464, %v396
    %v409 = vshrl.u32 920167782, %v397
    %v410 = vor.u32 %v408, %v409
    %v411 = vshll.u32 920167782, %v396
    %v412 = vshrl.u32 1326507024, %v397
    %v413 = vor.u32 %v411, %v412
    %vm414 = vcmp.lt.s32.totalorder %v395, 1
    %vm415 = vcmp.lt.s32.totalorder %v395, 2
    %vm416 = vcmp.lt.s32.totalorder %v395, 3
    %vm417 = vcmp.lt.s32.totalorder %v395, 4
    %v418 = vsel %vm414, %v398, %v401
    %v419 = vsel %vm417, %v407, 2102212464
    %v420 = vsel %vm416, %v404, %v419
    %v421 = vsel %vm415, %v418, %v420
    %v422 = vsel %vm414, %v401, %v404
    %v423 = vsel %vm417, %v410, 920167782
    %v424 = vsel %vm416, %v407, %v423
    %v425 = vsel %vm415, %v422, %v424
    %v426 = vsel %vm414, %v404, %v407
    %v427 = vsel %vm417, %v413, 1326507024
    %v428 = vsel %vm416, %v410, %v427
    %v429 = vsel %vm415, %v426, %v428
    %v430 = vshll.u32 %v390, 8
    %v431 = vand.u32 %v430, 65535
    %v432 = vshrl.u32 %v430, 16
    %v433 = vand.u32 %v429, 65535
    %v434 = vshrl.u32 %v429, 16
    %v435 = vmul.u32 %v431, %v433
    %v436 = vmul.u32 %v431, %v434
    %v437 = vmul.u32 %v432, %v433
    %v438 = vmul.u32 %v432, %v434
    %v439 = vshll.u32 %v436, 16
    %v440 = vshrl.u32 %v436, 16
    %v441 = vshll.u32 %v437, 16
    %v442 = vshrl.u32 %v437, 16
    %vm443 = vc.u32 %v435, %v439
    %v444 = vsel %vm443, 1, 0
    %v445 = vadd.s32 %v435, %v439
    %v446 = vadd.s32 %v438, %v444
    %vm447 = vc.u32 %v445, %v441
    %v448 = vsel %vm447, 1, 0
    %v449 = vadd.s32 %v445, %v441
    %v450 = vadd.s32 %v446, %v448
    %v451 = vadd.s32 %v450, %v440
    %v452 = vadd.s32 %v451, %v442
    %v453 = vand.u32 %v430, 65535
    %v454 = vshrl.u32 %v430, 16
    %v455 = vand.u32 %v425, 65535
    %v456 = vshrl.u32 %v425, 16
    %v457 = vmul.u32 %v453, %v455
    %v458 = vmul.u32 %v453, %v456
    %v459 = vmul.u32 %v454, %v455
    %v460 = vmul.u32 %v454, %v456
    %v461 = vshll.u32 %v458, 16
    %v462 = vshrl.u32 %v458, 16
    %v463 = vshll.u32 %v459, 16
    %v464 = vshrl.u32 %v459, 16
    %vm465 = vc.u32 %v457, %v461
    %v466 = vsel %vm465, 1, 0
    %v467 = vadd.s32 %v457, %v461
    %v468 = vadd.s32 %v460, %v466
    %vm469 = vc.u32 %v467, %v463
    %v470 = vsel %vm469, 1, 0
    %v471 = vadd.s32 %v467, %v463
    %v472 = vadd.s32 %v468, %v470
    %v473 = vadd.s32 %v472, %v462
    %v474 = vadd.s32 %v473, %v464
    %v475 = vmul.u32 %v430, %v421
    %v476 = vadd.s32 %v452, %v471
    %vm477 = vc.u32 %v452, %v471
    %v478 = vadd.s32 %v474, 1
    %v479 = vsel %vm477, %v478, %v474
    %v480 = vadd.s32 %v475, %v479
    %v481 = vadd.s32 %v480, 536870912
    %v482 = vshrl.u32 %v481, 30
    %v483 = vshll.u32 %v482, 30
    %v484 = vsub.s32 %v480, %v483
    %vm485 = vcmp.lt.s32.totalorder %v484, 0
    %v486 = vsub.s32 0, %v484
    %v487 = vsel %vm485, %v486, %v484
    %v488 = vclz %v487
    %v489 = vsub.s32 %v488, 2
    %vm490 = vcmp.gt.s32.totalorder 0, %v489
    %v491 = vsel %vm490, 0, %v489
    %v492 = vsub.s32 32, %v491
    %v493 = vshll.u32 %v484, %v491
    %v494 = vshrl.u32 %v476, %v492
    %v495 = vor.u32 %v493, %v494
    %v496 = vsub.s32 4294967266, %v491
    %v497 = vadd.s32 %v496, 127
    %v498 = vshll.u32 %v497, 23
    %v499 = vor.u32 4788187, %v498
    %v500 = vand.u32 2147483647, %v499
    %v502 = vcvt.s32.f32 %v495
    %v503 = vmul.f32 %v502, %v500
    %v504 = vxor.u32 %v503, 2147483648
    %v505 = vsel %vm384, %v504, %v503
    %v506 = vsub.s32 4, %v482
    %v507 = vsel %vm384, %v506, %v482
    %v508 = vsel %vm383, %v193, %v505
    %v509 = vsel %vm383, 0, %v507
    %v510 = vmul.f32 %v508, %v508
    %v511 = vmul.f32 %v510, -0.001358992
    %v512 = vadd.f32 %v511, 0.041655596
    %v513 = vmul.f32 %v510, %v512
    %v514 = vadd.f32 %v513, -0.4999988
    %v515 = vmul.f32 %v510, %v514
    %v516 = vadd.f32 1.0, %v515
    %v517 = vmul.f32 %v508, %v508
    %v518 = vmul.f32 %v517, -0.00019511016
    %v519 = vadd.f32 %v518, 0.008332121
    %v520 = vmul.f32 %v517, %v519
    %v521 = vadd.f32 %v520, -0.16666654
    %v522 = vmul.f32 %v517, %v521
    %v523 = vadd.f32 %v522, 1.0
    %v524 = vmul.f32 %v523, %v508
    %vm525 = vweird.f32 %v193
    %v526 = vand.u32 %v509, 3
    %vm527 = vcmp.lt.s32.totalorder %v526, 2
    %vm528 = vcmp.eq.s32.totalorder %v526, 0
    %v529 = vxor.u32 %v524, 2147483648
    %v530 = vsel %vm528, %v516, %v529
    %vm531 = vcmp.eq.s32.totalorder %v526, 2
    %v532 = vxor.u32 %v516, 2147483648
    %v533 = vsel %vm531, %v532, %v524
    %v534 = vsel %vm527, %v530, %v533
    %v535 = vsel %vm525, nan, %v534
    %v536 = vmul.f32 %v225, %v381
    %v537 = vmul.f32 %v227, %v535
    %v538 = vand.u32 2147483647, %v192
    %vm539 = vcmp.le.f32.partialorder %v538, 0.7853982
    %vm540 = vcmp.lt.s32.totalorder %v192, 0
    %v541 = vand.u32 %v192, 2139095040
    %v542 = vshrl.u32 %v541, 23
    %v543 = vsub.s32 %v542, 127
    %v544 = vand.u32 2147483647, %v192
    %v545 = vand.u32 %v544, 8388607
    %v546 = vor.u32 %v545, 8388608
    %v547 = vsub.s32 0, %v546
    %v548 = vadd.s32 %v543, 1
    %vm549 = vcmp.gt.s32.totalorder %v548, 0
    %v550 = vsel %vm549, %v548, 0
    %v551 = vshrl.u32 %v550, 5
    %v552 = vand.u32 %v550, 31
    %v553 = vsub.s32 32, %v552
    %v554 = vshrl.u32 683565275, %v553
    %v555 = vshll.u32 683565275, %v552
    %v556 = vshrl.u32 2475754826, %v553
    %v557 = vor.u32 %v555, %v556
    %v558 = vshll.u32 2475754826, %v552
    %v559 = vshrl.u32 2131351028, %v553
    %v560 = vor.u32 %v558, %v559
    %v561 = vshll.u32 2131351028, %v552
    %v562 = vshrl.u32 2102212464, %v553
    %v563 = vor.u32 %v561, %v562
    %v564 = vshll.u32 2102212464, %v552
    %v565 = vshrl.u32 920167782, %v553
    %v566 = vor.u32 %v564, %v565
    %v567 = vshll.u32 920167782, %v552
    %v568 = vshrl.u32 1326507024, %v553
    %v569 = vor.u32 %v567, %v568
    %vm570 = vcmp.lt.s32.totalorder %v551, 1
    %vm571 = vcmp.lt.s32.totalorder %v551, 2
    %vm572 = vcmp.lt.s32.totalorder %v551, 3
    %vm573 = vcmp.lt.s32.totalorder %v551, 4
    %v574 = vsel %vm570, %v554, %v557
    %v575 = vsel %vm573, %v563, 2102212464
    %v576 = vsel %vm572, %v560, %v575
    %v577 = vsel %vm571, %v574, %v576
    %v578 = vsel %vm570, %v557, %v560
    %v579 = vsel %vm573, %v566, 920167782
    %v580 = vsel %vm572, %v563, %v579
    %v581 = vsel %vm571, %v578, %v580
    %v582 = vsel %vm570, %v560, %v563
    %v583 = vsel %vm573, %v569, 1326507024
    %v584 = vsel %vm572, %v566, %v583
    %v585 = vsel %vm571, %v582, %v584
    %v586 = vshll.u32 %v546, 8
    %v587 = vand.u32 %v586, 65535
    %v588 = vshrl.u32 %v586, 16
    %v589 = vand.u32 %v585, 65535
    %v590 = vshrl.u32 %v585, 16
    %v591 = vmul.u32 %v587, %v589
    %v592 = vmul.u32 %v587, %v590
    %v593 = vmul.u32 %v588, %v589
    %v594 = vmul.u32 %v588, %v590
    %v595 = vshll.u32 %v592, 16
    %v596 = vshrl.u32 %v592, 16
    %v597 = vshll.u32 %v593, 16
    %v598 = vshrl.u32 %v593, 16
    %vm599 = vc.u32 %v591, %v595
    %v600 = vsel %vm599, 1, 0
    %v601 = vadd.s32 %v591, %v595
    %v602 = vadd.s32 %v594, %v600
    %vm603 = vc.u32 %v601, %v597
    %v604 = vsel %vm603, 1, 0
    %v605 = vadd.s32 %v601, %v597
    %v606 = vadd.s32 %v602, %v604
    %v607 = vadd.s32 %v606, %v596
    %v608 = vadd.s32 %v607, %v598
    %v609 = vand.u32 %v586, 65535
    %v610 = vshrl.u32 %v586, 16
    %v611 = vand.u32 %v581, 65535
    %v612 = vshrl.u32 %v581, 16
    %v613 = vmul.u32 %v609, %v611
    %v614 = vmul.u32 %v609, %v612
    %v615 = vmul.u32 %v610, %v611
    %v616 = vmul.u32 %v610, %v612
    %v617 = vshll.u32 %v614, 16
    %v618 = vshrl.u32 %v614, 16
    %v619 = vshll.u32 %v615, 16
    %v620 = vshrl.u32 %v615, 16
    %vm621 = vc.u32 %v613, %v617
    %v622 = vsel %vm621, 1, 0
    %v623 = vadd.s32 %v613, %v617
    %v624 = vadd.s32 %v616, %v622
    %vm625 = vc.u32 %v623, %v619
    %v626 = vsel %vm625, 1, 0
    %v627 = vadd.s32 %v623, %v619
    %v628 = vadd.s32 %v624, %v626
    %v629 = vadd.s32 %v628, %v618
    %v630 = vadd.s32 %v629, %v620
    %v631 = vmul.u32 %v586, %v577
    %v632 = vadd.s32 %v608, %v627
    %vm633 = vc.u32 %v608, %v627
    %v634 = vadd.s32 %v630, 1
    %v635 = vsel %vm633, %v634, %v630
    %v636 = vadd.s32 %v631, %v635
    %v637 = vadd.s32 %v636, 536870912
    %v638 = vshrl.u32 %v637, 30
    %v639 = vshll.u32 %v638, 30
    %v640 = vsub.s32 %v636, %v639
    %vm641 = vcmp.lt.s32.totalorder %v640, 0
    %v642 = vsub.s32 0, %v640
    %v643 = vsel %vm641, %v642, %v640
    %v644 = vclz %v643
    %v645 = vsub.s32 %v644, 2
    %vm646 = vcmp.gt.s32.totalorder 0, %v645
    %v647 = vsel %vm646, 0, %v645
    %v648 = vsub.s32 32, %v647
    %v649 = vshll.u32 %v640, %v647
    %v650 = vshrl.u32 %v632, %v648
    %v651 = vor.u32 %v649, %v650
    %v652 = vsub.s32 4294967266, %v647
    %v653 = vadd.s32 %v652, 127
    %v654 = vshll.u32 %v653, 23
    %v655 = vor.u32 4788187, %v654
    %v656 = vand.u32 2147483647, %v655
    %v658 = vcvt.s32.f32 %v651
    %v659 = vmul.f32 %v658, %v656
    %v660 = vxor.u32 %v659, 2147483648
    %v661 = vsel %vm540, %v660, %v659
    %v662 = vsub.s32 4, %v638
    %v663 = vsel %vm540, %v662, %v638
    %v664 = vsel %vm539, %v192, %v661
    %v665 = vsel %vm539, 0, %v663
    %v666 = vmul.f32 %v664, %v664
    %v667 = vmul.f32 %v666, -0.001358992
    %v668 = vadd.f32 %v667, 0.041655596
    %v669 = vmul.f32 %v666, %v668
    %v670 = vadd.f32 %v669, -0.4999988
    %v671 = vmul.f32 %v666, %v670
    %v672 = vadd.f32 1.0, %v671
    %v673 = vmul.f32 %v664, %v664
    %v674 = vmul.f32 %v673, -0.00019511016
    %v675 = vadd.f32 %v674, 0.008332121
    %v676 = vmul.f32 %v673, %v675
    %v677 = vadd.f32 %v676, -0.16666654
    %v678 = vmul.f32 %v673, %v677
    %v679 = vadd.f32 %v678, 1.0
    %v680 = vmul.f32 %v679, %v664
    %vm681 = vweird.f32 %v192
    %v682 = vadd.s32 %v665, 3
    %v683 = vand.u32 %v682, 3
    %vm684 = vcmp.lt.s32.totalorder %v683, 2
    %vm685 = vcmp.eq.s32.totalorder %v683, 0
    %v686 = vxor.u32 %v680, 2147483648
    %v687 = vsel %vm685, %v672, %v686
    %vm688 = vcmp.eq.s32.totalorder %v683, 2
    %v689 = vxor.u32 %v672, 2147483648
    %v690 = vsel %vm688, %v689, %v680
    %v691 = vsel %vm684, %v687, %v690
    %v692 = vsel %vm681, nan, %v691
    %v693 = vand.u32 2147483647, %v193
    %vm694 = vcmp.le.f32.partialorder %v693, 0.7853982
    %vm695 = vcmp.lt.s32.totalorder %v193, 0
    %v696 = vand.u32 %v193, 2139095040
    %v697 = vshrl.u32 %v696, 23
    %v698 = vsub.s32 %v697, 127
    %v699 = vand.u32 2147483647, %v193
    %v700 = vand.u32 %v699, 8388607
    %v701 = vor.u32 %v700, 8388608
    %v702 = vsub.s32 0, %v701
    %v703 = vadd.s32 %v698, 1
    %vm704 = vcmp.gt.s32.totalorder %v703, 0
    %v705 = vsel %vm704, %v703, 0
    %v706 = vshrl.u32 %v705, 5
    %v707 = vand.u32 %v705, 31
    %v708 = vsub.s32 32, %v707
    %v709 = vshrl.u32 683565275, %v708
    %v710 = vshll.u32 683565275, %v707
    %v711 = vshrl.u32 2475754826, %v708
    %v712 = vor.u32 %v710, %v711
    %v713 = vshll.u32 2475754826, %v707
    %v714 = vshrl.u32 2131351028, %v708
    %v715 = vor.u32 %v713, %v714
    %v716 = vshll.u32 2131351028, %v707
    %v717 = vshrl.u32 2102212464, %v708
    %v718 = vor.u32 %v716, %v717
    %v719 = vshll.u32 2102212464, %v707
    %v720 = vshrl.u32 920167782, %v708
    %v721 = vor.u32 %v719, %v720
    %v722 = vshll.u32 920167782, %v707
    %v723 = vshrl.u32 1326507024, %v708
    %v724 = vor.u32 %v722, %v723
    %vm725 = vcmp.lt.s32.totalorder %v706, 1
    %vm726 = vcmp.lt.s32.totalorder %v706, 2
    %vm727 = vcmp.lt.s32.totalorder %v706, 3
    %vm728 = vcmp.lt.s32.totalorder %v706, 4
    %v729 = vsel %vm725, %v709, %v712
    %v730 = vsel %vm728, %v718, 2102212464
    %v731 = vsel %vm727, %v715, %v730
    %v732 = vsel %vm726, %v729, %v731
    %v733 = vsel %vm725, %v712, %v715
    %v734 = vsel %vm728, %v721, 920167782
    %v735 = vsel %vm727, %v718, %v734
    %v736 = vsel %vm726, %v733, %v735
    %v737 = vsel %vm725, %v715, %v718
    %v738 = vsel %vm728, %v724, 1326507024
    %v739 = vsel %vm727, %v721, %v738
    %v740 = vsel %vm726, %v737, %v739
    %v741 = vshll.u32 %v701, 8
    %v742 = vand.u32 %v741, 65535
    %v743 = vshrl.u32 %v741, 16
    %v744 = vand.u32 %v740, 65535
    %v745 = vshrl.u32 %v740, 16
    %v746 = vmul.u32 %v742, %v744
    %v747 = vmul.u32 %v742, %v745
    %v748 = vmul.u32 %v743, %v744
    %v749 = vmul.u32 %v743, %v745
    %v750 = vshll.u32 %v747, 16
    %v751 = vshrl.u32 %v747, 16
    %v752 = vshll.u32 %v748, 16
    %v753 = vshrl.u32 %v748, 16
    %vm754 = vc.u32 %v746, %v750
    %v755 = vsel %vm754, 1, 0
    %v756 = vadd.s32 %v746, %v750
    %v757 = vadd.s32 %v749, %v755
    %vm758 = vc.u32 %v756, %v752
    %v759 = vsel %vm758, 1, 0
    %v760 = vadd.s32 %v756, %v752
    %v761 = vadd.s32 %v757, %v759
    %v762 = vadd.s32 %v761, %v751
    %v763 = vadd.s32 %v762, %v753
    %v764 = vand.u32 %v741, 65535
    %v765 = vshrl.u32 %v741, 16
    %v766 = vand.u32 %v736, 65535
    %v767 = vshrl.u32 %v736, 16
    %v768 = vmul.u32 %v764, %v766
    %v769 = vmul.u32 %v764, %v767
    %v770 = vmul.u32 %v765, %v766
    %v771 = vmul.u32 %v765, %v767
    %v772 = vshll.u32 %v769, 16
    %v773 = vshrl.u32 %v769, 16
    %v774 = vshll.u32 %v770, 16
    %v775 = vshrl.u32 %v770, 16
    %vm776 = vc.u32 %v768, %v772
    %v777 = vsel %vm776, 1, 0
    %v778 = vadd.s32 %v768, %v772
    %v779 = vadd.s32 %v771, %v777
    %vm780 = vc.u32 %v778, %v774
    %v781 = vsel %vm780, 1, 0
    %v782 = vadd.s32 %v778, %v774
    %v783 = vadd.s32 %v779, %v781
    %v784 = vadd.s32 %v783, %v773
    %v785 = vadd.s32 %v784, %v775
    %v786 = vmul.u32 %v741, %v732
    %v787 = vadd.s32 %v763, %v782
    %vm788 = vc.u32 %v763, %v782
    %v789 = vadd.s32 %v785, 1
    %v790 = vsel %vm788, %v789, %v785
    %v791 = vadd.s32 %v786, %v790
    %v792 = vadd.s32 %v791, 536870912
    %v793 = vshrl.u32 %v792, 30
    %v794 = vshll.u32 %v793, 30
    %v795 = vsub.s32 %v791, %v794
    %vm796 = vcmp.lt.s32.totalorder %v795, 0
    %v797 = vsub.s32 0, %v795
    %v798 = vsel %vm796, %v797, %v795
    %v799 = vclz %v798
    %v800 = vsub.s32 %v799, 2
    %vm801 = vcmp.gt.s32.totalorder 0, %v800
    %v802 = vsel %vm801, 0, %v800
    %v803 = vsub.s32 32, %v802
    %v804 = vshll.u32 %v795, %v802
    %v805 = vshrl.u32 %v787, %v803
    %v806 = vor.u32 %v804, %v805
    %v807 = vsub.s32 4294967266, %v802
    %v808 = vadd.s32 %v807, 127
    %v809 = vshll.u32 %v808, 23
    %v810 = vor.u32 4788187, %v809
    %v811 = vand.u32 2147483647, %v810
    %v813 = vcvt.s32.f32 %v806
    %v814 = vmul.f32 %v813, %v811
    %v815 = vxor.u32 %v814, 2147483648
    %v816 = vsel %vm695, %v815, %v814
    %v817 = vsub.s32 4, %v793
    %v818 = vsel %vm695, %v817, %v793
    %v819 = vsel %vm694, %v193, %v816
    %v820 = vsel %vm694, 0, %v818
    %v821 = vmul.f32 %v819, %v819
    %v822 = vmul.f32 %v821, -0.001358992
    %v823 = vadd.f32 %v822, 0.041655596
    %v824 = vmul.f32 %v821, %v823
    %v825 = vadd.f32 %v824, -0.4999988
    %v826 = vmul.f32 %v821, %v825
    %v827 = vadd.f32 1.0, %v826
    %v828 = vmul.f32 %v819, %v819
    %v829 = vmul.f32 %v828, -0.00019511016
    %v830 = vadd.f32 %v829, 0.008332121
    %v831 = vmul.f32 %v828, %v830
    %v832 = vadd.f32 %v831, -0.16666654
    %v833 = vmul.f32 %v828, %v832
    %v834 = vadd.f32 %v833, 1.0
    %v835 = vmul.f32 %v834, %v819
    %vm836 = vweird.f32 %v193
    %v837 = vadd.s32 %v820, 3
    %v838 = vand.u32 %v837, 3
    %vm839 = vcmp.lt.s32.totalorder %v838, 2
    %vm840 = vcmp.eq.s32.totalorder %v838, 0
    %v841 = vxor.u32 %v835, 2147483648
    %v842 = vsel %vm840, %v827, %v841
    %vm843 = vcmp.eq.s32.totalorder %v838, 2
    %v844 = vxor.u32 %v827, 2147483648
    %v845 = vsel %vm843, %v844, %v835
    %v846 = vsel %vm839, %v842, %v845
    %v847 = vsel %vm836, nan, %v846
    %v848 = vmul.f32 %v225, %v692
    %v849 = vmul.f32 %v227, %v847
    %v850 = vsub.f32 0.0, %v848
    %v851 = vsub.f32 0.0, %v849
    %v852 = vld [vmem:[#allocation17] ss:$8 sm:$0x3]
    %v853 = vld [vmem:[#allocation19] ss:$8 sm:$0x3]
    %v855 = vperm.slane %v852, 0
    %v856 = vperm.slane %v852, 1
    %v859 = vmul.f32 %v536, %v855
    %v860 = vmul.f32 %v537, %v856
    %v862 = vperm.slane %v853, 0
    %v863 = vperm.slane %v853, 1
    %v866 = vmul.f32 %v850, %v862
    %v867 = vmul.f32 %v851, %v863
    %v868 = vsub.f32 %v859, %v866
    %v869 = vsub.f32 %v860, %v867
    %v870 = vmul.f32 %v536, %v862
    %v871 = vmul.f32 %v537, %v863
    %v872 = vmul.f32 %v850, %v855
    %v873 = vmul.f32 %v851, %v856
    %v874 = vadd.f32 %v870, %v872
    %v875 = vadd.f32 %v871, %v873
    %876 = vst [vmem:[#allocation2] sm:$0xff] %v868
    %877 = vst [vmem:[#allocation2 + $0x8] sm:$0xff] %v869
    %878 = vst [vmem:[#allocation3] sm:$0xff] %v874
    %879 = vst [vmem:[#allocation3 + $0x8] sm:$0xff] %v875
    %v880 = vadd.f32 %v868, %v874
    %v881 = vadd.f32 %v869, %v875
    %882 = vst [vmem:[#allocation4] sm:$0xff] %v880
    %883 = vst [vmem:[#allocation4 + $0x8] sm:$0xff] %v881
    %s884 = scalar_lea.vmem [#allocation17], 1
    %v885 = vld [vmem:[%s884] ss:$8 sm:$0x3]
    %s886 = scalar_lea.vmem [#allocation19], 1
    %v887 = vld [vmem:[%s886] ss:$8 sm:$0x3]
    %v889 = vperm.slane %v885, 0
    %v890 = vperm.slane %v885, 1
    %v893 = vmul.f32 %v536, %v889
    %v894 = vmul.f32 %v537, %v890
    %v896 = vperm.slane %v887, 0
    %v897 = vperm.slane %v887, 1
    %v900 = vmul.f32 %v850, %v896
    %v901 = vmul.f32 %v851, %v897
    %v902 = vsub.f32 %v893, %v900
    %v903 = vsub.f32 %v894, %v901
    %v904 = vmul.f32 %v536, %v896
    %v905 = vmul.f32 %v537, %v897
    %v906 = vmul.f32 %v850, %v889
    %v907 = vmul.f32 %v851, %v890
    %v908 = vadd.f32 %v904, %v906
    %v909 = vadd.f32 %v905, %v907
    %910 = vst [vmem:[#allocation2 + $0x10] sm:$0xff] %v902
    %911 = vst [vmem:[#allocation2 + $0x18] sm:$0xff] %v903
    %912 = vst [vmem:[#allocation3 + $0x10] sm:$0xff] %v908
    %913 = vst [vmem:[#allocation3 + $0x18] sm:$0xff] %v909
    %v914 = vadd.f32 %v902, %v908
    %v915 = vadd.f32 %v903, %v909
    %916 = vst [vmem:[#allocation4 + $0x10] sm:$0xff] %v914
    %917 = vst [vmem:[#allocation4 + $0x18] sm:$0xff] %v915
    %s918 = scalar_lea.vmem [#allocation17], 2
    %v919 = vld [vmem:[%s918] ss:$8 sm:$0x3]
    %s920 = scalar_lea.vmem [#allocation19], 2
    %v921 = vld [vmem:[%s920] ss:$8 sm:$0x3]
    %v923 = vperm.slane %v919, 0
    %v924 = vperm.slane %v919, 1
    %v927 = vmul.f32 %v536, %v923
    %v928 = vmul.f32 %v537, %v924
    %v930 = vperm.slane %v921, 0
    %v931 = vperm.slane %v921, 1
    %v934 = vmul.f32 %v850, %v930
    %v935 = vmul.f32 %v851, %v931
    %v936 = vsub.f32 %v927, %v934
    %v937 = vsub.f32 %v928, %v935
    %v938 = vmul.f32 %v536, %v930
    %v939 = vmul.f32 %v537, %v931
    %v940 = vmul.f32 %v850, %v923
    %v941 = vmul.f32 %v851, %v924
    %v942 = vadd.f32 %v938, %v940
    %v943 = vadd.f32 %v939, %v941
    %944 = vst [vmem:[#allocation2 + $0x20] sm:$0xff] %v936
    %945 = vst [vmem:[#allocation2 + $0x28] sm:$0xff] %v937
    %946 = vst [vmem:[#allocation3 + $0x20] sm:$0xff] %v942
    %947 = vst [vmem:[#allocation3 + $0x28] sm:$0xff] %v943
    %v948 = vadd.f32 %v936, %v942
    %v949 = vadd.f32 %v937, %v943
    %950 = vst [vmem:[#allocation4 + $0x20] sm:$0xff] %v948
    %951 = vst [vmem:[#allocation4 + $0x28] sm:$0xff] %v949
    %s952 = scalar_lea.vmem [#allocation17], 3
    %v953 = vld [vmem:[%s952] ss:$8 sm:$0x3]
    %s954 = scalar_lea.vmem [#allocation19], 3
    %v955 = vld [vmem:[%s954] ss:$8 sm:$0x3]
    %v957 = vperm.slane %v953, 0
    %v958 = vperm.slane %v953, 1
    %v961 = vmul.f32 %v536, %v957
    %v962 = vmul.f32 %v537, %v958
    %v964 = vperm.slane %v955, 0
    %v965 = vperm.slane %v955, 1
    %v968 = vmul.f32 %v850, %v964
    %v969 = vmul.f32 %v851, %v965
    %v970 = vsub.f32 %v961, %v968
    %v971 = vsub.f32 %v962, %v969
    %v972 = vmul.f32 %v536, %v964
    %v973 = vmul.f32 %v537, %v965
    %v974 = vmul.f32 %v850, %v957
    %v975 = vmul.f32 %v851, %v958
    %v976 = vadd.f32 %v972, %v974
    %v977 = vadd.f32 %v973, %v975
    %978 = vst [vmem:[#allocation2 + $0x30] sm:$0xff] %v970
    %979 = vst [vmem:[#allocation2 + $0x38] sm:$0xff] %v971
    %980 = vst [vmem:[#allocation3 + $0x30] sm:$0xff] %v976
    %981 = vst [vmem:[#allocation3 + $0x38] sm:$0xff] %v977
    %v982 = vadd.f32 %v970, %v976
    %v983 = vadd.f32 %v971, %v977
    %984 = vst [vmem:[#allocation4 + $0x30] sm:$0xff] %v982
    %985 = vst [vmem:[#allocation4 + $0x38] sm:$0xff] %v983
    %s986 = scalar_lea.vmem [#allocation17], 4
    %v987 = vld [vmem:[%s986] ss:$8 sm:$0x3]
    %s988 = scalar_lea.vmem [#allocation19], 4
    %v989 = vld [vmem:[%s988] ss:$8 sm:$0x3]
    %v991 = vperm.slane %v987, 0
    %v992 = vperm.slane %v987, 1
    %v995 = vmul.f32 %v536, %v991
    %v996 = vmul.f32 %v537, %v992
    %v998 = vperm.slane %v989, 0
    %v999 = vperm.slane %v989, 1
    %v1002 = vmul.f32 %v850, %v998
    %v1003 = vmul.f32 %v851, %v999
    %v1004 = vsub.f32 %v995, %v1002
    %v1005 = vsub.f32 %v996, %v1003
    %v1006 = vmul.f32 %v536, %v998
    %v1007 = vmul.f32 %v537, %v999
    %v1008 = vmul.f32 %v850, %v991
    %v1009 = vmul.f32 %v851, %v992
    %v1010 = vadd.f32 %v1006, %v1008
    %v1011 = vadd.f32 %v1007, %v1009
    %1012 = vst [vmem:[#allocation2 + $0x40] sm:$0xff] %v1004
    %1013 = vst [vmem:[#allocation2 + $0x48] sm:$0xff] %v1005
    %1014 = vst [vmem:[#allocation3 + $0x40] sm:$0xff] %v1010
    %1015 = vst [vmem:[#allocation3 + $0x48] sm:$0xff] %v1011
    %v1016 = vadd.f32 %v1004, %v1010
    %v1017 = vadd.f32 %v1005, %v1011
    %1018 = vst [vmem:[#allocation4 + $0x40] sm:$0xff] %v1016
    %1019 = vst [vmem:[#allocation4 + $0x48] sm:$0xff] %v1017
    %s1020 = scalar_lea.vmem [#allocation17], 5
    %v1021 = vld [vmem:[%s1020] ss:$8 sm:$0x3]
    %s1022 = scalar_lea.vmem [#allocation19], 5
    %v1023 = vld [vmem:[%s1022] ss:$8 sm:$0x3]
    %v1025 = vperm.slane %v1021, 0
    %v1026 = vperm.slane %v1021, 1
    %v1029 = vmul.f32 %v536, %v1025
    %v1030 = vmul.f32 %v537, %v1026
    %v1032 = vperm.slane %v1023, 0
    %v1033 = vperm.slane %v1023, 1
    %v1036 = vmul.f32 %v850, %v1032
    %v1037 = vmul.f32 %v851, %v1033
    %v1038 = vsub.f32 %v1029, %v1036
    %v1039 = vsub.f32 %v1030, %v1037
    %v1040 = vmul.f32 %v536, %v1032
    %v1041 = vmul.f32 %v537, %v1033
    %v1042 = vmul.f32 %v850, %v1025
    %v1043 = vmul.f32 %v851, %v1026
    %v1044 = vadd.f32 %v1040, %v1042
    %v1045 = vadd.f32 %v1041, %v1043
    %1046 = vst [vmem:[#allocation2 + $0x50] sm:$0xff] %v1038
    %1047 = vst [vmem:[#allocation2 + $0x58] sm:$0xff] %v1039
    %1048 = vst [vmem:[#allocation3 + $0x50] sm:$0xff] %v1044
    %1049 = vst [vmem:[#allocation3 + $0x58] sm:$0xff] %v1045
    %v1050 = vadd.f32 %v1038, %v1044
    %v1051 = vadd.f32 %v1039, %v1045
    %1052 = vst [vmem:[#allocation4 + $0x50] sm:$0xff] %v1050
    %1053 = vst [vmem:[#allocation4 + $0x58] sm:$0xff] %v1051
    %v1054 = vld [vmem:[#allocation14] ss:$8 sm:$0x3]
    %v1055 = vld [vmem:[#allocation16] ss:$8 sm:$0x3]
    %v1057 = vperm.slane %v1055, 0
    %v1058 = vperm.slane %v1055, 1
    %v1061 = vmul.f32 %v1057, %v536
    %v1062 = vmul.f32 %v1058, %v537
    %v1064 = vperm.slane %v1054, 0
    %v1065 = vperm.slane %v1054, 1
    %v1068 = vmul.f32 %v1064, %v850
    %v1069 = vmul.f32 %v1065, %v851
    %v1070 = vadd.f32 %v1061, %v1068
    %v1071 = vadd.f32 %v1062, %v1069
    %v1072 = vmul.f32 %v1057, %v850
    %v1073 = vmul.f32 %v1058, %v851
    %v1074 = vmul.f32 %v1064, %v536
    %v1075 = vmul.f32 %v1065, %v537
    %v1076 = vsub.f32 %v1072, %v1074
    %v1077 = vsub.f32 %v1073, %v1075
    %v1078 = vld [vmem:[#allocation17] ss:$8 sm:$0x3]
    %v1079 = vld [vmem:[#allocation19] ss:$8 sm:$0x3]
    %v1081 = vperm.slane %v1078, 0
    %v1082 = vperm.slane %v1078, 1
    %v1085 = vmul.f32 %v1070, %v1081
    %v1086 = vmul.f32 %v1071, %v1082
    %v1088 = vperm.slane %v1079, 0
    %v1089 = vperm.slane %v1079, 1
    %v1092 = vmul.f32 %v1076, %v1088
    %v1093 = vmul.f32 %v1077, %v1089
    %v1094 = vsub.f32 %v1085, %v1092
    %v1095 = vsub.f32 %v1086, %v1093
    %v1096 = vmul.f32 %v1070, %v1088
    %v1097 = vmul.f32 %v1071, %v1089
    %v1098 = vmul.f32 %v1076, %v1081
    %v1099 = vmul.f32 %v1077, %v1082
    %v1100 = vadd.f32 %v1096, %v1098
    %v1101 = vadd.f32 %v1097, %v1099
    %1102 = vst [vmem:[#allocation2 + $0x60] sm:$0xff] %v1094
    %1103 = vst [vmem:[#allocation2 + $0x68] sm:$0xff] %v1095
    %1104 = vst [vmem:[#allocation3 + $0x60] sm:$0xff] %v1100
    %1105 = vst [vmem:[#allocation3 + $0x68] sm:$0xff] %v1101
    %v1106 = vadd.f32 %v1094, %v1100
    %v1107 = vadd.f32 %v1095, %v1101
    %1108 = vst [vmem:[#allocation4 + $0x60] sm:$0xff] %v1106
    %1109 = vst [vmem:[#allocation4 + $0x68] sm:$0xff] %v1107
    %v1110 = vld [vmem:[%s884] ss:$8 sm:$0x3]
    %v1111 = vld [vmem:[%s886] ss:$8 sm:$0x3]
    %v1113 = vperm.slane %v1110, 0
    %v1114 = vperm.slane %v1110, 1
    %v1117 = vmul.f32 %v1070, %v1113
    %v1118 = vmul.f32 %v1071, %v1114
    %v1120 = vperm.slane %v1111, 0
    %v1121 = vperm.slane %v1111, 1
    %v1124 = vmul.f32 %v1076, %v1120
    %v1125 = vmul.f32 %v1077, %v1121
    %v1126 = vsub.f32 %v1117, %v1124
    %v1127 = vsub.f32 %v1118, %v1125
    %v1128 = vmul.f32 %v1070, %v1120
    %v1129 = vmul.f32 %v1071, %v1121
    %v1130 = vmul.f32 %v1076, %v1113
    %v1131 = vmul.f32 %v1077, %v1114
    %v1132 = vadd.f32 %v1128, %v1130
    %v1133 = vadd.f32 %v1129, %v1131
    %1134 = vst [vmem:[#allocation2 + $0x70] sm:$0xff] %v1126
    %1135 = vst [vmem:[#allocation2 + $0x78] sm:$0xff] %v1127
    %1136 = vst [vmem:[#allocation3 + $0x70] sm:$0xff] %v1132
    %1137 = vst [vmem:[#allocation3 + $0x78] sm:$0xff] %v1133
    %v1138 = vadd.f32 %v1126, %v1132
    %v1139 = vadd.f32 %v1127, %v1133
    %1140 = vst [vmem:[#allocation4 + $0x70] sm:$0xff] %v1138
    %1141 = vst [vmem:[#allocation4 + $0x78] sm:$0xff] %v1139
    %v1142 = vld [vmem:[%s918] ss:$8 sm:$0x3]
    %v1143 = vld [vmem:[%s920] ss:$8 sm:$0x3]
    %v1145 = vperm.slane %v1142, 0
    %v1146 = vperm.slane %v1142, 1
    %v1149 = vmul.f32 %v1070, %v1145
    %v1150 = vmul.f32 %v1071, %v1146
    %v1152 = vperm.slane %v1143, 0
    %v1153 = vperm.slane %v1143, 1
    %v1156 = vmul.f32 %v1076, %v1152
    %v1157 = vmul.f32 %v1077, %v1153
    %v1158 = vsub.f32 %v1149, %v1156
    %v1159 = vsub.f32 %v1150, %v1157
    %v1160 = vmul.f32 %v1070, %v1152
    %v1161 = vmul.f32 %v1071, %v1153
    %v1162 = vmul.f32 %v1076, %v1145
    %v1163 = vmul.f32 %v1077, %v1146
    %v1164 = vadd.f32 %v1160, %v1162
    %v1165 = vadd.f32 %v1161, %v1163
    %1166 = vst [vmem:[#allocation2 + $0x80] sm:$0xff] %v1158
    %1167 = vst [vmem:[#allocation2 + $0x88] sm:$0xff] %v1159
    %1168 = vst [vmem:[#allocation3 + $0x80] sm:$0xff] %v1164
    %1169 = vst [vmem:[#allocation3 + $0x88] sm:$0xff] %v1165
    %v1170 = vadd.f32 %v1158, %v1164
    %v1171 = vadd.f32 %v1159, %v1165
    %1172 = vst [vmem:[#allocation4 + $0x80] sm:$0xff] %v1170
    %1173 = vst [vmem:[#allocation4 + $0x88] sm:$0xff] %v1171
    %v1174 = vld [vmem:[%s952] ss:$8 sm:$0x3]
    %v1175 = vld [vmem:[%s954] ss:$8 sm:$0x3]
    %v1177 = vperm.slane %v1174, 0
    %v1178 = vperm.slane %v1174, 1
    %v1181 = vmul.f32 %v1070, %v1177
    %v1182 = vmul.f32 %v1071, %v1178
    %v1184 = vperm.slane %v1175, 0
    %v1185 = vperm.slane %v1175, 1
    %v1188 = vmul.f32 %v1076, %v1184
    %v1189 = vmul.f32 %v1077, %v1185
    %v1190 = vsub.f32 %v1181, %v1188
    %v1191 = vsub.f32 %v1182, %v1189
    %v1192 = vmul.f32 %v1070, %v1184
    %v1193 = vmul.f32 %v1071, %v1185
    %v1194 = vmul.f32 %v1076, %v1177
    %v1195 = vmul.f32 %v1077, %v1178
    %v1196 = vadd.f32 %v1192, %v1194
    %v1197 = vadd.f32 %v1193, %v1195
    %1198 = vst [vmem:[#allocation2 + $0x90] sm:$0xff] %v1190
    %1199 = vst [vmem:[#allocation2 + $0x98] sm:$0xff] %v1191
    %1200 = vst [vmem:[#allocation3 + $0x90] sm:$0xff] %v1196
    %1201 = vst [vmem:[#allocation3 + $0x98] sm:$0xff] %v1197
    %v1202 = vadd.f32 %v1190, %v1196
    %v1203 = vadd.f32 %v1191, %v1197
    %1204 = vst [vmem:[#allocation4 + $0x90] sm:$0xff] %v1202
    %1205 = vst [vmem:[#allocation4 + $0x98] sm:$0xff] %v1203
    %v1206 = vld [vmem:[%s986] ss:$8 sm:$0x3]
    %v1207 = vld [vmem:[%s988] ss:$8 sm:$0x3]
    %v1209 = vperm.slane %v1206, 0
    %v1210 = vperm.slane %v1206, 1
    %v1213 = vmul.f32 %v1070, %v1209
    %v1214 = vmul.f32 %v1071, %v1210
    %v1216 = vperm.slane %v1207, 0
    %v1217 = vperm.slane %v1207, 1
    %v1220 = vmul.f32 %v1076, %v1216
    %v1221 = vmul.f32 %v1077, %v1217
    %v1222 = vsub.f32 %v1213, %v1220
    %v1223 = vsub.f32 %v1214, %v1221
    %v1224 = vmul.f32 %v1070, %v1216
    %v1225 = vmul.f32 %v1071, %v1217
    %v1226 = vmul.f32 %v1076, %v1209
    %v1227 = vmul.f32 %v1077, %v1210
    %v1228 = vadd.f32 %v1224, %v1226
    %v1229 = vadd.f32 %v1225, %v1227
    %1230 = vst [vmem:[#allocation2 + $0xa0] sm:$0xff] %v1222
    %1231 = vst [vmem:[#allocation2 + $0xa8] sm:$0xff] %v1223
    %1232 = vst [vmem:[#allocation3 + $0xa0] sm:$0xff] %v1228
    %1233 = vst [vmem:[#allocation3 + $0xa8] sm:$0xff] %v1229
    %v1234 = vadd.f32 %v1222, %v1228
    %v1235 = vadd.f32 %v1223, %v1229
    %1236 = vst [vmem:[#allocation4 + $0xa0] sm:$0xff] %v1234
    %1237 = vst [vmem:[#allocation4 + $0xa8] sm:$0xff] %v1235
    %v1238 = vld [vmem:[%s1020] ss:$8 sm:$0x3]
    %v1239 = vld [vmem:[%s1022] ss:$8 sm:$0x3]
    %v1241 = vperm.slane %v1238, 0
    %v1242 = vperm.slane %v1238, 1
    %v1245 = vmul.f32 %v1070, %v1241
    %v1246 = vmul.f32 %v1071, %v1242
    %v1248 = vperm.slane %v1239, 0
    %v1249 = vperm.slane %v1239, 1
    %v1252 = vmul.f32 %v1076, %v1248
    %v1253 = vmul.f32 %v1077, %v1249
    %v1254 = vsub.f32 %v1245, %v1252
    %v1255 = vsub.f32 %v1246, %v1253
    %v1256 = vmul.f32 %v1070, %v1248
    %v1257 = vmul.f32 %v1071, %v1249
    %v1258 = vmul.f32 %v1076, %v1241
    %v1259 = vmul.f32 %v1077, %v1242
    %v1260 = vadd.f32 %v1256, %v1258
    %v1261 = vadd.f32 %v1257, %v1259
    %1262 = vst [vmem:[#allocation2 + $0xb0] sm:$0xff] %v1254
    %1263 = vst [vmem:[#allocation2 + $0xb8] sm:$0xff] %v1255
    %1264 = vst [vmem:[#allocation3 + $0xb0] sm:$0xff] %v1260
    %1265 = vst [vmem:[#allocation3 + $0xb8] sm:$0xff] %v1261
    %v1266 = vadd.f32 %v1254, %v1260
    %v1267 = vadd.f32 %v1255, %v1261
    %1268 = vst [vmem:[#allocation4 + $0xb0] sm:$0xff] %v1266
    %1269 = vst [vmem:[#allocation4 + $0xb8] sm:$0xff] %v1267
    %v1270 = vld [vmem:[%s164] ss:$8 sm:$0x3]
    %v1271 = vld [vmem:[%s202] ss:$8 sm:$0x3]
    %v1273 = vperm.slane %v1271, 0
    %v1274 = vperm.slane %v1271, 1
    %v1277 = vmul.f32 %v1273, %v536
    %v1278 = vmul.f32 %v1274, %v537
    %v1280 = vperm.slane %v1270, 0
    %v1281 = vperm.slane %v1270, 1
    %v1284 = vmul.f32 %v1280, %v850
    %v1285 = vmul.f32 %v1281, %v851
    %v1286 = vadd.f32 %v1277, %v1284
    %v1287 = vadd.f32 %v1278, %v1285
    %v1288 = vmul.f32 %v1273, %v850
    %v1289 = vmul.f32 %v1274, %v851
    %v1290 = vmul.f32 %v1280, %v536
    %v1291 = vmul.f32 %v1281, %v537
    %v1292 = vsub.f32 %v1288, %v1290
    %v1293 = vsub.f32 %v1289, %v1291
    %v1294 = vld [vmem:[#allocation17] ss:$8 sm:$0x3]
    %v1295 = vld [vmem:[#allocation19] ss:$8 sm:$0x3]
    %v1297 = vperm.slane %v1294, 0
    %v1298 = vperm.slane %v1294, 1
    %v1301 = vmul.f32 %v1286, %v1297
    %v1302 = vmul.f32 %v1287, %v1298
    %v1304 = vperm.slane %v1295, 0
    %v1305 = vperm.slane %v1295, 1
    %v1308 = vmul.f32 %v1292, %v1304
    %v1309 = vmul.f32 %v1293, %v1305
    %v1310 = vsub.f32 %v1301, %v1308
    %v1311 = vsub.f32 %v1302, %v1309
    %v1312 = vmul.f32 %v1286, %v1304
    %v1313 = vmul.f32 %v1287, %v1305
    %v1314 = vmul.f32 %v1292, %v1297
    %v1315 = vmul.f32 %v1293, %v1298
    %v1316 = vadd.f32 %v1312, %v1314
    %v1317 = vadd.f32 %v1313, %v1315
    %1318 = vst [vmem:[#allocation2 + $0xc0] sm:$0xff] %v1310
    %1319 = vst [vmem:[#allocation2 + $0xc8] sm:$0xff] %v1311
    %1320 = vst [vmem:[#allocation3 + $0xc0] sm:$0xff] %v1316
    %1321 = vst [vmem:[#allocation3 + $0xc8] sm:$0xff] %v1317
    %v1322 = vadd.f32 %v1310, %v1316
    %v1323 = vadd.f32 %v1311, %v1317
    %1324 = vst [vmem:[#allocation4 + $0xc0] sm:$0xff] %v1322
    %1325 = vst [vmem:[#allocation4 + $0xc8] sm:$0xff] %v1323
    %v1326 = vld [vmem:[%s884] ss:$8 sm:$0x3]
    %v1327 = vld [vmem:[%s886] ss:$8 sm:$0x3]
    %v1329 = vperm.slane %v1326, 0
    %v1330 = vperm.slane %v1326, 1
    %v1333 = vmul.f32 %v1286, %v1329
    %v1334 = vmul.f32 %v1287, %v1330
    %v1336 = vperm.slane %v1327, 0
    %v1337 = vperm.slane %v1327, 1
    %v1340 = vmul.f32 %v1292, %v1336
    %v1341 = vmul.f32 %v1293, %v1337
    %v1342 = vsub.f32 %v1333, %v1340
    %v1343 = vsub.f32 %v1334, %v1341
    %v1344 = vmul.f32 %v1286, %v1336
    %v1345 = vmul.f32 %v1287, %v1337
    %v1346 = vmul.f32 %v1292, %v1329
    %v1347 = vmul.f32 %v1293, %v1330
    %v1348 = vadd.f32 %v1344, %v1346
    %v1349 = vadd.f32 %v1345, %v1347
    %1350 = vst [vmem:[#allocation2 + $0xd0] sm:$0xff] %v1342
    %1351 = vst [vmem:[#allocation2 + $0xd8] sm:$0xff] %v1343
    %1352 = vst [vmem:[#allocation3 + $0xd0] sm:$0xff] %v1348
    %1353 = vst [vmem:[#allocation3 + $0xd8] sm:$0xff] %v1349
    %v1354 = vadd.f32 %v1342, %v1348
    %v1355 = vadd.f32 %v1343, %v1349
    %1356 = vst [vmem:[#allocation4 + $0xd0] sm:$0xff] %v1354
    %1357 = vst [vmem:[#allocation4 + $0xd8] sm:$0xff] %v1355
    %v1358 = vld [vmem:[%s918] ss:$8 sm:$0x3]
    %v1359 = vld [vmem:[%s920] ss:$8 sm:$0x3]
    %v1361 = vperm.slane %v1358, 0
    %v1362 = vperm.slane %v1358, 1
    %v1365 = vmul.f32 %v1286, %v1361
    %v1366 = vmul.f32 %v1287, %v1362
    %v1368 = vperm.slane %v1359, 0
    %v1369 = vperm.slane %v1359, 1
    %v1372 = vmul.f32 %v1292, %v1368
    %v1373 = vmul.f32 %v1293, %v1369
    %v1374 = vsub.f32 %v1365, %v1372
    %v1375 = vsub.f32 %v1366, %v1373
    %v1376 = vmul.f32 %v1286, %v1368
    %v1377 = vmul.f32 %v1287, %v1369
    %v1378 = vmul.f32 %v1292, %v1361
    %v1379 = vmul.f32 %v1293, %v1362
    %v1380 = vadd.f32 %v1376, %v1378
    %v1381 = vadd.f32 %v1377, %v1379
    %1382 = vst [vmem:[#allocation2 + $0xe0] sm:$0xff] %v1374
    %1383 = vst [vmem:[#allocation2 + $0xe8] sm:$0xff] %v1375
    %1384 = vst [vmem:[#allocation3 + $0xe0] sm:$0xff] %v1380
    %1385 = vst [vmem:[#allocation3 + $0xe8] sm:$0xff] %v1381
    %v1386 = vadd.f32 %v1374, %v1380
    %v1387 = vadd.f32 %v1375, %v1381
    %1388 = vst [vmem:[#allocation4 + $0xe0] sm:$0xff] %v1386
    %1389 = vst [vmem:[#allocation4 + $0xe8] sm:$0xff] %v1387
    %v1390 = vld [vmem:[%s952] ss:$8 sm:$0x3]
    %v1391 = vld [vmem:[%s954] ss:$8 sm:$0x3]
    %v1393 = vperm.slane %v1390, 0
    %v1394 = vperm.slane %v1390, 1
    %v1397 = vmul.f32 %v1286, %v1393
    %v1398 = vmul.f32 %v1287, %v1394
    %v1400 = vperm.slane %v1391, 0
    %v1401 = vperm.slane %v1391, 1
    %v1404 = vmul.f32 %v1292, %v1400
    %v1405 = vmul.f32 %v1293, %v1401
    %v1406 = vsub.f32 %v1397, %v1404
    %v1407 = vsub.f32 %v1398, %v1405
    %v1408 = vmul.f32 %v1286, %v1400
    %v1409 = vmul.f32 %v1287, %v1401
    %v1410 = vmul.f32 %v1292, %v1393
    %v1411 = vmul.f32 %v1293, %v1394
    %v1412 = vadd.f32 %v1408, %v1410
    %v1413 = vadd.f32 %v1409, %v1411
    %1414 = vst [vmem:[#allocation2 + $0xf0] sm:$0xff] %v1406
    %1415 = vst [vmem:[#allocation2 + $0xf8] sm:$0xff] %v1407
    %1416 = vst [vmem:[#allocation3 + $0xf0] sm:$0xff] %v1412
    %1417 = vst [vmem:[#allocation3 + $0xf8] sm:$0xff] %v1413
    %v1418 = vadd.f32 %v1406, %v1412
    %v1419 = vadd.f32 %v1407, %v1413
    %1420 = vst [vmem:[#allocation4 + $0xf0] sm:$0xff] %v1418
    %1421 = vst [vmem:[#allocation4 + $0xf8] sm:$0xff] %v1419
    %v1422 = vld [vmem:[%s986] ss:$8 sm:$0x3]
    %v1423 = vld [vmem:[%s988] ss:$8 sm:$0x3]
    %v1425 = vperm.slane %v1422, 0
    %v1426 = vperm.slane %v1422, 1
    %v1429 = vmul.f32 %v1286, %v1425
    %v1430 = vmul.f32 %v1287, %v1426
    %v1432 = vperm.slane %v1423, 0
    %v1433 = vperm.slane %v1423, 1
    %v1436 = vmul.f32 %v1292, %v1432
    %v1437 = vmul.f32 %v1293, %v1433
    %v1438 = vsub.f32 %v1429, %v1436
    %v1439 = vsub.f32 %v1430, %v1437
    %v1440 = vmul.f32 %v1286, %v1432
    %v1441 = vmul.f32 %v1287, %v1433
    %v1442 = vmul.f32 %v1292, %v1425
    %v1443 = vmul.f32 %v1293, %v1426
    %v1444 = vadd.f32 %v1440, %v1442
    %v1445 = vadd.f32 %v1441, %v1443
    %1446 = vst [vmem:[#allocation2 + $0x100] sm:$0xff] %v1438
    %1447 = vst [vmem:[#allocation2 + $0x108] sm:$0xff] %v1439
    %1448 = vst [vmem:[#allocation3 + $0x100] sm:$0xff] %v1444
    %1449 = vst [vmem:[#allocation3 + $0x108] sm:$0xff] %v1445
    %v1450 = vadd.f32 %v1438, %v1444
    %v1451 = vadd.f32 %v1439, %v1445
    %1452 = vst [vmem:[#allocation4 + $0x100] sm:$0xff] %v1450
    %1453 = vst [vmem:[#allocation4 + $0x108] sm:$0xff] %v1451
    %v1454 = vld [vmem:[%s1020] ss:$8 sm:$0x3]
    %v1455 = vld [vmem:[%s1022] ss:$8 sm:$0x3]
    %v1457 = vperm.slane %v1454, 0
    %v1458 = vperm.slane %v1454, 1
    %v1461 = vmul.f32 %v1286, %v1457
    %v1462 = vmul.f32 %v1287, %v1458
    %v1464 = vperm.slane %v1455, 0
    %v1465 = vperm.slane %v1455, 1
    %v1468 = vmul.f32 %v1292, %v1464
    %v1469 = vmul.f32 %v1293, %v1465
    %v1470 = vsub.f32 %v1461, %v1468
    %v1471 = vsub.f32 %v1462, %v1469
    %v1472 = vmul.f32 %v1286, %v1464
    %v1473 = vmul.f32 %v1287, %v1465
    %v1474 = vmul.f32 %v1292, %v1457
    %v1475 = vmul.f32 %v1293, %v1458
    %v1476 = vadd.f32 %v1472, %v1474
    %v1477 = vadd.f32 %v1473, %v1475
    %1478 = vst [vmem:[#allocation2 + $0x110] sm:$0xff] %v1470
    %1479 = vst [vmem:[#allocation2 + $0x118] sm:$0xff] %v1471
    %1480 = vst [vmem:[#allocation3 + $0x110] sm:$0xff] %v1476
    %1481 = vst [vmem:[#allocation3 + $0x118] sm:$0xff] %v1477
    %v1482 = vadd.f32 %v1470, %v1476
    %v1483 = vadd.f32 %v1471, %v1477
    %1484 = vst [vmem:[#allocation4 + $0x110] sm:$0xff] %v1482
    %1485 = vst [vmem:[#allocation4 + $0x118] sm:$0xff] %v1483
    %v1486 = vld [vmem:[%s179] ss:$8 sm:$0x3]
    %v1487 = vld [vmem:[%s213] ss:$8 sm:$0x3]
    %v1489 = vperm.slane %v1487, 0
    %v1490 = vperm.slane %v1487, 1
    %v1493 = vmul.f32 %v1489, %v536
    %v1494 = vmul.f32 %v1490, %v537
    %v1496 = vperm.slane %v1486, 0
    %v1497 = vperm.slane %v1486, 1
    %v1500 = vmul.f32 %v1496, %v850
    %v1501 = vmul.f32 %v1497, %v851
    %v1502 = vadd.f32 %v1493, %v1500
    %v1503 = vadd.f32 %v1494, %v1501
    %v1504 = vmul.f32 %v1489, %v850
    %v1505 = vmul.f32 %v1490, %v851
    %v1506 = vmul.f32 %v1496, %v536
    %v1507 = vmul.f32 %v1497, %v537
    %v1508 = vsub.f32 %v1504, %v1506
    %v1509 = vsub.f32 %v1505, %v1507
    %v1510 = vld [vmem:[#allocation17] ss:$8 sm:$0x3]
    %v1511 = vld [vmem:[#allocation19] ss:$8 sm:$0x3]
    %v1513 = vperm.slane %v1510, 0
    %v1514 = vperm.slane %v1510, 1
    %v1517 = vmul.f32 %v1502, %v1513
    %v1518 = vmul.f32 %v1503, %v1514
    %v1520 = vperm.slane %v1511, 0
    %v1521 = vperm.slane %v1511, 1
    %v1524 = vmul.f32 %v1508, %v1520
    %v1525 = vmul.f32 %v1509, %v1521
    %v1526 = vsub.f32 %v1517, %v1524
    %v1527 = vsub.f32 %v1518, %v1525
    %v1528 = vmul.f32 %v1502, %v1520
    %v1529 = vmul.f32 %v1503, %v1521
    %v1530 = vmul.f32 %v1508, %v1513
    %v1531 = vmul.f32 %v1509, %v1514
    %v1532 = vadd.f32 %v1528, %v1530
    %v1533 = vadd.f32 %v1529, %v1531
    %1534 = vst [vmem:[#allocation2 + $0x120] sm:$0xff] %v1526
    %1535 = vst [vmem:[#allocation2 + $0x128] sm:$0xff] %v1527
    %1536 = vst [vmem:[#allocation3 + $0x120] sm:$0xff] %v1532
    %1537 = vst [vmem:[#allocation3 + $0x128] sm:$0xff] %v1533
    %v1538 = vadd.f32 %v1526, %v1532
    %v1539 = vadd.f32 %v1527, %v1533
    %1540 = vst [vmem:[#allocation4 + $0x120] sm:$0xff] %v1538
    %1541 = vst [vmem:[#allocation4 + $0x128] sm:$0xff] %v1539
    %v1542 = vld [vmem:[%s884] ss:$8 sm:$0x3]
    %v1543 = vld [vmem:[%s886] ss:$8 sm:$0x3]
    %v1545 = vperm.slane %v1542, 0
    %v1546 = vperm.slane %v1542, 1
    %v1549 = vmul.f32 %v1502, %v1545
    %v1550 = vmul.f32 %v1503, %v1546
    %v1552 = vperm.slane %v1543, 0
    %v1553 = vperm.slane %v1543, 1
    %v1556 = vmul.f32 %v1508, %v1552
    %v1557 = vmul.f32 %v1509, %v1553
    %v1558 = vsub.f32 %v1549, %v1556
    %v1559 = vsub.f32 %v1550, %v1557
    %v1560 = vmul.f32 %v1502, %v1552
    %v1561 = vmul.f32 %v1503, %v1553
    %v1562 = vmul.f32 %v1508, %v1545
    %v1563 = vmul.f32 %v1509, %v1546
    %v1564 = vadd.f32 %v1560, %v1562
    %v1565 = vadd.f32 %v1561, %v1563
    %1566 = vst [vmem:[#allocation2 + $0x130] sm:$0xff] %v1558
    %1567 = vst [vmem:[#allocation2 + $0x138] sm:$0xff] %v1559
    %1568 = vst [vmem:[#allocation3 + $0x130] sm:$0xff] %v1564
    %1569 = vst [vmem:[#allocation3 + $0x138] sm:$0xff] %v1565
    %v1570 = vadd.f32 %v1558, %v1564
    %v1571 = vadd.f32 %v1559, %v1565
    %1572 = vst [vmem:[#allocation4 + $0x130] sm:$0xff] %v1570
    %1573 = vst [vmem:[#allocation4 + $0x138] sm:$0xff] %v1571
    %v1574 = vld [vmem:[%s918] ss:$8 sm:$0x3]
    %v1575 = vld [vmem:[%s920] ss:$8 sm:$0x3]
    %v1577 = vperm.slane %v1574, 0
    %v1578 = vperm.slane %v1574, 1
    %v1581 = vmul.f32 %v1502, %v1577
    %v1582 = vmul.f32 %v1503, %v1578
    %v1584 = vperm.slane %v1575, 0
    %v1585 = vperm.slane %v1575, 1
    %v1588 = vmul.f32 %v1508, %v1584
    %v1589 = vmul.f32 %v1509, %v1585
    %v1590 = vsub.f32 %v1581, %v1588
    %v1591 = vsub.f32 %v1582, %v1589
    %v1592 = vmul.f32 %v1502, %v1584
    %v1593 = vmul.f32 %v1503, %v1585
    %v1594 = vmul.f32 %v1508, %v1577
    %v1595 = vmul.f32 %v1509, %v1578
    %v1596 = vadd.f32 %v1592, %v1594
    %v1597 = vadd.f32 %v1593, %v1595
    %1598 = vst [vmem:[#allocation2 + $0x140] sm:$0xff] %v1590
    %1599 = vst [vmem:[#allocation2 + $0x148] sm:$0xff] %v1591
    %1600 = vst [vmem:[#allocation3 + $0x140] sm:$0xff] %v1596
    %1601 = vst [vmem:[#allocation3 + $0x148] sm:$0xff] %v1597
    %v1602 = vadd.f32 %v1590, %v1596
    %v1603 = vadd.f32 %v1591, %v1597
    %1604 = vst [vmem:[#allocation4 + $0x140] sm:$0xff] %v1602
    %1605 = vst [vmem:[#allocation4 + $0x148] sm:$0xff] %v1603
    %v1606 = vld [vmem:[%s952] ss:$8 sm:$0x3]
    %v1607 = vld [vmem:[%s954] ss:$8 sm:$0x3]
    %v1609 = vperm.slane %v1606, 0
    %v1610 = vperm.slane %v1606, 1
    %v1613 = vmul.f32 %v1502, %v1609
    %v1614 = vmul.f32 %v1503, %v1610
    %v1616 = vperm.slane %v1607, 0
    %v1617 = vperm.slane %v1607, 1
    %v1620 = vmul.f32 %v1508, %v1616
    %v1621 = vmul.f32 %v1509, %v1617
    %v1622 = vsub.f32 %v1613, %v1620
    %v1623 = vsub.f32 %v1614, %v1621
    %v1624 = vmul.f32 %v1502, %v1616
    %v1625 = vmul.f32 %v1503, %v1617
    %v1626 = vmul.f32 %v1508, %v1609
    %v1627 = vmul.f32 %v1509, %v1610
    %v1628 = vadd.f32 %v1624, %v1626
    %v1629 = vadd.f32 %v1625, %v1627
    %1630 = vst [vmem:[#allocation2 + $0x150] sm:$0xff] %v1622
    %1631 = vst [vmem:[#allocation2 + $0x158] sm:$0xff] %v1623
    %1632 = vst [vmem:[#allocation3 + $0x150] sm:$0xff] %v1628
    %1633 = vst [vmem:[#allocation3 + $0x158] sm:$0xff] %v1629
    %v1634 = vadd.f32 %v1622, %v1628
    %v1635 = vadd.f32 %v1623, %v1629
    %1636 = vst [vmem:[#allocation4 + $0x150] sm:$0xff] %v1634
    %1637 = vst [vmem:[#allocation4 + $0x158] sm:$0xff] %v1635
    %v1638 = vld [vmem:[%s986] ss:$8 sm:$0x3]
    %v1639 = vld [vmem:[%s988] ss:$8 sm:$0x3]
    %v1641 = vperm.slane %v1638, 0
    %v1642 = vperm.slane %v1638, 1
    %v1645 = vmul.f32 %v1502, %v1641
    %v1646 = vmul.f32 %v1503, %v1642
    %v1648 = vperm.slane %v1639, 0
    %v1649 = vperm.slane %v1639, 1
    %v1652 = vmul.f32 %v1508, %v1648
    %v1653 = vmul.f32 %v1509, %v1649
    %v1654 = vsub.f32 %v1645, %v1652
    %v1655 = vsub.f32 %v1646, %v1653
    %v1656 = vmul.f32 %v1502, %v1648
    %v1657 = vmul.f32 %v1503, %v1649
    %v1658 = vmul.f32 %v1508, %v1641
    %v1659 = vmul.f32 %v1509, %v1642
    %v1660 = vadd.f32 %v1656, %v1658
    %v1661 = vadd.f32 %v1657, %v1659
    %1662 = vst [vmem:[#allocation2 + $0x160] sm:$0xff] %v1654
    %1663 = vst [vmem:[#allocation2 + $0x168] sm:$0xff] %v1655
    %1664 = vst [vmem:[#allocation3 + $0x160] sm:$0xff] %v1660
    %1665 = vst [vmem:[#allocation3 + $0x168] sm:$0xff] %v1661
    %v1666 = vadd.f32 %v1654, %v1660
    %v1667 = vadd.f32 %v1655, %v1661
    %1668 = vst [vmem:[#allocation4 + $0x160] sm:$0xff] %v1666
    %1669 = vst [vmem:[#allocation4 + $0x168] sm:$0xff] %v1667
    %v1670 = vld [vmem:[%s1020] ss:$8 sm:$0x3]
    %v1671 = vld [vmem:[%s1022] ss:$8 sm:$0x3]
    %v1673 = vperm.slane %v1670, 0
    %v1674 = vperm.slane %v1670, 1
    %v1677 = vmul.f32 %v1502, %v1673
    %v1678 = vmul.f32 %v1503, %v1674
    %v1680 = vperm.slane %v1671, 0
    %v1681 = vperm.slane %v1671, 1
    %v1684 = vmul.f32 %v1508, %v1680
    %v1685 = vmul.f32 %v1509, %v1681
    %v1686 = vsub.f32 %v1677, %v1684
    %v1687 = vsub.f32 %v1678, %v1685
    %v1688 = vmul.f32 %v1502, %v1680
    %v1689 = vmul.f32 %v1503, %v1681
    %v1690 = vmul.f32 %v1508, %v1673
    %v1691 = vmul.f32 %v1509, %v1674
    %v1692 = vadd.f32 %v1688, %v1690
    %v1693 = vadd.f32 %v1689, %v1691
    %1694 = vst [vmem:[#allocation2 + $0x170] sm:$0xff] %v1686
    %1695 = vst [vmem:[#allocation2 + $0x178] sm:$0xff] %v1687
    %1696 = vst [vmem:[#allocation3 + $0x170] sm:$0xff] %v1692
    %1697 = vst [vmem:[#allocation3 + $0x178] sm:$0xff] %v1693
    %v1698 = vadd.f32 %v1686, %v1692
    %v1699 = vadd.f32 %v1687, %v1693
    %1700 = vst [vmem:[#allocation4 + $0x170] sm:$0xff] %v1698
    %1701 = vst [vmem:[#allocation4 + $0x178] sm:$0xff] %v1699
    %v1702 = vld [vmem:[#allocation2] sm:$0xff]
    %v1703 = vld [vmem:[#allocation2 + $0x8] sm:$0xff]
    %v1704 = vld [vmem:[#allocation2 + $0x10] sm:$0xff]
    %v1705 = vld [vmem:[#allocation2 + $0x18] sm:$0xff]
    %v1706 = vld [vmem:[#allocation2 + $0x20] sm:$0xff]
    %v1707 = vld [vmem:[#allocation2 + $0x28] sm:$0xff]
    %v1708 = vld [vmem:[#allocation2 + $0x30] sm:$0xff]
    %v1709 = vld [vmem:[#allocation2 + $0x38] sm:$0xff]
    %v1710 = vld [vmem:[#allocation2 + $0x40] sm:$0xff]
    %v1711 = vld [vmem:[#allocation2 + $0x48] sm:$0xff]
    %v1712 = vld [vmem:[#allocation2 + $0x50] sm:$0xff]
    %v1713 = vld [vmem:[#allocation2 + $0x58] sm:$0xff]
    %v1714 = vld [vmem:[#allocation2 + $0x60] sm:$0xff]
    %v1715 = vld [vmem:[#allocation2 + $0x68] sm:$0xff]
    %v1716 = vld [vmem:[#allocation2 + $0x70] sm:$0xff]
    %v1717 = vld [vmem:[#allocation2 + $0x78] sm:$0xff]
    %v1718 = vld [vmem:[#allocation2 + $0x80] sm:$0xff]
    %v1719 = vld [vmem:[#allocation2 + $0x88] sm:$0xff]
    %v1720 = vld [vmem:[#allocation2 + $0x90] sm:$0xff]
    %v1721 = vld [vmem:[#allocation2 + $0x98] sm:$0xff]
    %v1722 = vld [vmem:[#allocation2 + $0xa0] sm:$0xff]
    %v1723 = vld [vmem:[#allocation2 + $0xa8] sm:$0xff]
    %v1724 = vld [vmem:[#allocation2 + $0xb0] sm:$0xff]
    %v1725 = vld [vmem:[#allocation2 + $0xb8] sm:$0xff]
    %v1726 = vld [vmem:[#allocation2 + $0xc0] sm:$0xff]
    %v1727 = vld [vmem:[#allocation2 + $0xc8] sm:$0xff]
    %v1728 = vld [vmem:[#allocation2 + $0xd0] sm:$0xff]
    %v1729 = vld [vmem:[#allocation2 + $0xd8] sm:$0xff]
    %v1730 = vld [vmem:[#allocation2 + $0xe0] sm:$0xff]
    %v1731 = vld [vmem:[#allocation2 + $0xe8] sm:$0xff]
    %v1732 = vld [vmem:[#allocation2 + $0xf0] sm:$0xff]
    %v1733 = vld [vmem:[#allocation2 + $0xf8] sm:$0xff]
    %v1734 = vld [vmem:[#allocation2 + $0x100] sm:$0xff]
    %v1735 = vld [vmem:[#allocation2 + $0x108] sm:$0xff]
    %v1736 = vld [vmem:[#allocation2 + $0x110] sm:$0xff]
    %v1737 = vld [vmem:[#allocation2 + $0x118] sm:$0xff]
    %v1738 = vld [vmem:[#allocation2 + $0x120] sm:$0xff]
    %v1739 = vld [vmem:[#allocation2 + $0x128] sm:$0xff]
    %v1740 = vld [vmem:[#allocation2 + $0x130] sm:$0xff]
    %v1741 = vld [vmem:[#allocation2 + $0x138] sm:$0xff]
    %v1742 = vld [vmem:[#allocation2 + $0x140] sm:$0xff]
    %v1743 = vld [vmem:[#allocation2 + $0x148] sm:$0xff]
    %v1744 = vld [vmem:[#allocation2 + $0x150] sm:$0xff]
    %v1745 = vld [vmem:[#allocation2 + $0x158] sm:$0xff]
    %v1746 = vld [vmem:[#allocation2 + $0x160] sm:$0xff]
    %v1747 = vld [vmem:[#allocation2 + $0x168] sm:$0xff]
    %v1748 = vld [vmem:[#allocation2 + $0x170] sm:$0xff]
    %v1749 = vld [vmem:[#allocation2 + $0x178] sm:$0xff]
    %v1750 = vld [vmem:[#allocation20] sm:$0xff]
    %v1751 = vld [vmem:[#allocation20 + $0x8] sm:$0xff]
    %v1752 = vld [vmem:[#allocation20 + $0x10] sm:$0xff]
    %v1753 = vld [vmem:[#allocation20 + $0x18] sm:$0xff]
    %v1754 = vld [vmem:[#allocation20 + $0x20] sm:$0xff]
    %v1755 = vld [vmem:[#allocation20 + $0x28] sm:$0xff]
    %v1756 = vld [vmem:[#allocation20 + $0x30] sm:$0xff]
    %v1757 = vld [vmem:[#allocation20 + $0x38] sm:$0xff]
    %v1758 = vld [vmem:[#allocation20 + $0x40] sm:$0xff]
    %v1759 = vld [vmem:[#allocation20 + $0x48] sm:$0xff]
    %v1760 = vld [vmem:[#allocation20 + $0x50] sm:$0xff]
    %v1761 = vld [vmem:[#allocation20 + $0x58] sm:$0xff]
    %v1762 = vld [vmem:[#allocation20 + $0x60] sm:$0xff]
    %v1763 = vld [vmem:[#allocation20 + $0x68] sm:$0xff]
    %v1764 = vld [vmem:[#allocation20 + $0x70] sm:$0xff]
    %v1765 = vld [vmem:[#allocation20 + $0x78] sm:$0xff]
    %v1766 = vld [vmem:[#allocation20 + $0x80] sm:$0xff]
    %v1767 = vld [vmem:[#allocation20 + $0x88] sm:$0xff]
    %v1768 = vld [vmem:[#allocation20 + $0x90] sm:$0xff]
    %v1769 = vld [vmem:[#allocation20 + $0x98] sm:$0xff]
    %v1770 = vld [vmem:[#allocation20 + $0xa0] sm:$0xff]
    %v1771 = vld [vmem:[#allocation20 + $0xa8] sm:$0xff]
    %v1772 = vld [vmem:[#allocation20 + $0xb0] sm:$0xff]
    %v1773 = vld [vmem:[#allocation20 + $0xb8] sm:$0xff]
    %v1774 = vld [vmem:[#allocation20 + $0xc0] sm:$0xff]
    %v1775 = vld [vmem:[#allocation20 + $0xc8] sm:$0xff]
    %v1776 = vld [vmem:[#allocation20 + $0xd0] sm:$0xff]
    %v1777 = vld [vmem:[#allocation20 + $0xd8] sm:$0xff]
    %v1778 = vld [vmem:[#allocation20 + $0xe0] sm:$0xff]
    %v1779 = vld [vmem:[#allocation20 + $0xe8] sm:$0xff]
    %v1780 = vld [vmem:[#allocation20 + $0xf0] sm:$0xff]
    %v1781 = vld [vmem:[#allocation20 + $0xf8] sm:$0xff]
    %v1782 = vld [vmem:[#allocation20 + $0x100] sm:$0xff]
    %v1783 = vld [vmem:[#allocation20 + $0x108] sm:$0xff]
    %v1784 = vld [vmem:[#allocation20 + $0x110] sm:$0xff]
    %v1785 = vld [vmem:[#allocation20 + $0x118] sm:$0xff]
    %v1786 = vld [vmem:[#allocation20 + $0x120] sm:$0xff]
    %v1787 = vld [vmem:[#allocation20 + $0x128] sm:$0xff]
    %v1788 = vld [vmem:[#allocation20 + $0x130] sm:$0xff]
    %v1789 = vld [vmem:[#allocation20 + $0x138] sm:$0xff]
    %v1790 = vld [vmem:[#allocation20 + $0x140] sm:$0xff]
    %v1791 = vld [vmem:[#allocation20 + $0x148] sm:$0xff]
    %v1792 = vld [vmem:[#allocation20 + $0x150] sm:$0xff]
    %v1793 = vld [vmem:[#allocation20 + $0x158] sm:$0xff]
    %v1794 = vld [vmem:[#allocation20 + $0x160] sm:$0xff]
    %v1795 = vld [vmem:[#allocation20 + $0x168] sm:$0xff]
    %v1796 = vld [vmem:[#allocation20 + $0x170] sm:$0xff]
    %v1797 = vld [vmem:[#allocation20 + $0x178] sm:$0xff]
    %v1798 = vld [vmem:[#allocation20 + $0x180] sm:$0xff]
    %v1799 = vld [vmem:[#allocation20 + $0x188] sm:$0xff]
    %v1800 = vld [vmem:[#allocation20 + $0x190] sm:$0xff]
    %v1801 = vld [vmem:[#allocation20 + $0x198] sm:$0xff]
    %v1802 = vld [vmem:[#allocation20 + $0x1a0] sm:$0xff]
    %v1803 = vld [vmem:[#allocation20 + $0x1a8] sm:$0xff]
    %v1804 = vld [vmem:[#allocation20 + $0x1b0] sm:$0xff]
    %v1805 = vld [vmem:[#allocation20 + $0x1b8] sm:$0xff]
    %v1806 = vld [vmem:[#allocation20 + $0x1c0] sm:$0xff]
    %v1807 = vld [vmem:[#allocation20 + $0x1c8] sm:$0xff]
    %v1808 = vld [vmem:[#allocation20 + $0x1d0] sm:$0xff]
    %v1809 = vld [vmem:[#allocation20 + $0x1d8] sm:$0xff]
    %v1810 = vld [vmem:[#allocation20 + $0x1e0] sm:$0xff]
    %v1811 = vld [vmem:[#allocation20 + $0x1e8] sm:$0xff]
    %v1812 = vld [vmem:[#allocation20 + $0x1f0] sm:$0xff]
    %v1813 = vld [vmem:[#allocation20 + $0x1f8] sm:$0xff]
    %1814 = vmatpush.msra.mxu0 %v1780
    %1815 = vmatpush.msra.mxu0 %v1778
    %1816 = vmatpush.msra.mxu0 %v1776
    %1817 = vmatpush.msra.mxu0 %v1774
    %1818 = vmatpush.msra.mxu0 %v1772
    %1819 = vmatpush.msra.mxu0 %v1770
    %1820 = vmatpush.msra.mxu0 %v1768
    %1821 = vmatpush.msra.mxu0 %v1766
    %1822 = vmatpush.msra.mxu0 %v1764
    %1823 = vmatpush.msra.mxu0 %v1762
    %1824 = vmatpush.msra.mxu0 %v1760
    %1825 = vmatpush.msra.mxu0 %v1758
    %1826 = vmatpush.msra.mxu0 %v1756
    %1827 = vmatpush.msra.mxu0 %v1754
    %1828 = vmatpush.msra.mxu0 %v1752
    %1829 = vmatpush.msra.mxu0 %v1750
    %1830 = vmatmul.f32.gmra.mxu0 %v1702
    %v1831 = vpop.f32.mrf.mxu0
    %v1832 = vadd.f32 0.0, %v1831
    %1833 = vmatmul.f32.gmra.mxu0 %v1704
    %v1834 = vpop.f32.mrf.mxu0
    %v1835 = vadd.f32 0.0, %v1834
    %1836 = vmatmul.f32.gmra.mxu0 %v1706
    %v1837 = vpop.f32.mrf.mxu0
    %v1838 = vadd.f32 0.0, %v1837
    %1839 = vmatmul.f32.gmra.mxu0 %v1708
    %v1840 = vpop.f32.mrf.mxu0
    %v1841 = vadd.f32 0.0, %v1840
    %1842 = vmatmul.f32.gmra.mxu0 %v1710
    %v1843 = vpop.f32.mrf.mxu0
    %v1844 = vadd.f32 0.0, %v1843
    %1845 = vmatmul.f32.gmra.mxu0 %v1712
    %v1846 = vpop.f32.mrf.mxu0
    %v1847 = vadd.f32 0.0, %v1846
    %1848 = vmatmul.f32.gmra.mxu0 %v1714
    %v1849 = vpop.f32.mrf.mxu0
    %v1850 = vadd.f32 0.0, %v1849
    %1851 = vmatmul.f32.gmra.mxu0 %v1716
    %v1852 = vpop.f32.mrf.mxu0
    %v1853 = vadd.f32 0.0, %v1852
    %1854 = vmatmul.f32.gmra.mxu0 %v1718
    %v1855 = vpop.f32.mrf.mxu0
    %v1856 = vadd.f32 0.0, %v1855
    %1857 = vmatmul.f32.gmra.mxu0 %v1720
    %v1858 = vpop.f32.mrf.mxu0
    %v1859 = vadd.f32 0.0, %v1858
    %1860 = vmatmul.f32.gmra.mxu0 %v1722
    %v1861 = vpop.f32.mrf.mxu0
    %v1862 = vadd.f32 0.0, %v1861
    %1863 = vmatmul.f32.gmra.mxu0 %v1724
    %v1864 = vpop.f32.mrf.mxu0
    %v1865 = vadd.f32 0.0, %v1864
    %1866 = vmatmul.f32.gmra.mxu0 %v1726
    %v1867 = vpop.f32.mrf.mxu0
    %v1868 = vadd.f32 0.0, %v1867
    %1869 = vmatmul.f32.gmra.mxu0 %v1728
    %v1870 = vpop.f32.mrf.mxu0
    %v1871 = vadd.f32 0.0, %v1870
    %1872 = vmatmul.f32.gmra.mxu0 %v1730
    %v1873 = vpop.f32.mrf.mxu0
    %v1874 = vadd.f32 0.0, %v1873
    %1875 = vmatmul.f32.gmra.mxu0 %v1732
    %v1876 = vpop.f32.mrf.mxu0
    %v1877 = vadd.f32 0.0, %v1876
    %1878 = vmatmul.f32.gmra.mxu0 %v1734
    %v1879 = vpop.f32.mrf.mxu0
    %v1880 = vadd.f32 0.0, %v1879
    %1881 = vmatmul.f32.gmra.mxu0 %v1736
    %v1882 = vpop.f32.mrf.mxu0
    %v1883 = vadd.f32 0.0, %v1882
    %1884 = vmatmul.f32.gmra.mxu0 %v1738
    %v1885 = vpop.f32.mrf.mxu0
    %v1886 = vadd.f32 0.0, %v1885
    %1887 = vmatmul.f32.gmra.mxu0 %v1740
    %v1888 = vpop.f32.mrf.mxu0
    %v1889 = vadd.f32 0.0, %v1888
    %1890 = vmatmul.f32.gmra.mxu0 %v1742
    %v1891 = vpop.f32.mrf.mxu0
    %v1892 = vadd.f32 0.0, %v1891
    %1893 = vmatmul.f32.gmra.mxu0 %v1744
    %v1894 = vpop.f32.mrf.mxu0
    %v1895 = vadd.f32 0.0, %v1894
    %1896 = vmatmul.f32.gmra.mxu0 %v1746
    %v1897 = vpop.f32.mrf.mxu0
    %v1898 = vadd.f32 0.0, %v1897
    %1899 = vmatmul.f32.gmra.mxu0 %v1748
    %v1900 = vpop.f32.mrf.mxu0
    %v1901 = vadd.f32 0.0, %v1900
    %1902 = vdwg.mxu0
    %1903 = vmatpush.msra.mxu0 %v1812
    %1904 = vmatpush.msra.mxu0 %v1810
    %1905 = vmatpush.msra.mxu0 %v1808
    %1906 = vmatpush.msra.mxu0 %v1806
    %1907 = vmatpush.msra.mxu0 %v1804
    %1908 = vmatpush.msra.mxu0 %v1802
    %1909 = vmatpush.msra.mxu0 %v1800
    %1910 = vmatpush.msra.mxu0 %v1798
    %1911 = vmatpush.msra.mxu0 %v1796
    %1912 = vmatpush.msra.mxu0 %v1794
    %1913 = vmatpush.msra.mxu0 %v1792
    %1914 = vmatpush.msra.mxu0 %v1790
    %1915 = vmatpush.msra.mxu0 %v1788
    %1916 = vmatpush.msra.mxu0 %v1786
    %1917 = vmatpush.msra.mxu0 %v1784
    %1918 = vmatpush.msra.mxu0 %v1782
    %1919 = vmatmul.f32.gmra.mxu0 %v1703
    %v1920 = vpop.f32.mrf.mxu0
    %v1921 = vadd.f32 %v1832, %v1920
    %1922 = vmatmul.f32.gmra.mxu0 %v1705
    %v1923 = vpop.f32.mrf.mxu0
    %v1924 = vadd.f32 %v1835, %v1923
    %1925 = vmatmul.f32.gmra.mxu0 %v1707
    %v1926 = vpop.f32.mrf.mxu0
    %v1927 = vadd.f32 %v1838, %v1926
    %1928 = vmatmul.f32.gmra.mxu0 %v1709
    %v1929 = vpop.f32.mrf.mxu0
    %v1930 = vadd.f32 %v1841, %v1929
    %1931 = vmatmul.f32.gmra.mxu0 %v1711
    %v1932 = vpop.f32.mrf.mxu0
    %v1933 = vadd.f32 %v1844, %v1932
    %1934 = vmatmul.f32.gmra.mxu0 %v1713
    %v1935 = vpop.f32.mrf.mxu0
    %v1936 = vadd.f32 %v1847, %v1935
    %1937 = vmatmul.f32.gmra.mxu0 %v1715
    %v1938 = vpop.f32.mrf.mxu0
    %v1939 = vadd.f32 %v1850, %v1938
    %1940 = vmatmul.f32.gmra.mxu0 %v1717
    %v1941 = vpop.f32.mrf.mxu0
    %v1942 = vadd.f32 %v1853, %v1941
    %1943 = vmatmul.f32.gmra.mxu0 %v1719
    %v1944 = vpop.f32.mrf.mxu0
    %v1945 = vadd.f32 %v1856, %v1944
    %1946 = vmatmul.f32.gmra.mxu0 %v1721
    %v1947 = vpop.f32.mrf.mxu0
    %v1948 = vadd.f32 %v1859, %v1947
    %1949 = vmatmul.f32.gmra.mxu0 %v1723
    %v1950 = vpop.f32.mrf.mxu0
    %v1951 = vadd.f32 %v1862, %v1950
    %1952 = vmatmul.f32.gmra.mxu0 %v1725
    %v1953 = vpop.f32.mrf.mxu0
    %v1954 = vadd.f32 %v1865, %v1953
    %1955 = vmatmul.f32.gmra.mxu0 %v1727
    %v1956 = vpop.f32.mrf.mxu0
    %v1957 = vadd.f32 %v1868, %v1956
    %1958 = vmatmul.f32.gmra.mxu0 %v1729
    %v1959 = vpop.f32.mrf.mxu0
    %v1960 = vadd.f32 %v1871, %v1959
    %1961 = vmatmul.f32.gmra.mxu0 %v1731
    %v1962 = vpop.f32.mrf.mxu0
    %v1963 = vadd.f32 %v1874, %v1962
    %1964 = vmatmul.f32.gmra.mxu0 %v1733
    %v1965 = vpop.f32.mrf.mxu0
    %v1966 = vadd.f32 %v1877, %v1965
    %1967 = vmatmul.f32.gmra.mxu0 %v1735
    %v1968 = vpop.f32.mrf.mxu0
    %v1969 = vadd.f32 %v1880, %v1968
    %1970 = vmatmul.f32.gmra.mxu0 %v1737
    %v1971 = vpop.f32.mrf.mxu0
    %v1972 = vadd.f32 %v1883, %v1971
    %1973 = vmatmul.f32.gmra.mxu0 %v1739
    %v1974 = vpop.f32.mrf.mxu0
    %v1975 = vadd.f32 %v1886, %v1974
    %1976 = vmatmul.f32.gmra.mxu0 %v1741
    %v1977 = vpop.f32.mrf.mxu0
    %v1978 = vadd.f32 %v1889, %v1977
    %1979 = vmatmul.f32.gmra.mxu0 %v1743
    %v1980 = vpop.f32.mrf.mxu0
    %v1981 = vadd.f32 %v1892, %v1980
    %1982 = vmatmul.f32.gmra.mxu0 %v1745
    %v1983 = vpop.f32.mrf.mxu0
    %v1984 = vadd.f32 %v1895, %v1983
    %1985 = vmatmul.f32.gmra.mxu0 %v1747
    %v1986 = vpop.f32.mrf.mxu0
    %v1987 = vadd.f32 %v1898, %v1986
    %1988 = vmatmul.f32.gmra.mxu0 %v1749
    %v1989 = vpop.f32.mrf.mxu0
    %v1990 = vadd.f32 %v1901, %v1989
    %1991 = vdwg.mxu0
    %1992 = vmatpush.msra.mxu0 %v1781
    %1993 = vmatpush.msra.mxu0 %v1779
    %1994 = vmatpush.msra.mxu0 %v1777
    %1995 = vmatpush.msra.mxu0 %v1775
    %1996 = vmatpush.msra.mxu0 %v1773
    %1997 = vmatpush.msra.mxu0 %v1771
    %1998 = vmatpush.msra.mxu0 %v1769
    %1999 = vmatpush.msra.mxu0 %v1767
    %2000 = vmatpush.msra.mxu0 %v1765
    %2001 = vmatpush.msra.mxu0 %v1763
    %2002 = vmatpush.msra.mxu0 %v1761
    %2003 = vmatpush.msra.mxu0 %v1759
    %2004 = vmatpush.msra.mxu0 %v1757
    %2005 = vmatpush.msra.mxu0 %v1755
    %2006 = vmatpush.msra.mxu0 %v1753
    %2007 = vmatpush.msra.mxu0 %v1751
    %2008 = vmatmul.f32.gmra.mxu0 %v1702
    %v2009 = vpop.f32.mrf.mxu0
    %v2010 = vadd.f32 0.0, %v2009
    %2011 = vmatmul.f32.gmra.mxu0 %v1704
    %v2012 = vpop.f32.mrf.mxu0
    %v2013 = vadd.f32 0.0, %v2012
    %2014 = vmatmul.f32.gmra.mxu0 %v1706
    %v2015 = vpop.f32.mrf.mxu0
    %v2016 = vadd.f32 0.0, %v2015
    %2017 = vmatmul.f32.gmra.mxu0 %v1708
    %v2018 = vpop.f32.mrf.mxu0
    %v2019 = vadd.f32 0.0, %v2018
    %2020 = vmatmul.f32.gmra.mxu0 %v1710
    %v2021 = vpop.f32.mrf.mxu0
    %v2022 = vadd.f32 0.0, %v2021
    %2023 = vmatmul.f32.gmra.mxu0 %v1712
    %v2024 = vpop.f32.mrf.mxu0
    %v2025 = vadd.f32 0.0, %v2024
    %2026 = vmatmul.f32.gmra.mxu0 %v1714
    %v2027 = vpop.f32.mrf.mxu0
    %v2028 = vadd.f32 0.0, %v2027
    %2029 = vmatmul.f32.gmra.mxu0 %v1716
    %v2030 = vpop.f32.mrf.mxu0
    %v2031 = vadd.f32 0.0, %v2030
    %2032 = vmatmul.f32.gmra.mxu0 %v1718
    %v2033 = vpop.f32.mrf.mxu0
    %v2034 = vadd.f32 0.0, %v2033
    %2035 = vmatmul.f32.gmra.mxu0 %v1720
    %v2036 = vpop.f32.mrf.mxu0
    %v2037 = vadd.f32 0.0, %v2036
    %2038 = vmatmul.f32.gmra.mxu0 %v1722
    %v2039 = vpop.f32.mrf.mxu0
    %v2040 = vadd.f32 0.0, %v2039
    %2041 = vmatmul.f32.gmra.mxu0 %v1724
    %v2042 = vpop.f32.mrf.mxu0
    %v2043 = vadd.f32 0.0, %v2042
    %2044 = vmatmul.f32.gmra.mxu0 %v1726
    %v2045 = vpop.f32.mrf.mxu0
    %v2046 = vadd.f32 0.0, %v2045
    %2047 = vmatmul.f32.gmra.mxu0 %v1728
    %v2048 = vpop.f32.mrf.mxu0
    %v2049 = vadd.f32 0.0, %v2048
    %2050 = vmatmul.f32.gmra.mxu0 %v1730
    %v2051 = vpop.f32.mrf.mxu0
    %v2052 = vadd.f32 0.0, %v2051
    %2053 = vmatmul.f32.gmra.mxu0 %v1732
    %v2054 = vpop.f32.mrf.mxu0
    %v2055 = vadd.f32 0.0, %v2054
    %2056 = vmatmul.f32.gmra.mxu0 %v1734
    %v2057 = vpop.f32.mrf.mxu0
    %v2058 = vadd.f32 0.0, %v2057
    %2059 = vmatmul.f32.gmra.mxu0 %v1736
    %v2060 = vpop.f32.mrf.mxu0
    %v2061 = vadd.f32 0.0, %v2060
    %2062 = vmatmul.f32.gmra.mxu0 %v1738
    %v2063 = vpop.f32.mrf.mxu0
    %v2064 = vadd.f32 0.0, %v2063
    %2065 = vmatmul.f32.gmra.mxu0 %v1740
    %v2066 = vpop.f32.mrf.mxu0
    %v2067 = vadd.f32 0.0, %v2066
    %2068 = vmatmul.f32.gmra.mxu0 %v1742
    %v2069 = vpop.f32.mrf.mxu0
    %v2070 = vadd.f32 0.0, %v2069
    %2071 = vmatmul.f32.gmra.mxu0 %v1744
    %v2072 = vpop.f32.mrf.mxu0
    %v2073 = vadd.f32 0.0, %v2072
    %2074 = vmatmul.f32.gmra.mxu0 %v1746
    %v2075 = vpop.f32.mrf.mxu0
    %v2076 = vadd.f32 0.0, %v2075
    %2077 = vmatmul.f32.gmra.mxu0 %v1748
    %v2078 = vpop.f32.mrf.mxu0
    %v2079 = vadd.f32 0.0, %v2078
    %2080 = vdwg.mxu0
    %2081 = vmatpush.msra.mxu0 %v1813
    %2082 = vmatpush.msra.mxu0 %v1811
    %2083 = vmatpush.msra.mxu0 %v1809
    %2084 = vmatpush.msra.mxu0 %v1807
    %2085 = vmatpush.msra.mxu0 %v1805
    %2086 = vmatpush.msra.mxu0 %v1803
    %2087 = vmatpush.msra.mxu0 %v1801
    %2088 = vmatpush.msra.mxu0 %v1799
    %2089 = vmatpush.msra.mxu0 %v1797
    %2090 = vmatpush.msra.mxu0 %v1795
    %2091 = vmatpush.msra.mxu0 %v1793
    %2092 = vmatpush.msra.mxu0 %v1791
    %2093 = vmatpush.msra.mxu0 %v1789
    %2094 = vmatpush.msra.mxu0 %v1787
    %2095 = vmatpush.msra.mxu0 %v1785
    %2096 = vmatpush.msra.mxu0 %v1783
    %2097 = vmatmul.f32.gmra.mxu0 %v1703
    %v2098 = vpop.f32.mrf.mxu0
    %v2099 = vadd.f32 %v2010, %v2098
    %2100 = vmatmul.f32.gmra.mxu0 %v1705
    %v2101 = vpop.f32.mrf.mxu0
    %v2102 = vadd.f32 %v2013, %v2101
    %2103 = vmatmul.f32.gmra.mxu0 %v1707
    %v2104 = vpop.f32.mrf.mxu0
    %v2105 = vadd.f32 %v2016, %v2104
    %2106 = vmatmul.f32.gmra.mxu0 %v1709
    %v2107 = vpop.f32.mrf.mxu0
    %v2108 = vadd.f32 %v2019, %v2107
    %2109 = vmatmul.f32.gmra.mxu0 %v1711
    %v2110 = vpop.f32.mrf.mxu0
    %v2111 = vadd.f32 %v2022, %v2110
    %2112 = vmatmul.f32.gmra.mxu0 %v1713
    %v2113 = vpop.f32.mrf.mxu0
    %v2114 = vadd.f32 %v2025, %v2113
    %2115 = vmatmul.f32.gmra.mxu0 %v1715
    %v2116 = vpop.f32.mrf.mxu0
    %v2117 = vadd.f32 %v2028, %v2116
    %2118 = vmatmul.f32.gmra.mxu0 %v1717
    %v2119 = vpop.f32.mrf.mxu0
    %v2120 = vadd.f32 %v2031, %v2119
    %2121 = vmatmul.f32.gmra.mxu0 %v1719
    %v2122 = vpop.f32.mrf.mxu0
    %v2123 = vadd.f32 %v2034, %v2122
    %2124 = vmatmul.f32.gmra.mxu0 %v1721
    %v2125 = vpop.f32.mrf.mxu0
    %v2126 = vadd.f32 %v2037, %v2125
    %2127 = vmatmul.f32.gmra.mxu0 %v1723
    %v2128 = vpop.f32.mrf.mxu0
    %v2129 = vadd.f32 %v2040, %v2128
    %2130 = vmatmul.f32.gmra.mxu0 %v1725
    %v2131 = vpop.f32.mrf.mxu0
    %v2132 = vadd.f32 %v2043, %v2131
    %2133 = vmatmul.f32.gmra.mxu0 %v1727
    %v2134 = vpop.f32.mrf.mxu0
    %v2135 = vadd.f32 %v2046, %v2134
    %2136 = vmatmul.f32.gmra.mxu0 %v1729
    %v2137 = vpop.f32.mrf.mxu0
    %v2138 = vadd.f32 %v2049, %v2137
    %2139 = vmatmul.f32.gmra.mxu0 %v1731
    %v2140 = vpop.f32.mrf.mxu0
    %v2141 = vadd.f32 %v2052, %v2140
    %2142 = vmatmul.f32.gmra.mxu0 %v1733
    %v2143 = vpop.f32.mrf.mxu0
    %v2144 = vadd.f32 %v2055, %v2143
    %2145 = vmatmul.f32.gmra.mxu0 %v1735
    %v2146 = vpop.f32.mrf.mxu0
    %v2147 = vadd.f32 %v2058, %v2146
    %2148 = vmatmul.f32.gmra.mxu0 %v1737
    %v2149 = vpop.f32.mrf.mxu0
    %v2150 = vadd.f32 %v2061, %v2149
    %2151 = vmatmul.f32.gmra.mxu0 %v1739
    %v2152 = vpop.f32.mrf.mxu0
    %v2153 = vadd.f32 %v2064, %v2152
    %2154 = vmatmul.f32.gmra.mxu0 %v1741
    %v2155 = vpop.f32.mrf.mxu0
    %v2156 = vadd.f32 %v2067, %v2155
    %2157 = vmatmul.f32.gmra.mxu0 %v1743
    %v2158 = vpop.f32.mrf.mxu0
    %v2159 = vadd.f32 %v2070, %v2158
    %2160 = vmatmul.f32.gmra.mxu0 %v1745
    %v2161 = vpop.f32.mrf.mxu0
    %v2162 = vadd.f32 %v2073, %v2161
    %2163 = vmatmul.f32.gmra.mxu0 %v1747
    %v2164 = vpop.f32.mrf.mxu0
    %v2165 = vadd.f32 %v2076, %v2164
    %2166 = vmatmul.f32.gmra.mxu0 %v1749
    %v2167 = vpop.f32.mrf.mxu0
    %v2168 = vadd.f32 %v2079, %v2167
    %2169 = vdwg.mxu0
    %2170 = vst [vmem:[#allocation5] sm:$0xff] %v1921
    %2171 = vst [vmem:[#allocation5 + $0x8] sm:$0xff] %v2099
    %2172 = vst [vmem:[#allocation5 + $0x10] sm:$0xff] %v1924
    %2173 = vst [vmem:[#allocation5 + $0x18] sm:$0xff] %v2102
    %2174 = vst [vmem:[#allocation5 + $0x20] sm:$0xff] %v1927
    %2175 = vst [vmem:[#allocation5 + $0x28] sm:$0xff] %v2105
    %2176 = vst [vmem:[#allocation5 + $0x30] sm:$0xff] %v1930
    %2177 = vst [vmem:[#allocation5 + $0x38] sm:$0xff] %v2108
    %2178 = vst [vmem:[#allocation5 + $0x40] sm:$0xff] %v1933
    %2179 = vst [vmem:[#allocation5 + $0x48] sm:$0xff] %v2111
    %2180 = vst [vmem:[#allocation5 + $0x50] sm:$0xff] %v1936
    %2181 = vst [vmem:[#allocation5 + $0x58] sm:$0xff] %v2114
    %2182 = vst [vmem:[#allocation5 + $0x60] sm:$0xff] %v1939
    %2183 = vst [vmem:[#allocation5 + $0x68] sm:$0xff] %v2117
    %2184 = vst [vmem:[#allocation5 + $0x70] sm:$0xff] %v1942
    %2185 = vst [vmem:[#allocation5 + $0x78] sm:$0xff] %v2120
    %2186 = vst [vmem:[#allocation5 + $0x80] sm:$0xff] %v1945
    %2187 = vst [vmem:[#allocation5 + $0x88] sm:$0xff] %v2123
    %2188 = vst [vmem:[#allocation5 + $0x90] sm:$0xff] %v1948
    %2189 = vst [vmem:[#allocation5 + $0x98] sm:$0xff] %v2126
    %2190 = vst [vmem:[#allocation5 + $0xa0] sm:$0xff] %v1951
    %2191 = vst [vmem:[#allocation5 + $0xa8] sm:$0xff] %v2129
    %2192 = vst [vmem:[#allocation5 + $0xb0] sm:$0xff] %v1954
    %2193 = vst [vmem:[#allocation5 + $0xb8] sm:$0xff] %v2132
    %2194 = vst [vmem:[#allocation5 + $0xc0] sm:$0xff] %v1957
    %2195 = vst [vmem:[#allocation5 + $0xc8] sm:$0xff] %v2135
    %2196 = vst [vmem:[#allocation5 + $0xd0] sm:$0xff] %v1960
    %2197 = vst [vmem:[#allocation5 + $0xd8] sm:$0xff] %v2138
    %2198 = vst [vmem:[#allocation5 + $0xe0] sm:$0xff] %v1963
    %2199 = vst [vmem:[#allocation5 + $0xe8] sm:$0xff] %v2141
    %2200 = vst [vmem:[#allocation5 + $0xf0] sm:$0xff] %v1966
    %2201 = vst [vmem:[#allocation5 + $0xf8] sm:$0xff] %v2144
    %2202 = vst [vmem:[#allocation5 + $0x100] sm:$0xff] %v1969
    %2203 = vst [vmem:[#allocation5 + $0x108] sm:$0xff] %v2147
    %2204 = vst [vmem:[#allocation5 + $0x110] sm:$0xff] %v1972
    %2205 = vst [vmem:[#allocation5 + $0x118] sm:$0xff] %v2150
    %2206 = vst [vmem:[#allocation5 + $0x120] sm:$0xff] %v1975
    %2207 = vst [vmem:[#allocation5 + $0x128] sm:$0xff] %v2153
    %2208 = vst [vmem:[#allocation5 + $0x130] sm:$0xff] %v1978
    %2209 = vst [vmem:[#allocation5 + $0x138] sm:$0xff] %v2156
    %2210 = vst [vmem:[#allocation5 + $0x140] sm:$0xff] %v1981
    %2211 = vst [vmem:[#allocation5 + $0x148] sm:$0xff] %v2159
    %2212 = vst [vmem:[#allocation5 + $0x150] sm:$0xff] %v1984
    %2213 = vst [vmem:[#allocation5 + $0x158] sm:$0xff] %v2162
    %2214 = vst [vmem:[#allocation5 + $0x160] sm:$0xff] %v1987
    %2215 = vst [vmem:[#allocation5 + $0x168] sm:$0xff] %v2165
    %2216 = vst [vmem:[#allocation5 + $0x170] sm:$0xff] %v1990
    %2217 = vst [vmem:[#allocation5 + $0x178] sm:$0xff] %v2168
    %v2218 = vld [vmem:[#allocation3] sm:$0xff]
    %v2219 = vld [vmem:[#allocation3 + $0x8] sm:$0xff]
    %v2220 = vld [vmem:[#allocation3 + $0x10] sm:$0xff]
    %v2221 = vld [vmem:[#allocation3 + $0x18] sm:$0xff]
    %v2222 = vld [vmem:[#allocation3 + $0x20] sm:$0xff]
    %v2223 = vld [vmem:[#allocation3 + $0x28] sm:$0xff]
    %v2224 = vld [vmem:[#allocation3 + $0x30] sm:$0xff]
    %v2225 = vld [vmem:[#allocation3 + $0x38] sm:$0xff]
    %v2226 = vld [vmem:[#allocation3 + $0x40] sm:$0xff]
    %v2227 = vld [vmem:[#allocation3 + $0x48] sm:$0xff]
    %v2228 = vld [vmem:[#allocation3 + $0x50] sm:$0xff]
    %v2229 = vld [vmem:[#allocation3 + $0x58] sm:$0xff]
    %v2230 = vld [vmem:[#allocation3 + $0x60] sm:$0xff]
    %v2231 = vld [vmem:[#allocation3 + $0x68] sm:$0xff]
    %v2232 = vld [vmem:[#allocation3 + $0x70] sm:$0xff]
    %v2233 = vld [vmem:[#allocation3 + $0x78] sm:$0xff]
    %v2234 = vld [vmem:[#allocation3 + $0x80] sm:$0xff]
    %v2235 = vld [vmem:[#allocation3 + $0x88] sm:$0xff]
    %v2236 = vld [vmem:[#allocation3 + $0x90] sm:$0xff]
    %v2237 = vld [vmem:[#allocation3 + $0x98] sm:$0xff]
    %v2238 = vld [vmem:[#allocation3 + $0xa0] sm:$0xff]
    %v2239 = vld [vmem:[#allocation3 + $0xa8] sm:$0xff]
    %v2240 = vld [vmem:[#allocation3 + $0xb0] sm:$0xff]
    %v2241 = vld [vmem:[#allocation3 + $0xb8] sm:$0xff]
    %v2242 = vld [vmem:[#allocation3 + $0xc0] sm:$0xff]
    %v2243 = vld [vmem:[#allocation3 + $0xc8] sm:$0xff]
    %v2244 = vld [vmem:[#allocation3 + $0xd0] sm:$0xff]
    %v2245 = vld [vmem:[#allocation3 + $0xd8] sm:$0xff]
    %v2246 = vld [vmem:[#allocation3 + $0xe0] sm:$0xff]
    %v2247 = vld [vmem:[#allocation3 + $0xe8] sm:$0xff]
    %v2248 = vld [vmem:[#allocation3 + $0xf0] sm:$0xff]
    %v2249 = vld [vmem:[#allocation3 + $0xf8] sm:$0xff]
    %v2250 = vld [vmem:[#allocation3 + $0x100] sm:$0xff]
    %v2251 = vld [vmem:[#allocation3 + $0x108] sm:$0xff]
    %v2252 = vld [vmem:[#allocation3 + $0x110] sm:$0xff]
    %v2253 = vld [vmem:[#allocation3 + $0x118] sm:$0xff]
    %v2254 = vld [vmem:[#allocation3 + $0x120] sm:$0xff]
    %v2255 = vld [vmem:[#allocation3 + $0x128] sm:$0xff]
    %v2256 = vld [vmem:[#allocation3 + $0x130] sm:$0xff]
    %v2257 = vld [vmem:[#allocation3 + $0x138] sm:$0xff]
    %v2258 = vld [vmem:[#allocation3 + $0x140] sm:$0xff]
    %v2259 = vld [vmem:[#allocation3 + $0x148] sm:$0xff]
    %v2260 = vld [vmem:[#allocation3 + $0x150] sm:$0xff]
    %v2261 = vld [vmem:[#allocation3 + $0x158] sm:$0xff]
    %v2262 = vld [vmem:[#allocation3 + $0x160] sm:$0xff]
    %v2263 = vld [vmem:[#allocation3 + $0x168] sm:$0xff]
    %v2264 = vld [vmem:[#allocation3 + $0x170] sm:$0xff]
    %v2265 = vld [vmem:[#allocation3 + $0x178] sm:$0xff]
    %v2266 = vld [vmem:[#allocation22] sm:$0xff]
    %v2267 = vld [vmem:[#allocation22 + $0x8] sm:$0xff]
    %v2268 = vld [vmem:[#allocation22 + $0x10] sm:$0xff]
    %v2269 = vld [vmem:[#allocation22 + $0x18] sm:$0xff]
    %v2270 = vld [vmem:[#allocation22 + $0x20] sm:$0xff]
    %v2271 = vld [vmem:[#allocation22 + $0x28] sm:$0xff]
    %v2272 = vld [vmem:[#allocation22 + $0x30] sm:$0xff]
    %v2273 = vld [vmem:[#allocation22 + $0x38] sm:$0xff]
    %v2274 = vld [vmem:[#allocation22 + $0x40] sm:$0xff]
    %v2275 = vld [vmem:[#allocation22 + $0x48] sm:$0xff]
    %v2276 = vld [vmem:[#allocation22 + $0x50] sm:$0xff]
    %v2277 = vld [vmem:[#allocation22 + $0x58] sm:$0xff]
    %v2278 = vld [vmem:[#allocation22 + $0x60] sm:$0xff]
    %v2279 = vld [vmem:[#allocation22 + $0x68] sm:$0xff]
    %v2280 = vld [vmem:[#allocation22 + $0x70] sm:$0xff]
    %v2281 = vld [vmem:[#allocation22 + $0x78] sm:$0xff]
    %v2282 = vld [vmem:[#allocation22 + $0x80] sm:$0xff]
    %v2283 = vld [vmem:[#allocation22 + $0x88] sm:$0xff]
    %v2284 = vld [vmem:[#allocation22 + $0x90] sm:$0xff]
    %v2285 = vld [vmem:[#allocation22 + $0x98] sm:$0xff]
    %v2286 = vld [vmem:[#allocation22 + $0xa0] sm:$0xff]
    %v2287 = vld [vmem:[#allocation22 + $0xa8] sm:$0xff]
    %v2288 = vld [vmem:[#allocation22 + $0xb0] sm:$0xff]
    %v2289 = vld [vmem:[#allocation22 + $0xb8] sm:$0xff]
    %v2290 = vld [vmem:[#allocation22 + $0xc0] sm:$0xff]
    %v2291 = vld [vmem:[#allocation22 + $0xc8] sm:$0xff]
    %v2292 = vld [vmem:[#allocation22 + $0xd0] sm:$0xff]
    %v2293 = vld [vmem:[#allocation22 + $0xd8] sm:$0xff]
    %v2294 = vld [vmem:[#allocation22 + $0xe0] sm:$0xff]
    %v2295 = vld [vmem:[#allocation22 + $0xe8] sm:$0xff]
    %v2296 = vld [vmem:[#allocation22 + $0xf0] sm:$0xff]
    %v2297 = vld [vmem:[#allocation22 + $0xf8] sm:$0xff]
    %v2298 = vld [vmem:[#allocation22 + $0x100] sm:$0xff]
    %v2299 = vld [vmem:[#allocation22 + $0x108] sm:$0xff]
    %v2300 = vld [vmem:[#allocation22 + $0x110] sm:$0xff]
    %v2301 = vld [vmem:[#allocation22 + $0x118] sm:$0xff]
    %v2302 = vld [vmem:[#allocation22 + $0x120] sm:$0xff]
    %v2303 = vld [vmem:[#allocation22 + $0x128] sm:$0xff]
    %v2304 = vld [vmem:[#allocation22 + $0x130] sm:$0xff]
    %v2305 = vld [vmem:[#allocation22 + $0x138] sm:$0xff]
    %v2306 = vld [vmem:[#allocation22 + $0x140] sm:$0xff]
    %v2307 = vld [vmem:[#allocation22 + $0x148] sm:$0xff]
    %v2308 = vld [vmem:[#allocation22 + $0x150] sm:$0xff]
    %v2309 = vld [vmem:[#allocation22 + $0x158] sm:$0xff]
    %v2310 = vld [vmem:[#allocation22 + $0x160] sm:$0xff]
    %v2311 = vld [vmem:[#allocation22 + $0x168] sm:$0xff]
    %v2312 = vld [vmem:[#allocation22 + $0x170] sm:$0xff]
    %v2313 = vld [vmem:[#allocation22 + $0x178] sm:$0xff]
    %v2314 = vld [vmem:[#allocation22 + $0x180] sm:$0xff]
    %v2315 = vld [vmem:[#allocation22 + $0x188] sm:$0xff]
    %v2316 = vld [vmem:[#allocation22 + $0x190] sm:$0xff]
    %v2317 = vld [vmem:[#allocation22 + $0x198] sm:$0xff]
    %v2318 = vld [vmem:[#allocation22 + $0x1a0] sm:$0xff]
    %v2319 = vld [vmem:[#allocation22 + $0x1a8] sm:$0xff]
    %v2320 = vld [vmem:[#allocation22 + $0x1b0] sm:$0xff]
    %v2321 = vld [vmem:[#allocation22 + $0x1b8] sm:$0xff]
    %v2322 = vld [vmem:[#allocation22 + $0x1c0] sm:$0xff]
    %v2323 = vld [vmem:[#allocation22 + $0x1c8] sm:$0xff]
    %v2324 = vld [vmem:[#allocation22 + $0x1d0] sm:$0xff]
    %v2325 = vld [vmem:[#allocation22 + $0x1d8] sm:$0xff]
    %v2326 = vld [vmem:[#allocation22 + $0x1e0] sm:$0xff]
    %v2327 = vld [vmem:[#allocation22 + $0x1e8] sm:$0xff]
    %v2328 = vld [vmem:[#allocation22 + $0x1f0] sm:$0xff]
    %v2329 = vld [vmem:[#allocation22 + $0x1f8] sm:$0xff]
    %2330 = vmatpush.msra.mxu0 %v2296
    %2331 = vmatpush.msra.mxu0 %v2294
    %2332 = vmatpush.msra.mxu0 %v2292
    %2333 = vmatpush.msra.mxu0 %v2290
    %2334 = vmatpush.msra.mxu0 %v2288
    %2335 = vmatpush.msra.mxu0 %v2286
    %2336 = vmatpush.msra.mxu0 %v2284
    %2337 = vmatpush.msra.mxu0 %v2282
    %2338 = vmatpush.msra.mxu0 %v2280
    %2339 = vmatpush.msra.mxu0 %v2278
    %2340 = vmatpush.msra.mxu0 %v2276
    %2341 = vmatpush.msra.mxu0 %v2274
    %2342 = vmatpush.msra.mxu0 %v2272
    %2343 = vmatpush.msra.mxu0 %v2270
    %2344 = vmatpush.msra.mxu0 %v2268
    %2345 = vmatpush.msra.mxu0 %v2266
    %2346 = vmatmul.f32.gmra.mxu0 %v2218
    %v2347 = vpop.f32.mrf.mxu0
    %v2348 = vadd.f32 0.0, %v2347
    %2349 = vmatmul.f32.gmra.mxu0 %v2220
    %v2350 = vpop.f32.mrf.mxu0
    %v2351 = vadd.f32 0.0, %v2350
    %2352 = vmatmul.f32.gmra.mxu0 %v2222
    %v2353 = vpop.f32.mrf.mxu0
    %v2354 = vadd.f32 0.0, %v2353
    %2355 = vmatmul.f32.gmra.mxu0 %v2224
    %v2356 = vpop.f32.mrf.mxu0
    %v2357 = vadd.f32 0.0, %v2356
    %2358 = vmatmul.f32.gmra.mxu0 %v2226
    %v2359 = vpop.f32.mrf.mxu0
    %v2360 = vadd.f32 0.0, %v2359
    %2361 = vmatmul.f32.gmra.mxu0 %v2228
    %v2362 = vpop.f32.mrf.mxu0
    %v2363 = vadd.f32 0.0, %v2362
    %2364 = vmatmul.f32.gmra.mxu0 %v2230
    %v2365 = vpop.f32.mrf.mxu0
    %v2366 = vadd.f32 0.0, %v2365
    %2367 = vmatmul.f32.gmra.mxu0 %v2232
    %v2368 = vpop.f32.mrf.mxu0
    %v2369 = vadd.f32 0.0, %v2368
    %2370 = vmatmul.f32.gmra.mxu0 %v2234
    %v2371 = vpop.f32.mrf.mxu0
    %v2372 = vadd.f32 0.0, %v2371
    %2373 = vmatmul.f32.gmra.mxu0 %v2236
    %v2374 = vpop.f32.mrf.mxu0
    %v2375 = vadd.f32 0.0, %v2374
    %2376 = vmatmul.f32.gmra.mxu0 %v2238
    %v2377 = vpop.f32.mrf.mxu0
    %v2378 = vadd.f32 0.0, %v2377
    %2379 = vmatmul.f32.gmra.mxu0 %v2240
    %v2380 = vpop.f32.mrf.mxu0
    %v2381 = vadd.f32 0.0, %v2380
    %2382 = vmatmul.f32.gmra.mxu0 %v2242
    %v2383 = vpop.f32.mrf.mxu0
    %v2384 = vadd.f32 0.0, %v2383
    %2385 = vmatmul.f32.gmra.mxu0 %v2244
    %v2386 = vpop.f32.mrf.mxu0
    %v2387 = vadd.f32 0.0, %v2386
    %2388 = vmatmul.f32.gmra.mxu0 %v2246
    %v2389 = vpop.f32.mrf.mxu0
    %v2390 = vadd.f32 0.0, %v2389
    %2391 = vmatmul.f32.gmra.mxu0 %v2248
    %v2392 = vpop.f32.mrf.mxu0
    %v2393 = vadd.f32 0.0, %v2392
    %2394 = vmatmul.f32.gmra.mxu0 %v2250
    %v2395 = vpop.f32.mrf.mxu0
    %v2396 = vadd.f32 0.0, %v2395
    %2397 = vmatmul.f32.gmra.mxu0 %v2252
    %v2398 = vpop.f32.mrf.mxu0
    %v2399 = vadd.f32 0.0, %v2398
    %2400 = vmatmul.f32.gmra.mxu0 %v2254
    %v2401 = vpop.f32.mrf.mxu0
    %v2402 = vadd.f32 0.0, %v2401
    %2403 = vmatmul.f32.gmra.mxu0 %v2256
    %v2404 = vpop.f32.mrf.mxu0
    %v2405 = vadd.f32 0.0, %v2404
    %2406 = vmatmul.f32.gmra.mxu0 %v2258
    %v2407 = vpop.f32.mrf.mxu0
    %v2408 = vadd.f32 0.0, %v2407
    %2409 = vmatmul.f32.gmra.mxu0 %v2260
    %v2410 = vpop.f32.mrf.mxu0
    %v2411 = vadd.f32 0.0, %v2410
    %2412 = vmatmul.f32.gmra.mxu0 %v2262
    %v2413 = vpop.f32.mrf.mxu0
    %v2414 = vadd.f32 0.0, %v2413
    %2415 = vmatmul.f32.gmra.mxu0 %v2264
    %v2416 = vpop.f32.mrf.mxu0
    %v2417 = vadd.f32 0.0, %v2416
    %2418 = vdwg.mxu0
    %2419 = vmatpush.msra.mxu0 %v2328
    %2420 = vmatpush.msra.mxu0 %v2326
    %2421 = vmatpush.msra.mxu0 %v2324
    %2422 = vmatpush.msra.mxu0 %v2322
    %2423 = vmatpush.msra.mxu0 %v2320
    %2424 = vmatpush.msra.mxu0 %v2318
    %2425 = vmatpush.msra.mxu0 %v2316
    %2426 = vmatpush.msra.mxu0 %v2314
    %2427 = vmatpush.msra.mxu0 %v2312
    %2428 = vmatpush.msra.mxu0 %v2310
    %2429 = vmatpush.msra.mxu0 %v2308
    %2430 = vmatpush.msra.mxu0 %v2306
    %2431 = vmatpush.msra.mxu0 %v2304
    %2432 = vmatpush.msra.mxu0 %v2302
    %2433 = vmatpush.msra.mxu0 %v2300
    %2434 = vmatpush.msra.mxu0 %v2298
    %2435 = vmatmul.f32.gmra.mxu0 %v2219
    %v2436 = vpop.f32.mrf.mxu0
    %v2437 = vadd.f32 %v2348, %v2436
    %2438 = vmatmul.f32.gmra.mxu0 %v2221
    %v2439 = vpop.f32.mrf.mxu0
    %v2440 = vadd.f32 %v2351, %v2439
    %2441 = vmatmul.f32.gmra.mxu0 %v2223
    %v2442 = vpop.f32.mrf.mxu0
    %v2443 = vadd.f32 %v2354, %v2442
    %2444 = vmatmul.f32.gmra.mxu0 %v2225
    %v2445 = vpop.f32.mrf.mxu0
    %v2446 = vadd.f32 %v2357, %v2445
    %2447 = vmatmul.f32.gmra.mxu0 %v2227
    %v2448 = vpop.f32.mrf.mxu0
    %v2449 = vadd.f32 %v2360, %v2448
    %2450 = vmatmul.f32.gmra.mxu0 %v2229
    %v2451 = vpop.f32.mrf.mxu0
    %v2452 = vadd.f32 %v2363, %v2451
    %2453 = vmatmul.f32.gmra.mxu0 %v2231
    %v2454 = vpop.f32.mrf.mxu0
    %v2455 = vadd.f32 %v2366, %v2454
    %2456 = vmatmul.f32.gmra.mxu0 %v2233
    %v2457 = vpop.f32.mrf.mxu0
    %v2458 = vadd.f32 %v2369, %v2457
    %2459 = vmatmul.f32.gmra.mxu0 %v2235
    %v2460 = vpop.f32.mrf.mxu0
    %v2461 = vadd.f32 %v2372, %v2460
    %2462 = vmatmul.f32.gmra.mxu0 %v2237
    %v2463 = vpop.f32.mrf.mxu0
    %v2464 = vadd.f32 %v2375, %v2463
    %2465 = vmatmul.f32.gmra.mxu0 %v2239
    %v2466 = vpop.f32.mrf.mxu0
    %v2467 = vadd.f32 %v2378, %v2466
    %2468 = vmatmul.f32.gmra.mxu0 %v2241
    %v2469 = vpop.f32.mrf.mxu0
    %v2470 = vadd.f32 %v2381, %v2469
    %2471 = vmatmul.f32.gmra.mxu0 %v2243
    %v2472 = vpop.f32.mrf.mxu0
    %v2473 = vadd.f32 %v2384, %v2472
    %2474 = vmatmul.f32.gmra.mxu0 %v2245
    %v2475 = vpop.f32.mrf.mxu0
    %v2476 = vadd.f32 %v2387, %v2475
    %2477 = vmatmul.f32.gmra.mxu0 %v2247
    %v2478 = vpop.f32.mrf.mxu0
    %v2479 = vadd.f32 %v2390, %v2478
    %2480 = vmatmul.f32.gmra.mxu0 %v2249
    %v2481 = vpop.f32.mrf.mxu0
    %v2482 = vadd.f32 %v2393, %v2481
    %2483 = vmatmul.f32.gmra.mxu0 %v2251
    %v2484 = vpop.f32.mrf.mxu0
    %v2485 = vadd.f32 %v2396, %v2484
    %2486 = vmatmul.f32.gmra.mxu0 %v2253
    %v2487 = vpop.f32.mrf.mxu0
    %v2488 = vadd.f32 %v2399, %v2487
    %2489 = vmatmul.f32.gmra.mxu0 %v2255
    %v2490 = vpop.f32.mrf.mxu0
    %v2491 = vadd.f32 %v2402, %v2490
    %2492 = vmatmul.f32.gmra.mxu0 %v2257
    %v2493 = vpop.f32.mrf.mxu0
    %v2494 = vadd.f32 %v2405, %v2493
    %2495 = vmatmul.f32.gmra.mxu0 %v2259
    %v2496 = vpop.f32.mrf.mxu0
    %v2497 = vadd.f32 %v2408, %v2496
    %2498 = vmatmul.f32.gmra.mxu0 %v2261
    %v2499 = vpop.f32.mrf.mxu0
    %v2500 = vadd.f32 %v2411, %v2499
    %2501 = vmatmul.f32.gmra.mxu0 %v2263
    %v2502 = vpop.f32.mrf.mxu0
    %v2503 = vadd.f32 %v2414, %v2502
    %2504 = vmatmul.f32.gmra.mxu0 %v2265
    %v2505 = vpop.f32.mrf.mxu0
    %v2506 = vadd.f32 %v2417, %v2505
    %2507 = vdwg.mxu0
    %2508 = vmatpush.msra.mxu0 %v2297
    %2509 = vmatpush.msra.mxu0 %v2295
    %2510 = vmatpush.msra.mxu0 %v2293
    %2511 = vmatpush.msra.mxu0 %v2291
    %2512 = vmatpush.msra.mxu0 %v2289
    %2513 = vmatpush.msra.mxu0 %v2287
    %2514 = vmatpush.msra.mxu0 %v2285
    %2515 = vmatpush.msra.mxu0 %v2283
    %2516 = vmatpush.msra.mxu0 %v2281
    %2517 = vmatpush.msra.mxu0 %v2279
    %2518 = vmatpush.msra.mxu0 %v2277
    %2519 = vmatpush.msra.mxu0 %v2275
    %2520 = vmatpush.msra.mxu0 %v2273
    %2521 = vmatpush.msra.mxu0 %v2271
    %2522 = vmatpush.msra.mxu0 %v2269
    %2523 = vmatpush.msra.mxu0 %v2267
    %2524 = vmatmul.f32.gmra.mxu0 %v2218
    %v2525 = vpop.f32.mrf.mxu0
    %v2526 = vadd.f32 0.0, %v2525
    %2527 = vmatmul.f32.gmra.mxu0 %v2220
    %v2528 = vpop.f32.mrf.mxu0
    %v2529 = vadd.f32 0.0, %v2528
    %2530 = vmatmul.f32.gmra.mxu0 %v2222
    %v2531 = vpop.f32.mrf.mxu0
    %v2532 = vadd.f32 0.0, %v2531
    %2533 = vmatmul.f32.gmra.mxu0 %v2224
    %v2534 = vpop.f32.mrf.mxu0
    %v2535 = vadd.f32 0.0, %v2534
    %2536 = vmatmul.f32.gmra.mxu0 %v2226
    %v2537 = vpop.f32.mrf.mxu0
    %v2538 = vadd.f32 0.0, %v2537
    %2539 = vmatmul.f32.gmra.mxu0 %v2228
    %v2540 = vpop.f32.mrf.mxu0
    %v2541 = vadd.f32 0.0, %v2540
    %2542 = vmatmul.f32.gmra.mxu0 %v2230
    %v2543 = vpop.f32.mrf.mxu0
    %v2544 = vadd.f32 0.0, %v2543
    %2545 = vmatmul.f32.gmra.mxu0 %v2232
    %v2546 = vpop.f32.mrf.mxu0
    %v2547 = vadd.f32 0.0, %v2546
    %2548 = vmatmul.f32.gmra.mxu0 %v2234
    %v2549 = vpop.f32.mrf.mxu0
    %v2550 = vadd.f32 0.0, %v2549
    %2551 = vmatmul.f32.gmra.mxu0 %v2236
    %v2552 = vpop.f32.mrf.mxu0
    %v2553 = vadd.f32 0.0, %v2552
    %2554 = vmatmul.f32.gmra.mxu0 %v2238
    %v2555 = vpop.f32.mrf.mxu0
    %v2556 = vadd.f32 0.0, %v2555
    %2557 = vmatmul.f32.gmra.mxu0 %v2240
    %v2558 = vpop.f32.mrf.mxu0
    %v2559 = vadd.f32 0.0, %v2558
    %2560 = vmatmul.f32.gmra.mxu0 %v2242
    %v2561 = vpop.f32.mrf.mxu0
    %v2562 = vadd.f32 0.0, %v2561
    %2563 = vmatmul.f32.gmra.mxu0 %v2244
    %v2564 = vpop.f32.mrf.mxu0
    %v2565 = vadd.f32 0.0, %v2564
    %2566 = vmatmul.f32.gmra.mxu0 %v2246
    %v2567 = vpop.f32.mrf.mxu0
    %v2568 = vadd.f32 0.0, %v2567
    %2569 = vmatmul.f32.gmra.mxu0 %v2248
    %v2570 = vpop.f32.mrf.mxu0
    %v2571 = vadd.f32 0.0, %v2570
    %2572 = vmatmul.f32.gmra.mxu0 %v2250
    %v2573 = vpop.f32.mrf.mxu0
    %v2574 = vadd.f32 0.0, %v2573
    %2575 = vmatmul.f32.gmra.mxu0 %v2252
    %v2576 = vpop.f32.mrf.mxu0
    %v2577 = vadd.f32 0.0, %v2576
    %2578 = vmatmul.f32.gmra.mxu0 %v2254
    %v2579 = vpop.f32.mrf.mxu0
    %v2580 = vadd.f32 0.0, %v2579
    %2581 = vmatmul.f32.gmra.mxu0 %v2256
    %v2582 = vpop.f32.mrf.mxu0
    %v2583 = vadd.f32 0.0, %v2582
    %2584 = vmatmul.f32.gmra.mxu0 %v2258
    %v2585 = vpop.f32.mrf.mxu0
    %v2586 = vadd.f32 0.0, %v2585
    %2587 = vmatmul.f32.gmra.mxu0 %v2260
    %v2588 = vpop.f32.mrf.mxu0
    %v2589 = vadd.f32 0.0, %v2588
    %2590 = vmatmul.f32.gmra.mxu0 %v2262
    %v2591 = vpop.f32.mrf.mxu0
    %v2592 = vadd.f32 0.0, %v2591
    %2593 = vmatmul.f32.gmra.mxu0 %v2264
    %v2594 = vpop.f32.mrf.mxu0
    %v2595 = vadd.f32 0.0, %v2594
    %2596 = vdwg.mxu0
    %2597 = vmatpush.msra.mxu0 %v2329
    %2598 = vmatpush.msra.mxu0 %v2327
    %2599 = vmatpush.msra.mxu0 %v2325
    %2600 = vmatpush.msra.mxu0 %v2323
    %2601 = vmatpush.msra.mxu0 %v2321
    %2602 = vmatpush.msra.mxu0 %v2319
    %2603 = vmatpush.msra.mxu0 %v2317
    %2604 = vmatpush.msra.mxu0 %v2315
    %2605 = vmatpush.msra.mxu0 %v2313
    %2606 = vmatpush.msra.mxu0 %v2311
    %2607 = vmatpush.msra.mxu0 %v2309
    %2608 = vmatpush.msra.mxu0 %v2307
    %2609 = vmatpush.msra.mxu0 %v2305
    %2610 = vmatpush.msra.mxu0 %v2303
    %2611 = vmatpush.msra.mxu0 %v2301
    %2612 = vmatpush.msra.mxu0 %v2299
    %2613 = vmatmul.f32.gmra.mxu0 %v2219
    %v2614 = vpop.f32.mrf.mxu0
    %v2615 = vadd.f32 %v2526, %v2614
    %2616 = vmatmul.f32.gmra.mxu0 %v2221
    %v2617 = vpop.f32.mrf.mxu0
    %v2618 = vadd.f32 %v2529, %v2617
    %2619 = vmatmul.f32.gmra.mxu0 %v2223
    %v2620 = vpop.f32.mrf.mxu0
    %v2621 = vadd.f32 %v2532, %v2620
    %2622 = vmatmul.f32.gmra.mxu0 %v2225
    %v2623 = vpop.f32.mrf.mxu0
    %v2624 = vadd.f32 %v2535, %v2623
    %2625 = vmatmul.f32.gmra.mxu0 %v2227
    %v2626 = vpop.f32.mrf.mxu0
    %v2627 = vadd.f32 %v2538, %v2626
    %2628 = vmatmul.f32.gmra.mxu0 %v2229
    %v2629 = vpop.f32.mrf.mxu0
    %v2630 = vadd.f32 %v2541, %v2629
    %2631 = vmatmul.f32.gmra.mxu0 %v2231
    %v2632 = vpop.f32.mrf.mxu0
    %v2633 = vadd.f32 %v2544, %v2632
    %2634 = vmatmul.f32.gmra.mxu0 %v2233
    %v2635 = vpop.f32.mrf.mxu0
    %v2636 = vadd.f32 %v2547, %v2635
    %2637 = vmatmul.f32.gmra.mxu0 %v2235
    %v2638 = vpop.f32.mrf.mxu0
    %v2639 = vadd.f32 %v2550, %v2638
    %2640 = vmatmul.f32.gmra.mxu0 %v2237
    %v2641 = vpop.f32.mrf.mxu0
    %v2642 = vadd.f32 %v2553, %v2641
    %2643 = vmatmul.f32.gmra.mxu0 %v2239
    %v2644 = vpop.f32.mrf.mxu0
    %v2645 = vadd.f32 %v2556, %v2644
    %2646 = vmatmul.f32.gmra.mxu0 %v2241
    %v2647 = vpop.f32.mrf.mxu0
    %v2648 = vadd.f32 %v2559, %v2647
    %2649 = vmatmul.f32.gmra.mxu0 %v2243
    %v2650 = vpop.f32.mrf.mxu0
    %v2651 = vadd.f32 %v2562, %v2650
    %2652 = vmatmul.f32.gmra.mxu0 %v2245
    %v2653 = vpop.f32.mrf.mxu0
    %v2654 = vadd.f32 %v2565, %v2653
    %2655 = vmatmul.f32.gmra.mxu0 %v2247
    %v2656 = vpop.f32.mrf.mxu0
    %v2657 = vadd.f32 %v2568, %v2656
    %2658 = vmatmul.f32.gmra.mxu0 %v2249
    %v2659 = vpop.f32.mrf.mxu0
    %v2660 = vadd.f32 %v2571, %v2659
    %2661 = vmatmul.f32.gmra.mxu0 %v2251
    %v2662 = vpop.f32.mrf.mxu0
    %v2663 = vadd.f32 %v2574, %v2662
    %2664 = vmatmul.f32.gmra.mxu0 %v2253
    %v2665 = vpop.f32.mrf.mxu0
    %v2666 = vadd.f32 %v2577, %v2665
    %2667 = vmatmul.f32.gmra.mxu0 %v2255
    %v2668 = vpop.f32.mrf.mxu0
    %v2669 = vadd.f32 %v2580, %v2668
    %2670 = vmatmul.f32.gmra.mxu0 %v2257
    %v2671 = vpop.f32.mrf.mxu0
    %v2672 = vadd.f32 %v2583, %v2671
    %2673 = vmatmul.f32.gmra.mxu0 %v2259
    %v2674 = vpop.f32.mrf.mxu0
    %v2675 = vadd.f32 %v2586, %v2674
    %2676 = vmatmul.f32.gmra.mxu0 %v2261
    %v2677 = vpop.f32.mrf.mxu0
    %v2678 = vadd.f32 %v2589, %v2677
    %2679 = vmatmul.f32.gmra.mxu0 %v2263
    %v2680 = vpop.f32.mrf.mxu0
    %v2681 = vadd.f32 %v2592, %v2680
    %2682 = vmatmul.f32.gmra.mxu0 %v2265
    %v2683 = vpop.f32.mrf.mxu0
    %v2684 = vadd.f32 %v2595, %v2683
    %2685 = vdwg.mxu0
    %2686 = vst [vmem:[#allocation6] sm:$0xff] %v2437
    %2687 = vst [vmem:[#allocation6 + $0x8] sm:$0xff] %v2615
    %2688 = vst [vmem:[#allocation6 + $0x10] sm:$0xff] %v2440
    %2689 = vst [vmem:[#allocation6 + $0x18] sm:$0xff] %v2618
    %2690 = vst [vmem:[#allocation6 + $0x20] sm:$0xff] %v2443
    %2691 = vst [vmem:[#allocation6 + $0x28] sm:$0xff] %v2621
    %2692 = vst [vmem:[#allocation6 + $0x30] sm:$0xff] %v2446
    %2693 = vst [vmem:[#allocation6 + $0x38] sm:$0xff] %v2624
    %2694 = vst [vmem:[#allocation6 + $0x40] sm:$0xff] %v2449
    %2695 = vst [vmem:[#allocation6 + $0x48] sm:$0xff] %v2627
    %2696 = vst [vmem:[#allocation6 + $0x50] sm:$0xff] %v2452
    %2697 = vst [vmem:[#allocation6 + $0x58] sm:$0xff] %v2630
    %2698 = vst [vmem:[#allocation6 + $0x60] sm:$0xff] %v2455
    %2699 = vst [vmem:[#allocation6 + $0x68] sm:$0xff] %v2633
    %2700 = vst [vmem:[#allocation6 + $0x70] sm:$0xff] %v2458
    %2701 = vst [vmem:[#allocation6 + $0x78] sm:$0xff] %v2636
    %2702 = vst [vmem:[#allocation6 + $0x80] sm:$0xff] %v2461
    %2703 = vst [vmem:[#allocation6 + $0x88] sm:$0xff] %v2639
    %2704 = vst [vmem:[#allocation6 + $0x90] sm:$0xff] %v2464
    %2705 = vst [vmem:[#allocation6 + $0x98] sm:$0xff] %v2642
    %2706 = vst [vmem:[#allocation6 + $0xa0] sm:$0xff] %v2467
    %2707 = vst [vmem:[#allocation6 + $0xa8] sm:$0xff] %v2645
    %2708 = vst [vmem:[#allocation6 + $0xb0] sm:$0xff] %v2470
    %2709 = vst [vmem:[#allocation6 + $0xb8] sm:$0xff] %v2648
    %2710 = vst [vmem:[#allocation6 + $0xc0] sm:$0xff] %v2473
    %2711 = vst [vmem:[#allocation6 + $0xc8] sm:$0xff] %v2651
    %2712 = vst [vmem:[#allocation6 + $0xd0] sm:$0xff] %v2476
    %2713 = vst [vmem:[#allocation6 + $0xd8] sm:$0xff] %v2654
    %2714 = vst [vmem:[#allocation6 + $0xe0] sm:$0xff] %v2479
    %2715 = vst [vmem:[#allocation6 + $0xe8] sm:$0xff] %v2657
    %2716 = vst [vmem:[#allocation6 + $0xf0] sm:$0xff] %v2482
    %2717 = vst [vmem:[#allocation6 + $0xf8] sm:$0xff] %v2660
    %2718 = vst [vmem:[#allocation6 + $0x100] sm:$0xff] %v2485
    %2719 = vst [vmem:[#allocation6 + $0x108] sm:$0xff] %v2663
    %2720 = vst [vmem:[#allocation6 + $0x110] sm:$0xff] %v2488
    %2721 = vst [vmem:[#allocation6 + $0x118] sm:$0xff] %v2666
    %2722 = vst [vmem:[#allocation6 + $0x120] sm:$0xff] %v2491
    %2723 = vst [vmem:[#allocation6 + $0x128] sm:$0xff] %v2669
    %2724 = vst [vmem:[#allocation6 + $0x130] sm:$0xff] %v2494
    %2725 = vst [vmem:[#allocation6 + $0x138] sm:$0xff] %v2672
    %2726 = vst [vmem:[#allocation6 + $0x140] sm:$0xff] %v2497
    %2727 = vst [vmem:[#allocation6 + $0x148] sm:$0xff] %v2675
    %2728 = vst [vmem:[#allocation6 + $0x150] sm:$0xff] %v2500
    %2729 = vst [vmem:[#allocation6 + $0x158] sm:$0xff] %v2678
    %2730 = vst [vmem:[#allocation6 + $0x160] sm:$0xff] %v2503
    %2731 = vst [vmem:[#allocation6 + $0x168] sm:$0xff] %v2681
    %2732 = vst [vmem:[#allocation6 + $0x170] sm:$0xff] %v2506
    %2733 = vst [vmem:[#allocation6 + $0x178] sm:$0xff] %v2684
    %v2734 = vld [vmem:[#allocation4] sm:$0xff]
    %v2735 = vld [vmem:[#allocation4 + $0x8] sm:$0xff]
    %v2736 = vld [vmem:[#allocation4 + $0x10] sm:$0xff]
    %v2737 = vld [vmem:[#allocation4 + $0x18] sm:$0xff]
    %v2738 = vld [vmem:[#allocation4 + $0x20] sm:$0xff]
    %v2739 = vld [vmem:[#allocation4 + $0x28] sm:$0xff]
    %v2740 = vld [vmem:[#allocation4 + $0x30] sm:$0xff]
    %v2741 = vld [vmem:[#allocation4 + $0x38] sm:$0xff]
    %v2742 = vld [vmem:[#allocation4 + $0x40] sm:$0xff]
    %v2743 = vld [vmem:[#allocation4 + $0x48] sm:$0xff]
    %v2744 = vld [vmem:[#allocation4 + $0x50] sm:$0xff]
    %v2745 = vld [vmem:[#allocation4 + $0x58] sm:$0xff]
    %v2746 = vld [vmem:[#allocation4 + $0x60] sm:$0xff]
    %v2747 = vld [vmem:[#allocation4 + $0x68] sm:$0xff]
    %v2748 = vld [vmem:[#allocation4 + $0x70] sm:$0xff]
    %v2749 = vld [vmem:[#allocation4 + $0x78] sm:$0xff]
    %v2750 = vld [vmem:[#allocation4 + $0x80] sm:$0xff]
    %v2751 = vld [vmem:[#allocation4 + $0x88] sm:$0xff]
    %v2752 = vld [vmem:[#allocation4 + $0x90] sm:$0xff]
    %v2753 = vld [vmem:[#allocation4 + $0x98] sm:$0xff]
    %v2754 = vld [vmem:[#allocation4 + $0xa0] sm:$0xff]
    %v2755 = vld [vmem:[#allocation4 + $0xa8] sm:$0xff]
    %v2756 = vld [vmem:[#allocation4 + $0xb0] sm:$0xff]
    %v2757 = vld [vmem:[#allocation4 + $0xb8] sm:$0xff]
    %v2758 = vld [vmem:[#allocation4 + $0xc0] sm:$0xff]
    %v2759 = vld [vmem:[#allocation4 + $0xc8] sm:$0xff]
    %v2760 = vld [vmem:[#allocation4 + $0xd0] sm:$0xff]
    %v2761 = vld [vmem:[#allocation4 + $0xd8] sm:$0xff]
    %v2762 = vld [vmem:[#allocation4 + $0xe0] sm:$0xff]
    %v2763 = vld [vmem:[#allocation4 + $0xe8] sm:$0xff]
    %v2764 = vld [vmem:[#allocation4 + $0xf0] sm:$0xff]
    %v2765 = vld [vmem:[#allocation4 + $0xf8] sm:$0xff]
    %v2766 = vld [vmem:[#allocation4 + $0x100] sm:$0xff]
    %v2767 = vld [vmem:[#allocation4 + $0x108] sm:$0xff]
    %v2768 = vld [vmem:[#allocation4 + $0x110] sm:$0xff]
    %v2769 = vld [vmem:[#allocation4 + $0x118] sm:$0xff]
    %v2770 = vld [vmem:[#allocation4 + $0x120] sm:$0xff]
    %v2771 = vld [vmem:[#allocation4 + $0x128] sm:$0xff]
    %v2772 = vld [vmem:[#allocation4 + $0x130] sm:$0xff]
    %v2773 = vld [vmem:[#allocation4 + $0x138] sm:$0xff]
    %v2774 = vld [vmem:[#allocation4 + $0x140] sm:$0xff]
    %v2775 = vld [vmem:[#allocation4 + $0x148] sm:$0xff]
    %v2776 = vld [vmem:[#allocation4 + $0x150] sm:$0xff]
    %v2777 = vld [vmem:[#allocation4 + $0x158] sm:$0xff]
    %v2778 = vld [vmem:[#allocation4 + $0x160] sm:$0xff]
    %v2779 = vld [vmem:[#allocation4 + $0x168] sm:$0xff]
    %v2780 = vld [vmem:[#allocation4 + $0x170] sm:$0xff]
    %v2781 = vld [vmem:[#allocation4 + $0x178] sm:$0xff]
    %v2782 = vld [vmem:[#allocation23] sm:$0xff]
    %v2783 = vld [vmem:[#allocation23 + $0x8] sm:$0xff]
    %v2784 = vld [vmem:[#allocation23 + $0x10] sm:$0xff]
    %v2785 = vld [vmem:[#allocation23 + $0x18] sm:$0xff]
    %v2786 = vld [vmem:[#allocation23 + $0x20] sm:$0xff]
    %v2787 = vld [vmem:[#allocation23 + $0x28] sm:$0xff]
    %v2788 = vld [vmem:[#allocation23 + $0x30] sm:$0xff]
    %v2789 = vld [vmem:[#allocation23 + $0x38] sm:$0xff]
    %v2790 = vld [vmem:[#allocation23 + $0x40] sm:$0xff]
    %v2791 = vld [vmem:[#allocation23 + $0x48] sm:$0xff]
    %v2792 = vld [vmem:[#allocation23 + $0x50] sm:$0xff]
    %v2793 = vld [vmem:[#allocation23 + $0x58] sm:$0xff]
    %v2794 = vld [vmem:[#allocation23 + $0x60] sm:$0xff]
    %v2795 = vld [vmem:[#allocation23 + $0x68] sm:$0xff]
    %v2796 = vld [vmem:[#allocation23 + $0x70] sm:$0xff]
    %v2797 = vld [vmem:[#allocation23 + $0x78] sm:$0xff]
    %v2798 = vld [vmem:[#allocation23 + $0x80] sm:$0xff]
    %v2799 = vld [vmem:[#allocation23 + $0x88] sm:$0xff]
    %v2800 = vld [vmem:[#allocation23 + $0x90] sm:$0xff]
    %v2801 = vld [vmem:[#allocation23 + $0x98] sm:$0xff]
    %v2802 = vld [vmem:[#allocation23 + $0xa0] sm:$0xff]
    %v2803 = vld [vmem:[#allocation23 + $0xa8] sm:$0xff]
    %v2804 = vld [vmem:[#allocation23 + $0xb0] sm:$0xff]
    %v2805 = vld [vmem:[#allocation23 + $0xb8] sm:$0xff]
    %v2806 = vld [vmem:[#allocation23 + $0xc0] sm:$0xff]
    %v2807 = vld [vmem:[#allocation23 + $0xc8] sm:$0xff]
    %v2808 = vld [vmem:[#allocation23 + $0xd0] sm:$0xff]
    %v2809 = vld [vmem:[#allocation23 + $0xd8] sm:$0xff]
    %v2810 = vld [vmem:[#allocation23 + $0xe0] sm:$0xff]
    %v2811 = vld [vmem:[#allocation23 + $0xe8] sm:$0xff]
    %v2812 = vld [vmem:[#allocation23 + $0xf0] sm:$0xff]
    %v2813 = vld [vmem:[#allocation23 + $0xf8] sm:$0xff]
    %v2814 = vld [vmem:[#allocation23 + $0x100] sm:$0xff]
    %v2815 = vld [vmem:[#allocation23 + $0x108] sm:$0xff]
    %v2816 = vld [vmem:[#allocation23 + $0x110] sm:$0xff]
    %v2817 = vld [vmem:[#allocation23 + $0x118] sm:$0xff]
    %v2818 = vld [vmem:[#allocation23 + $0x120] sm:$0xff]
    %v2819 = vld [vmem:[#allocation23 + $0x128] sm:$0xff]
    %v2820 = vld [vmem:[#allocation23 + $0x130] sm:$0xff]
    %v2821 = vld [vmem:[#allocation23 + $0x138] sm:$0xff]
    %v2822 = vld [vmem:[#allocation23 + $0x140] sm:$0xff]
    %v2823 = vld [vmem:[#allocation23 + $0x148] sm:$0xff]
    %v2824 = vld [vmem:[#allocation23 + $0x150] sm:$0xff]
    %v2825 = vld [vmem:[#allocation23 + $0x158] sm:$0xff]
    %v2826 = vld [vmem:[#allocation23 + $0x160] sm:$0xff]
    %v2827 = vld [vmem:[#allocation23 + $0x168] sm:$0xff]
    %v2828 = vld [vmem:[#allocation23 + $0x170] sm:$0xff]
    %v2829 = vld [vmem:[#allocation23 + $0x178] sm:$0xff]
    %v2830 = vld [vmem:[#allocation23 + $0x180] sm:$0xff]
    %v2831 = vld [vmem:[#allocation23 + $0x188] sm:$0xff]
    %v2832 = vld [vmem:[#allocation23 + $0x190] sm:$0xff]
    %v2833 = vld [vmem:[#allocation23 + $0x198] sm:$0xff]
    %v2834 = vld [vmem:[#allocation23 + $0x1a0] sm:$0xff]
    %v2835 = vld [vmem:[#allocation23 + $0x1a8] sm:$0xff]
    %v2836 = vld [vmem:[#allocation23 + $0x1b0] sm:$0xff]
    %v2837 = vld [vmem:[#allocation23 + $0x1b8] sm:$0xff]
    %v2838 = vld [vmem:[#allocation23 + $0x1c0] sm:$0xff]
    %v2839 = vld [vmem:[#allocation23 + $0x1c8] sm:$0xff]
    %v2840 = vld [vmem:[#allocation23 + $0x1d0] sm:$0xff]
    %v2841 = vld [vmem:[#allocation23 + $0x1d8] sm:$0xff]
    %v2842 = vld [vmem:[#allocation23 + $0x1e0] sm:$0xff]
    %v2843 = vld [vmem:[#allocation23 + $0x1e8] sm:$0xff]
    %v2844 = vld [vmem:[#allocation23 + $0x1f0] sm:$0xff]
    %v2845 = vld [vmem:[#allocation23 + $0x1f8] sm:$0xff]
    %2846 = vmatpush.msra.mxu0 %v2812
    %2847 = vmatpush.msra.mxu0 %v2810
    %2848 = vmatpush.msra.mxu0 %v2808
    %2849 = vmatpush.msra.mxu0 %v2806
    %2850 = vmatpush.msra.mxu0 %v2804
    %2851 = vmatpush.msra.mxu0 %v2802
    %2852 = vmatpush.msra.mxu0 %v2800
    %2853 = vmatpush.msra.mxu0 %v2798
    %2854 = vmatpush.msra.mxu0 %v2796
    %2855 = vmatpush.msra.mxu0 %v2794
    %2856 = vmatpush.msra.mxu0 %v2792
    %2857 = vmatpush.msra.mxu0 %v2790
    %2858 = vmatpush.msra.mxu0 %v2788
    %2859 = vmatpush.msra.mxu0 %v2786
    %2860 = vmatpush.msra.mxu0 %v2784
    %2861 = vmatpush.msra.mxu0 %v2782
    %2862 = vmatmul.f32.gmra.mxu0 %v2734
    %v2863 = vpop.f32.mrf.mxu0
    %v2864 = vadd.f32 0.0, %v2863
    %2865 = vmatmul.f32.gmra.mxu0 %v2736
    %v2866 = vpop.f32.mrf.mxu0
    %v2867 = vadd.f32 0.0, %v2866
    %2868 = vmatmul.f32.gmra.mxu0 %v2738
    %v2869 = vpop.f32.mrf.mxu0
    %v2870 = vadd.f32 0.0, %v2869
    %2871 = vmatmul.f32.gmra.mxu0 %v2740
    %v2872 = vpop.f32.mrf.mxu0
    %v2873 = vadd.f32 0.0, %v2872
    %2874 = vmatmul.f32.gmra.mxu0 %v2742
    %v2875 = vpop.f32.mrf.mxu0
    %v2876 = vadd.f32 0.0, %v2875
    %2877 = vmatmul.f32.gmra.mxu0 %v2744
    %v2878 = vpop.f32.mrf.mxu0
    %v2879 = vadd.f32 0.0, %v2878
    %2880 = vmatmul.f32.gmra.mxu0 %v2746
    %v2881 = vpop.f32.mrf.mxu0
    %v2882 = vadd.f32 0.0, %v2881
    %2883 = vmatmul.f32.gmra.mxu0 %v2748
    %v2884 = vpop.f32.mrf.mxu0
    %v2885 = vadd.f32 0.0, %v2884
    %2886 = vmatmul.f32.gmra.mxu0 %v2750
    %v2887 = vpop.f32.mrf.mxu0
    %v2888 = vadd.f32 0.0, %v2887
    %2889 = vmatmul.f32.gmra.mxu0 %v2752
    %v2890 = vpop.f32.mrf.mxu0
    %v2891 = vadd.f32 0.0, %v2890
    %2892 = vmatmul.f32.gmra.mxu0 %v2754
    %v2893 = vpop.f32.mrf.mxu0
    %v2894 = vadd.f32 0.0, %v2893
    %2895 = vmatmul.f32.gmra.mxu0 %v2756
    %v2896 = vpop.f32.mrf.mxu0
    %v2897 = vadd.f32 0.0, %v2896
    %2898 = vmatmul.f32.gmra.mxu0 %v2758
    %v2899 = vpop.f32.mrf.mxu0
    %v2900 = vadd.f32 0.0, %v2899
    %2901 = vmatmul.f32.gmra.mxu0 %v2760
    %v2902 = vpop.f32.mrf.mxu0
    %v2903 = vadd.f32 0.0, %v2902
    %2904 = vmatmul.f32.gmra.mxu0 %v2762
    %v2905 = vpop.f32.mrf.mxu0
    %v2906 = vadd.f32 0.0, %v2905
    %2907 = vmatmul.f32.gmra.mxu0 %v2764
    %v2908 = vpop.f32.mrf.mxu0
    %v2909 = vadd.f32 0.0, %v2908
    %2910 = vmatmul.f32.gmra.mxu0 %v2766
    %v2911 = vpop.f32.mrf.mxu0
    %v2912 = vadd.f32 0.0, %v2911
    %2913 = vmatmul.f32.gmra.mxu0 %v2768
    %v2914 = vpop.f32.mrf.mxu0
    %v2915 = vadd.f32 0.0, %v2914
    %2916 = vmatmul.f32.gmra.mxu0 %v2770
    %v2917 = vpop.f32.mrf.mxu0
    %v2918 = vadd.f32 0.0, %v2917
    %2919 = vmatmul.f32.gmra.mxu0 %v2772
    %v2920 = vpop.f32.mrf.mxu0
    %v2921 = vadd.f32 0.0, %v2920
    %2922 = vmatmul.f32.gmra.mxu0 %v2774
    %v2923 = vpop.f32.mrf.mxu0
    %v2924 = vadd.f32 0.0, %v2923
    %2925 = vmatmul.f32.gmra.mxu0 %v2776
    %v2926 = vpop.f32.mrf.mxu0
    %v2927 = vadd.f32 0.0, %v2926
    %2928 = vmatmul.f32.gmra.mxu0 %v2778
    %v2929 = vpop.f32.mrf.mxu0
    %v2930 = vadd.f32 0.0, %v2929
    %2931 = vmatmul.f32.gmra.mxu0 %v2780
    %v2932 = vpop.f32.mrf.mxu0
    %v2933 = vadd.f32 0.0, %v2932
    %2934 = vdwg.mxu0
    %2935 = vmatpush.msra.mxu0 %v2844
    %2936 = vmatpush.msra.mxu0 %v2842
    %2937 = vmatpush.msra.mxu0 %v2840
    %2938 = vmatpush.msra.mxu0 %v2838
    %2939 = vmatpush.msra.mxu0 %v2836
    %2940 = vmatpush.msra.mxu0 %v2834
    %2941 = vmatpush.msra.mxu0 %v2832
    %2942 = vmatpush.msra.mxu0 %v2830
    %2943 = vmatpush.msra.mxu0 %v2828
    %2944 = vmatpush.msra.mxu0 %v2826
    %2945 = vmatpush.msra.mxu0 %v2824
    %2946 = vmatpush.msra.mxu0 %v2822
    %2947 = vmatpush.msra.mxu0 %v2820
    %2948 = vmatpush.msra.mxu0 %v2818
    %2949 = vmatpush.msra.mxu0 %v2816
    %2950 = vmatpush.msra.mxu0 %v2814
    %2951 = vmatmul.f32.gmra.mxu0 %v2735
    %v2952 = vpop.f32.mrf.mxu0
    %v2953 = vadd.f32 %v2864, %v2952
    %2954 = vmatmul.f32.gmra.mxu0 %v2737
    %v2955 = vpop.f32.mrf.mxu0
    %v2956 = vadd.f32 %v2867, %v2955
    %2957 = vmatmul.f32.gmra.mxu0 %v2739
    %v2958 = vpop.f32.mrf.mxu0
    %v2959 = vadd.f32 %v2870, %v2958
    %2960 = vmatmul.f32.gmra.mxu0 %v2741
    %v2961 = vpop.f32.mrf.mxu0
    %v2962 = vadd.f32 %v2873, %v2961
    %2963 = vmatmul.f32.gmra.mxu0 %v2743
    %v2964 = vpop.f32.mrf.mxu0
    %v2965 = vadd.f32 %v2876, %v2964
    %2966 = vmatmul.f32.gmra.mxu0 %v2745
    %v2967 = vpop.f32.mrf.mxu0
    %v2968 = vadd.f32 %v2879, %v2967
    %2969 = vmatmul.f32.gmra.mxu0 %v2747
    %v2970 = vpop.f32.mrf.mxu0
    %v2971 = vadd.f32 %v2882, %v2970
    %2972 = vmatmul.f32.gmra.mxu0 %v2749
    %v2973 = vpop.f32.mrf.mxu0
    %v2974 = vadd.f32 %v2885, %v2973
    %2975 = vmatmul.f32.gmra.mxu0 %v2751
    %v2976 = vpop.f32.mrf.mxu0
    %v2977 = vadd.f32 %v2888, %v2976
    %2978 = vmatmul.f32.gmra.mxu0 %v2753
    %v2979 = vpop.f32.mrf.mxu0
    %v2980 = vadd.f32 %v2891, %v2979
    %2981 = vmatmul.f32.gmra.mxu0 %v2755
    %v2982 = vpop.f32.mrf.mxu0
    %v2983 = vadd.f32 %v2894, %v2982
    %2984 = vmatmul.f32.gmra.mxu0 %v2757
    %v2985 = vpop.f32.mrf.mxu0
    %v2986 = vadd.f32 %v2897, %v2985
    %2987 = vmatmul.f32.gmra.mxu0 %v2759
    %v2988 = vpop.f32.mrf.mxu0
    %v2989 = vadd.f32 %v2900, %v2988
    %2990 = vmatmul.f32.gmra.mxu0 %v2761
    %v2991 = vpop.f32.mrf.mxu0
    %v2992 = vadd.f32 %v2903, %v2991
    %2993 = vmatmul.f32.gmra.mxu0 %v2763
    %v2994 = vpop.f32.mrf.mxu0
    %v2995 = vadd.f32 %v2906, %v2994
    %2996 = vmatmul.f32.gmra.mxu0 %v2765
    %v2997 = vpop.f32.mrf.mxu0
    %v2998 = vadd.f32 %v2909, %v2997
    %2999 = vmatmul.f32.gmra.mxu0 %v2767
    %v3000 = vpop.f32.mrf.mxu0
    %v3001 = vadd.f32 %v2912, %v3000
    %3002 = vmatmul.f32.gmra.mxu0 %v2769
    %v3003 = vpop.f32.mrf.mxu0
    %v3004 = vadd.f32 %v2915, %v3003
    %3005 = vmatmul.f32.gmra.mxu0 %v2771
    %v3006 = vpop.f32.mrf.mxu0
    %v3007 = vadd.f32 %v2918, %v3006
    %3008 = vmatmul.f32.gmra.mxu0 %v2773
    %v3009 = vpop.f32.mrf.mxu0
    %v3010 = vadd.f32 %v2921, %v3009
    %3011 = vmatmul.f32.gmra.mxu0 %v2775
    %v3012 = vpop.f32.mrf.mxu0
    %v3013 = vadd.f32 %v2924, %v3012
    %3014 = vmatmul.f32.gmra.mxu0 %v2777
    %v3015 = vpop.f32.mrf.mxu0
    %v3016 = vadd.f32 %v2927, %v3015
    %3017 = vmatmul.f32.gmra.mxu0 %v2779
    %v3018 = vpop.f32.mrf.mxu0
    %v3019 = vadd.f32 %v2930, %v3018
    %3020 = vmatmul.f32.gmra.mxu0 %v2781
    %v3021 = vpop.f32.mrf.mxu0
    %v3022 = vadd.f32 %v2933, %v3021
    %3023 = vdwg.mxu0
    %3024 = vmatpush.msra.mxu0 %v2813
    %3025 = vmatpush.msra.mxu0 %v2811
    %3026 = vmatpush.msra.mxu0 %v2809
    %3027 = vmatpush.msra.mxu0 %v2807
    %3028 = vmatpush.msra.mxu0 %v2805
    %3029 = vmatpush.msra.mxu0 %v2803
    %3030 = vmatpush.msra.mxu0 %v2801
    %3031 = vmatpush.msra.mxu0 %v2799
    %3032 = vmatpush.msra.mxu0 %v2797
    %3033 = vmatpush.msra.mxu0 %v2795
    %3034 = vmatpush.msra.mxu0 %v2793
    %3035 = vmatpush.msra.mxu0 %v2791
    %3036 = vmatpush.msra.mxu0 %v2789
    %3037 = vmatpush.msra.mxu0 %v2787
    %3038 = vmatpush.msra.mxu0 %v2785
    %3039 = vmatpush.msra.mxu0 %v2783
    %3040 = vmatmul.f32.gmra.mxu0 %v2734
    %v3041 = vpop.f32.mrf.mxu0
    %v3042 = vadd.f32 0.0, %v3041
    %3043 = vmatmul.f32.gmra.mxu0 %v2736
    %v3044 = vpop.f32.mrf.mxu0
    %v3045 = vadd.f32 0.0, %v3044
    %3046 = vmatmul.f32.gmra.mxu0 %v2738
    %v3047 = vpop.f32.mrf.mxu0
    %v3048 = vadd.f32 0.0, %v3047
    %3049 = vmatmul.f32.gmra.mxu0 %v2740
    %v3050 = vpop.f32.mrf.mxu0
    %v3051 = vadd.f32 0.0, %v3050
    %3052 = vmatmul.f32.gmra.mxu0 %v2742
    %v3053 = vpop.f32.mrf.mxu0
    %v3054 = vadd.f32 0.0, %v3053
    %3055 = vmatmul.f32.gmra.mxu0 %v2744
    %v3056 = vpop.f32.mrf.mxu0
    %v3057 = vadd.f32 0.0, %v3056
    %3058 = vmatmul.f32.gmra.mxu0 %v2746
    %v3059 = vpop.f32.mrf.mxu0
    %v3060 = vadd.f32 0.0, %v3059
    %3061 = vmatmul.f32.gmra.mxu0 %v2748
    %v3062 = vpop.f32.mrf.mxu0
    %v3063 = vadd.f32 0.0, %v3062
    %3064 = vmatmul.f32.gmra.mxu0 %v2750
    %v3065 = vpop.f32.mrf.mxu0
    %v3066 = vadd.f32 0.0, %v3065
    %3067 = vmatmul.f32.gmra.mxu0 %v2752
    %v3068 = vpop.f32.mrf.mxu0
    %v3069 = vadd.f32 0.0, %v3068
    %3070 = vmatmul.f32.gmra.mxu0 %v2754
    %v3071 = vpop.f32.mrf.mxu0
    %v3072 = vadd.f32 0.0, %v3071
    %3073 = vmatmul.f32.gmra.mxu0 %v2756
    %v3074 = vpop.f32.mrf.mxu0
    %v3075 = vadd.f32 0.0, %v3074
    %3076 = vmatmul.f32.gmra.mxu0 %v2758
    %v3077 = vpop.f32.mrf.mxu0
    %v3078 = vadd.f32 0.0, %v3077
    %3079 = vmatmul.f32.gmra.mxu0 %v2760
    %v3080 = vpop.f32.mrf.mxu0
    %v3081 = vadd.f32 0.0, %v3080
    %3082 = vmatmul.f32.gmra.mxu0 %v2762
    %v3083 = vpop.f32.mrf.mxu0
    %v3084 = vadd.f32 0.0, %v3083
    %3085 = vmatmul.f32.gmra.mxu0 %v2764
    %v3086 = vpop.f32.mrf.mxu0
    %v3087 = vadd.f32 0.0, %v3086
    %3088 = vmatmul.f32.gmra.mxu0 %v2766
    %v3089 = vpop.f32.mrf.mxu0
    %v3090 = vadd.f32 0.0, %v3089
    %3091 = vmatmul.f32.gmra.mxu0 %v2768
    %v3092 = vpop.f32.mrf.mxu0
    %v3093 = vadd.f32 0.0, %v3092
    %3094 = vmatmul.f32.gmra.mxu0 %v2770
    %v3095 = vpop.f32.mrf.mxu0
    %v3096 = vadd.f32 0.0, %v3095
    %3097 = vmatmul.f32.gmra.mxu0 %v2772
    %v3098 = vpop.f32.mrf.mxu0
    %v3099 = vadd.f32 0.0, %v3098
    %3100 = vmatmul.f32.gmra.mxu0 %v2774
    %v3101 = vpop.f32.mrf.mxu0
    %v3102 = vadd.f32 0.0, %v3101
    %3103 = vmatmul.f32.gmra.mxu0 %v2776
    %v3104 = vpop.f32.mrf.mxu0
    %v3105 = vadd.f32 0.0, %v3104
    %3106 = vmatmul.f32.gmra.mxu0 %v2778
    %v3107 = vpop.f32.mrf.mxu0
    %v3108 = vadd.f32 0.0, %v3107
    %3109 = vmatmul.f32.gmra.mxu0 %v2780
    %v3110 = vpop.f32.mrf.mxu0
    %v3111 = vadd.f32 0.0, %v3110
    %3112 = vdwg.mxu0
    %3113 = vmatpush.msra.mxu0 %v2845
    %3114 = vmatpush.msra.mxu0 %v2843
    %3115 = vmatpush.msra.mxu0 %v2841
    %3116 = vmatpush.msra.mxu0 %v2839
    %3117 = vmatpush.msra.mxu0 %v2837
    %3118 = vmatpush.msra.mxu0 %v2835
    %3119 = vmatpush.msra.mxu0 %v2833
    %3120 = vmatpush.msra.mxu0 %v2831
    %3121 = vmatpush.msra.mxu0 %v2829
    %3122 = vmatpush.msra.mxu0 %v2827
    %3123 = vmatpush.msra.mxu0 %v2825
    %3124 = vmatpush.msra.mxu0 %v2823
    %3125 = vmatpush.msra.mxu0 %v2821
    %3126 = vmatpush.msra.mxu0 %v2819
    %3127 = vmatpush.msra.mxu0 %v2817
    %3128 = vmatpush.msra.mxu0 %v2815
    %3129 = vmatmul.f32.gmra.mxu0 %v2735
    %v3130 = vpop.f32.mrf.mxu0
    %v3131 = vadd.f32 %v3042, %v3130
    %3132 = vmatmul.f32.gmra.mxu0 %v2737
    %v3133 = vpop.f32.mrf.mxu0
    %v3134 = vadd.f32 %v3045, %v3133
    %3135 = vmatmul.f32.gmra.mxu0 %v2739
    %v3136 = vpop.f32.mrf.mxu0
    %v3137 = vadd.f32 %v3048, %v3136
    %3138 = vmatmul.f32.gmra.mxu0 %v2741
    %v3139 = vpop.f32.mrf.mxu0
    %v3140 = vadd.f32 %v3051, %v3139
    %3141 = vmatmul.f32.gmra.mxu0 %v2743
    %v3142 = vpop.f32.mrf.mxu0
    %v3143 = vadd.f32 %v3054, %v3142
    %3144 = vmatmul.f32.gmra.mxu0 %v2745
    %v3145 = vpop.f32.mrf.mxu0
    %v3146 = vadd.f32 %v3057, %v3145
    %3147 = vmatmul.f32.gmra.mxu0 %v2747
    %v3148 = vpop.f32.mrf.mxu0
    %v3149 = vadd.f32 %v3060, %v3148
    %3150 = vmatmul.f32.gmra.mxu0 %v2749
    %v3151 = vpop.f32.mrf.mxu0
    %v3152 = vadd.f32 %v3063, %v3151
    %3153 = vmatmul.f32.gmra.mxu0 %v2751
    %v3154 = vpop.f32.mrf.mxu0
    %v3155 = vadd.f32 %v3066, %v3154
    %3156 = vmatmul.f32.gmra.mxu0 %v2753
    %v3157 = vpop.f32.mrf.mxu0
    %v3158 = vadd.f32 %v3069, %v3157
    %3159 = vmatmul.f32.gmra.mxu0 %v2755
    %v3160 = vpop.f32.mrf.mxu0
    %v3161 = vadd.f32 %v3072, %v3160
    %3162 = vmatmul.f32.gmra.mxu0 %v2757
    %v3163 = vpop.f32.mrf.mxu0
    %v3164 = vadd.f32 %v3075, %v3163
    %3165 = vmatmul.f32.gmra.mxu0 %v2759
    %v3166 = vpop.f32.mrf.mxu0
    %v3167 = vadd.f32 %v3078, %v3166
    %3168 = vmatmul.f32.gmra.mxu0 %v2761
    %v3169 = vpop.f32.mrf.mxu0
    %v3170 = vadd.f32 %v3081, %v3169
    %3171 = vmatmul.f32.gmra.mxu0 %v2763
    %v3172 = vpop.f32.mrf.mxu0
    %v3173 = vadd.f32 %v3084, %v3172
    %3174 = vmatmul.f32.gmra.mxu0 %v2765
    %v3175 = vpop.f32.mrf.mxu0
    %v3176 = vadd.f32 %v3087, %v3175
    %3177 = vmatmul.f32.gmra.mxu0 %v2767
    %v3178 = vpop.f32.mrf.mxu0
    %v3179 = vadd.f32 %v3090, %v3178
    %3180 = vmatmul.f32.gmra.mxu0 %v2769
    %v3181 = vpop.f32.mrf.mxu0
    %v3182 = vadd.f32 %v3093, %v3181
    %3183 = vmatmul.f32.gmra.mxu0 %v2771
    %v3184 = vpop.f32.mrf.mxu0
    %v3185 = vadd.f32 %v3096, %v3184
    %3186 = vmatmul.f32.gmra.mxu0 %v2773
    %v3187 = vpop.f32.mrf.mxu0
    %v3188 = vadd.f32 %v3099, %v3187
    %3189 = vmatmul.f32.gmra.mxu0 %v2775
    %v3190 = vpop.f32.mrf.mxu0
    %v3191 = vadd.f32 %v3102, %v3190
    %3192 = vmatmul.f32.gmra.mxu0 %v2777
    %v3193 = vpop.f32.mrf.mxu0
    %v3194 = vadd.f32 %v3105, %v3193
    %3195 = vmatmul.f32.gmra.mxu0 %v2779
    %v3196 = vpop.f32.mrf.mxu0
    %v3197 = vadd.f32 %v3108, %v3196
    %3198 = vmatmul.f32.gmra.mxu0 %v2781
    %v3199 = vpop.f32.mrf.mxu0
    %v3200 = vadd.f32 %v3111, %v3199
    %3201 = vdwg.mxu0
    %3202 = vst [vmem:[#allocation7] sm:$0xff] %v2953
    %3203 = vst [vmem:[#allocation7 + $0x8] sm:$0xff] %v3131
    %3204 = vst [vmem:[#allocation7 + $0x10] sm:$0xff] %v2956
    %3205 = vst [vmem:[#allocation7 + $0x18] sm:$0xff] %v3134
    %3206 = vst [vmem:[#allocation7 + $0x20] sm:$0xff] %v2959
    %3207 = vst [vmem:[#allocation7 + $0x28] sm:$0xff] %v3137
    %3208 = vst [vmem:[#allocation7 + $0x30] sm:$0xff] %v2962
    %3209 = vst [vmem:[#allocation7 + $0x38] sm:$0xff] %v3140
    %3210 = vst [vmem:[#allocation7 + $0x40] sm:$0xff] %v2965
    %3211 = vst [vmem:[#allocation7 + $0x48] sm:$0xff] %v3143
    %3212 = vst [vmem:[#allocation7 + $0x50] sm:$0xff] %v2968
    %3213 = vst [vmem:[#allocation7 + $0x58] sm:$0xff] %v3146
    %3214 = vst [vmem:[#allocation7 + $0x60] sm:$0xff] %v2971
    %3215 = vst [vmem:[#allocation7 + $0x68] sm:$0xff] %v3149
    %3216 = vst [vmem:[#allocation7 + $0x70] sm:$0xff] %v2974
    %3217 = vst [vmem:[#allocation7 + $0x78] sm:$0xff] %v3152
    %3218 = vst [vmem:[#allocation7 + $0x80] sm:$0xff] %v2977
    %3219 = vst [vmem:[#allocation7 + $0x88] sm:$0xff] %v3155
    %3220 = vst [vmem:[#allocation7 + $0x90] sm:$0xff] %v2980
    %3221 = vst [vmem:[#allocation7 + $0x98] sm:$0xff] %v3158
    %3222 = vst [vmem:[#allocation7 + $0xa0] sm:$0xff] %v2983
    %3223 = vst [vmem:[#allocation7 + $0xa8] sm:$0xff] %v3161
    %3224 = vst [vmem:[#allocation7 + $0xb0] sm:$0xff] %v2986
    %3225 = vst [vmem:[#allocation7 + $0xb8] sm:$0xff] %v3164
    %3226 = vst [vmem:[#allocation7 + $0xc0] sm:$0xff] %v2989
    %3227 = vst [vmem:[#allocation7 + $0xc8] sm:$0xff] %v3167
    %3228 = vst [vmem:[#allocation7 + $0xd0] sm:$0xff] %v2992
    %3229 = vst [vmem:[#allocation7 + $0xd8] sm:$0xff] %v3170
    %3230 = vst [vmem:[#allocation7 + $0xe0] sm:$0xff] %v2995
    %3231 = vst [vmem:[#allocation7 + $0xe8] sm:$0xff] %v3173
    %3232 = vst [vmem:[#allocation7 + $0xf0] sm:$0xff] %v2998
    %3233 = vst [vmem:[#allocation7 + $0xf8] sm:$0xff] %v3176
    %3234 = vst [vmem:[#allocation7 + $0x100] sm:$0xff] %v3001
    %3235 = vst [vmem:[#allocation7 + $0x108] sm:$0xff] %v3179
    %3236 = vst [vmem:[#allocation7 + $0x110] sm:$0xff] %v3004
    %3237 = vst [vmem:[#allocation7 + $0x118] sm:$0xff] %v3182
    %3238 = vst [vmem:[#allocation7 + $0x120] sm:$0xff] %v3007
    %3239 = vst [vmem:[#allocation7 + $0x128] sm:$0xff] %v3185
    %3240 = vst [vmem:[#allocation7 + $0x130] sm:$0xff] %v3010
    %3241 = vst [vmem:[#allocation7 + $0x138] sm:$0xff] %v3188
    %3242 = vst [vmem:[#allocation7 + $0x140] sm:$0xff] %v3013
    %3243 = vst [vmem:[#allocation7 + $0x148] sm:$0xff] %v3191
    %3244 = vst [vmem:[#allocation7 + $0x150] sm:$0xff] %v3016
    %3245 = vst [vmem:[#allocation7 + $0x158] sm:$0xff] %v3194
    %3246 = vst [vmem:[#allocation7 + $0x160] sm:$0xff] %v3019
    %3247 = vst [vmem:[#allocation7 + $0x168] sm:$0xff] %v3197
    %3248 = vst [vmem:[#allocation7 + $0x170] sm:$0xff] %v3022
    %3249 = vst [vmem:[#allocation7 + $0x178] sm:$0xff] %v3200
    %v3250 = vld [vmem:[#allocation5] sm:$0xff]
    %v3251 = vld [vmem:[#allocation5 + $0x8] sm:$0xff]
    %v3252 = vld [vmem:[#allocation5 + $0x10] sm:$0xff]
    %v3253 = vld [vmem:[#allocation5 + $0x18] sm:$0xff]
    %v3254 = vld [vmem:[#allocation5 + $0x20] sm:$0xff]
    %v3255 = vld [vmem:[#allocation5 + $0x28] sm:$0xff]
    %v3256 = vld [vmem:[#allocation5 + $0x30] sm:$0xff]
    %v3257 = vld [vmem:[#allocation5 + $0x38] sm:$0xff]
    %v3258 = vld [vmem:[#allocation5 + $0x40] sm:$0xff]
    %v3259 = vld [vmem:[#allocation5 + $0x48] sm:$0xff]
    %v3260 = vld [vmem:[#allocation5 + $0x50] sm:$0xff]
    %v3261 = vld [vmem:[#allocation5 + $0x58] sm:$0xff]
    %v3262 = vld [vmem:[#allocation6] sm:$0xff]
    %v3263 = vld [vmem:[#allocation6 + $0x8] sm:$0xff]
    %v3264 = vld [vmem:[#allocation6 + $0x10] sm:$0xff]
    %v3265 = vld [vmem:[#allocation6 + $0x18] sm:$0xff]
    %v3266 = vld [vmem:[#allocation6 + $0x20] sm:$0xff]
    %v3267 = vld [vmem:[#allocation6 + $0x28] sm:$0xff]
    %v3268 = vld [vmem:[#allocation6 + $0x30] sm:$0xff]
    %v3269 = vld [vmem:[#allocation6 + $0x38] sm:$0xff]
    %v3270 = vld [vmem:[#allocation6 + $0x40] sm:$0xff]
    %v3271 = vld [vmem:[#allocation6 + $0x48] sm:$0xff]
    %v3272 = vld [vmem:[#allocation6 + $0x50] sm:$0xff]
    %v3273 = vld [vmem:[#allocation6 + $0x58] sm:$0xff]
    %v3274 = vsub.f32 %v3250, %v3262
    %v3275 = vsub.f32 %v3251, %v3263
    %v3276 = vsub.f32 %v3252, %v3264
    %v3277 = vsub.f32 %v3253, %v3265
    %v3278 = vsub.f32 %v3254, %v3266
    %v3279 = vsub.f32 %v3255, %v3267
    %v3280 = vsub.f32 %v3256, %v3268
    %v3281 = vsub.f32 %v3257, %v3269
    %v3282 = vsub.f32 %v3258, %v3270
    %v3283 = vsub.f32 %v3259, %v3271
    %v3284 = vsub.f32 %v3260, %v3272
    %v3285 = vsub.f32 %v3261, %v3273
    %3286 = vst [vmem:[#allocation8] sm:$0xff] %v3274
    %3287 = vst [vmem:[#allocation8 + $0x8] sm:$0xff] %v3275
    %3288 = vst [vmem:[#allocation8 + $0x10] sm:$0xff] %v3276
    %3289 = vst [vmem:[#allocation8 + $0x18] sm:$0xff] %v3277
    %3290 = vst [vmem:[#allocation8 + $0x20] sm:$0xff] %v3278
    %3291 = vst [vmem:[#allocation8 + $0x28] sm:$0xff] %v3279
    %3292 = vst [vmem:[#allocation8 + $0x30] sm:$0xff] %v3280
    %3293 = vst [vmem:[#allocation8 + $0x38] sm:$0xff] %v3281
    %3294 = vst [vmem:[#allocation8 + $0x40] sm:$0xff] %v3282
    %3295 = vst [vmem:[#allocation8 + $0x48] sm:$0xff] %v3283
    %3296 = vst [vmem:[#allocation8 + $0x50] sm:$0xff] %v3284
    %3297 = vst [vmem:[#allocation8 + $0x58] sm:$0xff] %v3285
    %v3298 = vld [vmem:[#allocation7] sm:$0xff]
    %v3299 = vld [vmem:[#allocation7 + $0x8] sm:$0xff]
    %v3300 = vld [vmem:[#allocation7 + $0x10] sm:$0xff]
    %v3301 = vld [vmem:[#allocation7 + $0x18] sm:$0xff]
    %v3302 = vld [vmem:[#allocation7 + $0x20] sm:$0xff]
    %v3303 = vld [vmem:[#allocation7 + $0x28] sm:$0xff]
    %v3304 = vld [vmem:[#allocation7 + $0x30] sm:$0xff]
    %v3305 = vld [vmem:[#allocation7 + $0x38] sm:$0xff]
    %v3306 = vld [vmem:[#allocation7 + $0x40] sm:$0xff]
    %v3307 = vld [vmem:[#allocation7 + $0x48] sm:$0xff]
    %v3308 = vld [vmem:[#allocation7 + $0x50] sm:$0xff]
    %v3309 = vld [vmem:[#allocation7 + $0x58] sm:$0xff]
    %v3310 = vld [vmem:[#allocation5] sm:$0xff]
    %v3311 = vld [vmem:[#allocation5 + $0x8] sm:$0xff]
    %v3312 = vld [vmem:[#allocation5 + $0x10] sm:$0xff]
    %v3313 = vld [vmem:[#allocation5 + $0x18] sm:$0xff]
    %v3314 = vld [vmem:[#allocation5 + $0x20] sm:$0xff]
    %v3315 = vld [vmem:[#allocation5 + $0x28] sm:$0xff]
    %v3316 = vld [vmem:[#allocation5 + $0x30] sm:$0xff]
    %v3317 = vld [vmem:[#allocation5 + $0x38] sm:$0xff]
    %v3318 = vld [vmem:[#allocation5 + $0x40] sm:$0xff]
    %v3319 = vld [vmem:[#allocation5 + $0x48] sm:$0xff]
    %v3320 = vld [vmem:[#allocation5 + $0x50] sm:$0xff]
    %v3321 = vld [vmem:[#allocation5 + $0x58] sm:$0xff]
    %v3322 = vsub.f32 %v3298, %v3310
    %v3323 = vsub.f32 %v3299, %v3311
    %v3324 = vsub.f32 %v3300, %v3312
    %v3325 = vsub.f32 %v3301, %v3313
    %v3326 = vsub.f32 %v3302, %v3314
    %v3327 = vsub.f32 %v3303, %v3315
    %v3328 = vsub.f32 %v3304, %v3316
    %v3329 = vsub.f32 %v3305, %v3317
    %v3330 = vsub.f32 %v3306, %v3318
    %v3331 = vsub.f32 %v3307, %v3319
    %v3332 = vsub.f32 %v3308, %v3320
    %v3333 = vsub.f32 %v3309, %v3321
    %v3334 = vld [vmem:[#allocation6] sm:$0xff]
    %v3335 = vld [vmem:[#allocation6 + $0x8] sm:$0xff]
    %v3336 = vld [vmem:[#allocation6 + $0x10] sm:$0xff]
    %v3337 = vld [vmem:[#allocation6 + $0x18] sm:$0xff]
    %v3338 = vld [vmem:[#allocation6 + $0x20] sm:$0xff]
    %v3339 = vld [vmem:[#allocation6 + $0x28] sm:$0xff]
    %v3340 = vld [vmem:[#allocation6 + $0x30] sm:$0xff]
    %v3341 = vld [vmem:[#allocation6 + $0x38] sm:$0xff]
    %v3342 = vld [vmem:[#allocation6 + $0x40] sm:$0xff]
    %v3343 = vld [vmem:[#allocation6 + $0x48] sm:$0xff]
    %v3344 = vld [vmem:[#allocation6 + $0x50] sm:$0xff]
    %v3345 = vld [vmem:[#allocation6 + $0x58] sm:$0xff]
    %v3346 = vsub.f32 %v3322, %v3334
    %v3347 = vsub.f32 %v3323, %v3335
    %v3348 = vsub.f32 %v3324, %v3336
    %v3349 = vsub.f32 %v3325, %v3337
    %v3350 = vsub.f32 %v3326, %v3338
    %v3351 = vsub.f32 %v3327, %v3339
    %v3352 = vsub.f32 %v3328, %v3340
    %v3353 = vsub.f32 %v3329, %v3341
    %v3354 = vsub.f32 %v3330, %v3342
    %v3355 = vsub.f32 %v3331, %v3343
    %v3356 = vsub.f32 %v3332, %v3344
    %v3357 = vsub.f32 %v3333, %v3345
    %3358 = vst [vmem:[#allocation9] sm:$0xff] %v3346
    %3359 = vst [vmem:[#allocation9 + $0x8] sm:$0xff] %v3347
    %3360 = vst [vmem:[#allocation9 + $0x10] sm:$0xff] %v3348
    %3361 = vst [vmem:[#allocation9 + $0x18] sm:$0xff] %v3349
    %3362 = vst [vmem:[#allocation9 + $0x20] sm:$0xff] %v3350
    %3363 = vst [vmem:[#allocation9 + $0x28] sm:$0xff] %v3351
    %3364 = vst [vmem:[#allocation9 + $0x30] sm:$0xff] %v3352
    %3365 = vst [vmem:[#allocation9 + $0x38] sm:$0xff] %v3353
    %3366 = vst [vmem:[#allocation9 + $0x40] sm:$0xff] %v3354
    %3367 = vst [vmem:[#allocation9 + $0x48] sm:$0xff] %v3355
    %3368 = vst [vmem:[#allocation9 + $0x50] sm:$0xff] %v3356
    %3369 = vst [vmem:[#allocation9 + $0x58] sm:$0xff] %v3357
    %v3370 = vld [vmem:[#allocation8] sm:$0xff]
    %v3371 = vld [vmem:[#allocation8 + $0x8] sm:$0xff]
    %v3372 = vld [vmem:[#allocation9] sm:$0xff]
    %v3373 = vld [vmem:[#allocation9 + $0x8] sm:$0xff]
    %v3374 = vmul.f32 %v3370, %v3370
    %v3375 = vmul.f32 %v3371, %v3371
    %v3376 = vmul.f32 %v3372, %v3372
    %v3377 = vmul.f32 %v3373, %v3373
    %v3378 = vadd.f32 %v3374, %v3376
    %v3379 = vadd.f32 %v3375, %v3377
    %v3380 = vld [vmem:[#allocation8 + $0x10] sm:$0xff]
    %v3381 = vld [vmem:[#allocation8 + $0x18] sm:$0xff]
    %v3382 = vld [vmem:[#allocation9 + $0x10] sm:$0xff]
    %v3383 = vld [vmem:[#allocation9 + $0x18] sm:$0xff]
    %v3384 = vmul.f32 %v3380, %v3380
    %v3385 = vmul.f32 %v3381, %v3381
    %v3386 = vmul.f32 %v3382, %v3382
    %v3387 = vmul.f32 %v3383, %v3383
    %v3388 = vadd.f32 %v3384, %v3386
    %v3389 = vadd.f32 %v3385, %v3387
    %v3390 = vadd.f32 %v3378, %v3388
    %v3391 = vadd.f32 %v3379, %v3389
    %v3392 = vld [vmem:[#allocation8 + $0x20] sm:$0xff]
    %v3393 = vld [vmem:[#allocation8 + $0x28] sm:$0xff]
    %v3394 = vld [vmem:[#allocation9 + $0x20] sm:$0xff]
    %v3395 = vld [vmem:[#allocation9 + $0x28] sm:$0xff]
    %v3396 = vmul.f32 %v3392, %v3392
    %v3397 = vmul.f32 %v3393, %v3393
    %v3398 = vmul.f32 %v3394, %v3394
    %v3399 = vmul.f32 %v3395, %v3395
    %v3400 = vadd.f32 %v3396, %v3398
    %v3401 = vadd.f32 %v3397, %v3399
    %v3402 = vadd.f32 %v3390, %v3400
    %v3403 = vadd.f32 %v3391, %v3401
    %v3404 = vld [vmem:[#allocation8 + $0x30] sm:$0xff]
    %v3405 = vld [vmem:[#allocation8 + $0x38] sm:$0xff]
    %v3406 = vld [vmem:[#allocation9 + $0x30] sm:$0xff]
    %v3407 = vld [vmem:[#allocation9 + $0x38] sm:$0xff]
    %v3408 = vmul.f32 %v3404, %v3404
    %v3409 = vmul.f32 %v3405, %v3405
    %v3410 = vmul.f32 %v3406, %v3406
    %v3411 = vmul.f32 %v3407, %v3407
    %v3412 = vadd.f32 %v3408, %v3410
    %v3413 = vadd.f32 %v3409, %v3411
    %v3414 = vadd.f32 %v3402, %v3412
    %v3415 = vadd.f32 %v3403, %v3413
    %v3416 = vld [vmem:[#allocation8 + $0x40] sm:$0xff]
    %v3417 = vld [vmem:[#allocation8 + $0x48] sm:$0xff]
    %v3418 = vld [vmem:[#allocation9 + $0x40] sm:$0xff]
    %v3419 = vld [vmem:[#allocation9 + $0x48] sm:$0xff]
    %v3420 = vmul.f32 %v3416, %v3416
    %v3421 = vmul.f32 %v3417, %v3417
    %v3422 = vmul.f32 %v3418, %v3418
    %v3423 = vmul.f32 %v3419, %v3419
    %v3424 = vadd.f32 %v3420, %v3422
    %v3425 = vadd.f32 %v3421, %v3423
    %v3426 = vadd.f32 %v3414, %v3424
    %v3427 = vadd.f32 %v3415, %v3425
    %v3428 = vld [vmem:[#allocation8 + $0x50] sm:$0xff]
    %v3429 = vld [vmem:[#allocation8 + $0x58] sm:$0xff]
    %v3430 = vld [vmem:[#allocation9 + $0x50] sm:$0xff]
    %v3431 = vld [vmem:[#allocation9 + $0x58] sm:$0xff]
    %v3432 = vmul.f32 %v3428, %v3428
    %v3433 = vmul.f32 %v3429, %v3429
    %v3434 = vmul.f32 %v3430, %v3430
    %v3435 = vmul.f32 %v3431, %v3431
    %v3436 = vadd.f32 %v3432, %v3434
    %v3437 = vadd.f32 %v3433, %v3435
    %v3438 = vadd.f32 %v3426, %v3436
    %v3439 = vadd.f32 %v3427, %v3437
    %v3440 = vstv %s149
    %v3441 = vmul.f32 %v3438, %v3440
    %v3442 = vmul.f32 %v3439, %v3440
    %3443 = vset.pattern.permute.xlu0 3
    %3444 = vperm.xlu0 %3443, %v150
    %v3445 = vpop.permute.xlu0 %3444
    %v3447 = vmul.f32 %v3445, %v3441
    %v3448 = vmul.f32 %v3445, %v3442
    %3449 = vset.pattern.permute.xlu0 4
    %3450 = vperm.xlu0 %3449, %v150
    %v3451 = vpop.permute.xlu0 %3450
    %v3453 = vadd.f32 %v3447, %v3451
    %v3454 = vadd.f32 %v3448, %v3451
    %3455 = vst [vmem:[#allocation25] sm:$0xff] %v3453
    %3456 = vst [vmem:[#allocation25 + $0x8] sm:$0xff] %v3454
    %3457 = vst [vmem:[#allocation25 + $0x40] sm:$0xff] %v3441
    %3458 = vst [vmem:[#allocation25 + $0x48] sm:$0xff] %v3442
    %s3459 = smul.f32 %s149, 2.0
    %v3460 = vld [vmem:[#allocation5 + $0x60] sm:$0xff]
    %v3461 = vld [vmem:[#allocation5 + $0x68] sm:$0xff]
    %v3462 = vld [vmem:[#allocation6 + $0x60] sm:$0xff]
    %v3463 = vld [vmem:[#allocation6 + $0x68] sm:$0xff]
    %v3464 = vld [vmem:[#allocation7 + $0x60] sm:$0xff]
    %v3465 = vld [vmem:[#allocation7 + $0x68] sm:$0xff]
    %v3466 = vsub.f32 %v3460, %v3462
    %v3467 = vsub.f32 %v3461, %v3463
    %v3468 = vsub.f32 %v3464, %v3460
    %v3469 = vsub.f32 %v3465, %v3461
    %v3470 = vsub.f32 %v3468, %v3462
    %v3471 = vsub.f32 %v3469, %v3463
    %v3472 = vld [vmem:[#allocation8] sm:$0xff]
    %v3473 = vld [vmem:[#allocation8 + $0x8] sm:$0xff]
    %v3474 = vld [vmem:[#allocation9] sm:$0xff]
    %v3475 = vld [vmem:[#allocation9 + $0x8] sm:$0xff]
    %v3476 = vmul.f32 %v3472, %v3466
    %v3477 = vmul.f32 %v3473, %v3467
    %v3478 = vmul.f32 %v3474, %v3470
    %v3479 = vmul.f32 %v3475, %v3471
    %v3480 = vadd.f32 %v3476, %v3478
    %v3481 = vadd.f32 %v3477, %v3479
    %v3482 = vld [vmem:[#allocation5 + $0x70] sm:$0xff]
    %v3483 = vld [vmem:[#allocation5 + $0x78] sm:$0xff]
    %v3484 = vld [vmem:[#allocation6 + $0x70] sm:$0xff]
    %v3485 = vld [vmem:[#allocation6 + $0x78] sm:$0xff]
    %v3486 = vld [vmem:[#allocation7 + $0x70] sm:$0xff]
    %v3487 = vld [vmem:[#allocation7 + $0x78] sm:$0xff]
    %v3488 = vsub.f32 %v3482, %v3484
    %v3489 = vsub.f32 %v3483, %v3485
    %v3490 = vsub.f32 %v3486, %v3482
    %v3491 = vsub.f32 %v3487, %v3483
    %v3492 = vsub.f32 %v3490, %v3484
    %v3493 = vsub.f32 %v3491, %v3485
    %v3494 = vld [vmem:[#allocation8 + $0x10] sm:$0xff]
    %v3495 = vld [vmem:[#allocation8 + $0x18] sm:$0xff]
    %v3496 = vld [vmem:[#allocation9 + $0x10] sm:$0xff]
    %v3497 = vld [vmem:[#allocation9 + $0x18] sm:$0xff]
    %v3498 = vmul.f32 %v3494, %v3488
    %v3499 = vmul.f32 %v3495, %v3489
    %v3500 = vmul.f32 %v3496, %v3492
    %v3501 = vmul.f32 %v3497, %v3493
    %v3502 = vadd.f32 %v3498, %v3500
    %v3503 = vadd.f32 %v3499, %v3501
    %v3504 = vadd.f32 %v3480, %v3502
    %v3505 = vadd.f32 %v3481, %v3503
    %v3506 = vld [vmem:[#allocation5 + $0x80] sm:$0xff]
    %v3507 = vld [vmem:[#allocation5 + $0x88] sm:$0xff]
    %v3508 = vld [vmem:[#allocation6 + $0x80] sm:$0xff]
    %v3509 = vld [vmem:[#allocation6 + $0x88] sm:$0xff]
    %v3510 = vld [vmem:[#allocation7 + $0x80] sm:$0xff]
    %v3511 = vld [vmem:[#allocation7 + $0x88] sm:$0xff]
    %v3512 = vsub.f32 %v3506, %v3508
    %v3513 = vsub.f32 %v3507, %v3509
    %v3514 = vsub.f32 %v3510, %v3506
    %v3515 = vsub.f32 %v3511, %v3507
    %v3516 = vsub.f32 %v3514, %v3508
    %v3517 = vsub.f32 %v3515, %v3509
    %v3518 = vld [vmem:[#allocation8 + $0x20] sm:$0xff]
    %v3519 = vld [vmem:[#allocation8 + $0x28] sm:$0xff]
    %v3520 = vld [vmem:[#allocation9 + $0x20] sm:$0xff]
    %v3521 = vld [vmem:[#allocation9 + $0x28] sm:$0xff]
    %v3522 = vmul.f32 %v3518, %v3512
    %v3523 = vmul.f32 %v3519, %v3513
    %v3524 = vmul.f32 %v3520, %v3516
    %v3525 = vmul.f32 %v3521, %v3517
    %v3526 = vadd.f32 %v3522, %v3524
    %v3527 = vadd.f32 %v3523, %v3525
    %v3528 = vadd.f32 %v3504, %v3526
    %v3529 = vadd.f32 %v3505, %v3527
    %v3530 = vld [vmem:[#allocation5 + $0x90] sm:$0xff]
    %v3531 = vld [vmem:[#allocation5 + $0x98] sm:$0xff]
    %v3532 = vld [vmem:[#allocation6 + $0x90] sm:$0xff]
    %v3533 = vld [vmem:[#allocation6 + $0x98] sm:$0xff]
    %v3534 = vld [vmem:[#allocation7 + $0x90] sm:$0xff]
    %v3535 = vld [vmem:[#allocation7 + $0x98] sm:$0xff]
    %v3536 = vsub.f32 %v3530, %v3532
    %v3537 = vsub.f32 %v3531, %v3533
    %v3538 = vsub.f32 %v3534, %v3530
    %v3539 = vsub.f32 %v3535, %v3531
    %v3540 = vsub.f32 %v3538, %v3532
    %v3541 = vsub.f32 %v3539, %v3533
    %v3542 = vld [vmem:[#allocation8 + $0x30] sm:$0xff]
    %v3543 = vld [vmem:[#allocation8 + $0x38] sm:$0xff]
    %v3544 = vld [vmem:[#allocation9 + $0x30] sm:$0xff]
    %v3545 = vld [vmem:[#allocation9 + $0x38] sm:$0xff]
    %v3546 = vmul.f32 %v3542, %v3536
    %v3547 = vmul.f32 %v3543, %v3537
    %v3548 = vmul.f32 %v3544, %v3540
    %v3549 = vmul.f32 %v3545, %v3541
    %v3550 = vadd.f32 %v3546, %v3548
    %v3551 = vadd.f32 %v3547, %v3549
    %v3552 = vadd.f32 %v3528, %v3550
    %v3553 = vadd.f32 %v3529, %v3551
    %v3554 = vld [vmem:[#allocation5 + $0xa0] sm:$0xff]
    %v3555 = vld [vmem:[#allocation5 + $0xa8] sm:$0xff]
    %v3556 = vld [vmem:[#allocation6 + $0xa0] sm:$0xff]
    %v3557 = vld [vmem:[#allocation6 + $0xa8] sm:$0xff]
    %v3558 = vld [vmem:[#allocation7 + $0xa0] sm:$0xff]
    %v3559 = vld [vmem:[#allocation7 + $0xa8] sm:$0xff]
    %v3560 = vsub.f32 %v3554, %v3556
    %v3561 = vsub.f32 %v3555, %v3557
    %v3562 = vsub.f32 %v3558, %v3554
    %v3563 = vsub.f32 %v3559, %v3555
    %v3564 = vsub.f32 %v3562, %v3556
    %v3565 = vsub.f32 %v3563, %v3557
    %v3566 = vld [vmem:[#allocation8 + $0x40] sm:$0xff]
    %v3567 = vld [vmem:[#allocation8 + $0x48] sm:$0xff]
    %v3568 = vld [vmem:[#allocation9 + $0x40] sm:$0xff]
    %v3569 = vld [vmem:[#allocation9 + $0x48] sm:$0xff]
    %v3570 = vmul.f32 %v3566, %v3560
    %v3571 = vmul.f32 %v3567, %v3561
    %v3572 = vmul.f32 %v3568, %v3564
    %v3573 = vmul.f32 %v3569, %v3565
    %v3574 = vadd.f32 %v3570, %v3572
    %v3575 = vadd.f32 %v3571, %v3573
    %v3576 = vadd.f32 %v3552, %v3574
    %v3577 = vadd.f32 %v3553, %v3575
    %v3578 = vld [vmem:[#allocation5 + $0xb0] sm:$0xff]
    %v3579 = vld [vmem:[#allocation5 + $0xb8] sm:$0xff]
    %v3580 = vld [vmem:[#allocation6 + $0xb0] sm:$0xff]
    %v3581 = vld [vmem:[#allocation6 + $0xb8] sm:$0xff]
    %v3582 = vld [vmem:[#allocation7 + $0xb0] sm:$0xff]
    %v3583 = vld [vmem:[#allocation7 + $0xb8] sm:$0xff]
    %v3584 = vsub.f32 %v3578, %v3580
    %v3585 = vsub.f32 %v3579, %v3581
    %v3586 = vsub.f32 %v3582, %v3578
    %v3587 = vsub.f32 %v3583, %v3579
    %v3588 = vsub.f32 %v3586, %v3580
    %v3589 = vsub.f32 %v3587, %v3581
    %v3590 = vld [vmem:[#allocation8 + $0x50] sm:$0xff]
    %v3591 = vld [vmem:[#allocation8 + $0x58] sm:$0xff]
    %v3592 = vld [vmem:[#allocation9 + $0x50] sm:$0xff]
    %v3593 = vld [vmem:[#allocation9 + $0x58] sm:$0xff]
    %v3594 = vmul.f32 %v3590, %v3584
    %v3595 = vmul.f32 %v3591, %v3585
    %v3596 = vmul.f32 %v3592, %v3588
    %v3597 = vmul.f32 %v3593, %v3589
    %v3598 = vadd.f32 %v3594, %v3596
    %v3599 = vadd.f32 %v3595, %v3597
    %v3600 = vadd.f32 %v3576, %v3598
    %v3601 = vadd.f32 %v3577, %v3599
    %v3602 = vstv %s3459
    %v3603 = vmul.f32 %v3600, %v3602
    %v3604 = vmul.f32 %v3601, %v3602
    %v3605 = vmul.f32 %v3445, %v3603
    %v3606 = vmul.f32 %v3445, %v3604
    %3607 = vst [vmem:[#allocation25 + $0x10] sm:$0xff] %v3605
    %3608 = vst [vmem:[#allocation25 + $0x18] sm:$0xff] %v3606
    %v3609 = vld [vmem:[#allocation5 + $0xc0] sm:$0xff]
    %v3610 = vld [vmem:[#allocation5 + $0xc8] sm:$0xff]
    %v3611 = vld [vmem:[#allocation6 + $0xc0] sm:$0xff]
    %v3612 = vld [vmem:[#allocation6 + $0xc8] sm:$0xff]
    %v3613 = vld [vmem:[#allocation7 + $0xc0] sm:$0xff]
    %v3614 = vld [vmem:[#allocation7 + $0xc8] sm:$0xff]
    %v3615 = vsub.f32 %v3609, %v3611
    %v3616 = vsub.f32 %v3610, %v3612
    %v3617 = vsub.f32 %v3613, %v3609
    %v3618 = vsub.f32 %v3614, %v3610
    %v3619 = vsub.f32 %v3617, %v3611
    %v3620 = vsub.f32 %v3618, %v3612
    %v3621 = vld [vmem:[#allocation8] sm:$0xff]
    %v3622 = vld [vmem:[#allocation8 + $0x8] sm:$0xff]
    %v3623 = vld [vmem:[#allocation9] sm:$0xff]
    %v3624 = vld [vmem:[#allocation9 + $0x8] sm:$0xff]
    %v3625 = vmul.f32 %v3621, %v3615
    %v3626 = vmul.f32 %v3622, %v3616
    %v3627 = vmul.f32 %v3623, %v3619
    %v3628 = vmul.f32 %v3624, %v3620
    %v3629 = vadd.f32 %v3625, %v3627
    %v3630 = vadd.f32 %v3626, %v3628
    %v3631 = vld [vmem:[#allocation5 + $0xd0] sm:$0xff]
    %v3632 = vld [vmem:[#allocation5 + $0xd8] sm:$0xff]
    %v3633 = vld [vmem:[#allocation6 + $0xd0] sm:$0xff]
    %v3634 = vld [vmem:[#allocation6 + $0xd8] sm:$0xff]
    %v3635 = vld [vmem:[#allocation7 + $0xd0] sm:$0xff]
    %v3636 = vld [vmem:[#allocation7 + $0xd8] sm:$0xff]
    %v3637 = vsub.f32 %v3631, %v3633
    %v3638 = vsub.f32 %v3632, %v3634
    %v3639 = vsub.f32 %v3635, %v3631
    %v3640 = vsub.f32 %v3636, %v3632
    %v3641 = vsub.f32 %v3639, %v3633
    %v3642 = vsub.f32 %v3640, %v3634
    %v3643 = vld [vmem:[#allocation8 + $0x10] sm:$0xff]
    %v3644 = vld [vmem:[#allocation8 + $0x18] sm:$0xff]
    %v3645 = vld [vmem:[#allocation9 + $0x10] sm:$0xff]
    %v3646 = vld [vmem:[#allocation9 + $0x18] sm:$0xff]
    %v3647 = vmul.f32 %v3643, %v3637
    %v3648 = vmul.f32 %v3644, %v3638
    %v3649 = vmul.f32 %v3645, %v3641
    %v3650 = vmul.f32 %v3646, %v3642
    %v3651 = vadd.f32 %v3647, %v3649
    %v3652 = vadd.f32 %v3648, %v3650
    %v3653 = vadd.f32 %v3629, %v3651
    %v3654 = vadd.f32 %v3630, %v3652
    %v3655 = vld [vmem:[#allocation5 + $0xe0] sm:$0xff]
    %v3656 = vld [vmem:[#allocation5 + $0xe8] sm:$0xff]
    %v3657 = vld [vmem:[#allocation6 + $0xe0] sm:$0xff]
    %v3658 = vld [vmem:[#allocation6 + $0xe8] sm:$0xff]
    %v3659 = vld [vmem:[#allocation7 + $0xe0] sm:$0xff]
    %v3660 = vld [vmem:[#allocation7 + $0xe8] sm:$0xff]
    %v3661 = vsub.f32 %v3655, %v3657
    %v3662 = vsub.f32 %v3656, %v3658
    %v3663 = vsub.f32 %v3659, %v3655
    %v3664 = vsub.f32 %v3660, %v3656
    %v3665 = vsub.f32 %v3663, %v3657
    %v3666 = vsub.f32 %v3664, %v3658
    %v3667 = vld [vmem:[#allocation8 + $0x20] sm:$0xff]
    %v3668 = vld [vmem:[#allocation8 + $0x28] sm:$0xff]
    %v3669 = vld [vmem:[#allocation9 + $0x20] sm:$0xff]
    %v3670 = vld [vmem:[#allocation9 + $0x28] sm:$0xff]
    %v3671 = vmul.f32 %v3667, %v3661
    %v3672 = vmul.f32 %v3668, %v3662
    %v3673 = vmul.f32 %v3669, %v3665
    %v3674 = vmul.f32 %v3670, %v3666
    %v3675 = vadd.f32 %v3671, %v3673
    %v3676 = vadd.f32 %v3672, %v3674
    %v3677 = vadd.f32 %v3653, %v3675
    %v3678 = vadd.f32 %v3654, %v3676
    %v3679 = vld [vmem:[#allocation5 + $0xf0] sm:$0xff]
    %v3680 = vld [vmem:[#allocation5 + $0xf8] sm:$0xff]
    %v3681 = vld [vmem:[#allocation6 + $0xf0] sm:$0xff]
    %v3682 = vld [vmem:[#allocation6 + $0xf8] sm:$0xff]
    %v3683 = vld [vmem:[#allocation7 + $0xf0] sm:$0xff]
    %v3684 = vld [vmem:[#allocation7 + $0xf8] sm:$0xff]
    %v3685 = vsub.f32 %v3679, %v3681
    %v3686 = vsub.f32 %v3680, %v3682
    %v3687 = vsub.f32 %v3683, %v3679
    %v3688 = vsub.f32 %v3684, %v3680
    %v3689 = vsub.f32 %v3687, %v3681
    %v3690 = vsub.f32 %v3688, %v3682
    %v3691 = vld [vmem:[#allocation8 + $0x30] sm:$0xff]
    %v3692 = vld [vmem:[#allocation8 + $0x38] sm:$0xff]
    %v3693 = vld [vmem:[#allocation9 + $0x30] sm:$0xff]
    %v3694 = vld [vmem:[#allocation9 + $0x38] sm:$0xff]
    %v3695 = vmul.f32 %v3691, %v3685
    %v3696 = vmul.f32 %v3692, %v3686
    %v3697 = vmul.f32 %v3693, %v3689
    %v3698 = vmul.f32 %v3694, %v3690
    %v3699 = vadd.f32 %v3695, %v3697
    %v3700 = vadd.f32 %v3696, %v3698
    %v3701 = vadd.f32 %v3677, %v3699
    %v3702 = vadd.f32 %v3678, %v3700
    %v3703 = vld [vmem:[#allocation5 + $0x100] sm:$0xff]
    %v3704 = vld [vmem:[#allocation5 + $0x108] sm:$0xff]
    %v3705 = vld [vmem:[#allocation6 + $0x100] sm:$0xff]
    %v3706 = vld [vmem:[#allocation6 + $0x108] sm:$0xff]
    %v3707 = vld [vmem:[#allocation7 + $0x100] sm:$0xff]
    %v3708 = vld [vmem:[#allocation7 + $0x108] sm:$0xff]
    %v3709 = vsub.f32 %v3703, %v3705
    %v3710 = vsub.f32 %v3704, %v3706
    %v3711 = vsub.f32 %v3707, %v3703
    %v3712 = vsub.f32 %v3708, %v3704
    %v3713 = vsub.f32 %v3711, %v3705
    %v3714 = vsub.f32 %v3712, %v3706
    %v3715 = vld [vmem:[#allocation8 + $0x40] sm:$0xff]
    %v3716 = vld [vmem:[#allocation8 + $0x48] sm:$0xff]
    %v3717 = vld [vmem:[#allocation9 + $0x40] sm:$0xff]
    %v3718 = vld [vmem:[#allocation9 + $0x48] sm:$0xff]
    %v3719 = vmul.f32 %v3715, %v3709
    %v3720 = vmul.f32 %v3716, %v3710
    %v3721 = vmul.f32 %v3717, %v3713
    %v3722 = vmul.f32 %v3718, %v3714
    %v3723 = vadd.f32 %v3719, %v3721
    %v3724 = vadd.f32 %v3720, %v3722
    %v3725 = vadd.f32 %v3701, %v3723
    %v3726 = vadd.f32 %v3702, %v3724
    %v3727 = vld [vmem:[#allocation5 + $0x110] sm:$0xff]
    %v3728 = vld [vmem:[#allocation5 + $0x118] sm:$0xff]
    %v3729 = vld [vmem:[#allocation6 + $0x110] sm:$0xff]
    %v3730 = vld [vmem:[#allocation6 + $0x118] sm:$0xff]
    %v3731 = vld [vmem:[#allocation7 + $0x110] sm:$0xff]
    %v3732 = vld [vmem:[#allocation7 + $0x118] sm:$0xff]
    %v3733 = vsub.f32 %v3727, %v3729
    %v3734 = vsub.f32 %v3728, %v3730
    %v3735 = vsub.f32 %v3731, %v3727
    %v3736 = vsub.f32 %v3732, %v3728
    %v3737 = vsub.f32 %v3735, %v3729
    %v3738 = vsub.f32 %v3736, %v3730
    %v3739 = vld [vmem:[#allocation8 + $0x50] sm:$0xff]
    %v3740 = vld [vmem:[#allocation8 + $0x58] sm:$0xff]
    %v3741 = vld [vmem:[#allocation9 + $0x50] sm:$0xff]
    %v3742 = vld [vmem:[#allocation9 + $0x58] sm:$0xff]
    %v3743 = vmul.f32 %v3739, %v3733
    %v3744 = vmul.f32 %v3740, %v3734
    %v3745 = vmul.f32 %v3741, %v3737
    %v3746 = vmul.f32 %v3742, %v3738
    %v3747 = vadd.f32 %v3743, %v3745
    %v3748 = vadd.f32 %v3744, %v3746
    %v3749 = vadd.f32 %v3725, %v3747
    %v3750 = vadd.f32 %v3726, %v3748
    %v3751 = vmul.f32 %v3749, %v3602
    %v3752 = vmul.f32 %v3750, %v3602
    %v3753 = vmul.f32 %v3445, %v3751
    %v3754 = vmul.f32 %v3445, %v3752
    %3755 = vst [vmem:[#allocation25 + $0x20] sm:$0xff] %v3753
    %3756 = vst [vmem:[#allocation25 + $0x28] sm:$0xff] %v3754
    %v3757 = vld [vmem:[#allocation5 + $0x120] sm:$0xff]
    %v3758 = vld [vmem:[#allocation5 + $0x128] sm:$0xff]
    %v3759 = vld [vmem:[#allocation6 + $0x120] sm:$0xff]
    %v3760 = vld [vmem:[#allocation6 + $0x128] sm:$0xff]
    %v3761 = vld [vmem:[#allocation7 + $0x120] sm:$0xff]
    %v3762 = vld [vmem:[#allocation7 + $0x128] sm:$0xff]
    %v3763 = vsub.f32 %v3757, %v3759
    %v3764 = vsub.f32 %v3758, %v3760
    %v3765 = vsub.f32 %v3761, %v3757
    %v3766 = vsub.f32 %v3762, %v3758
    %v3767 = vsub.f32 %v3765, %v3759
    %v3768 = vsub.f32 %v3766, %v3760
    %v3769 = vld [vmem:[#allocation8] sm:$0xff]
    %v3770 = vld [vmem:[#allocation8 + $0x8] sm:$0xff]
    %v3771 = vld [vmem:[#allocation9] sm:$0xff]
    %v3772 = vld [vmem:[#allocation9 + $0x8] sm:$0xff]
    %v3773 = vmul.f32 %v3769, %v3763
    %v3774 = vmul.f32 %v3770, %v3764
    %v3775 = vmul.f32 %v3771, %v3767
    %v3776 = vmul.f32 %v3772, %v3768
    %v3777 = vadd.f32 %v3773, %v3775
    %v3778 = vadd.f32 %v3774, %v3776
    %v3779 = vld [vmem:[#allocation5 + $0x130] sm:$0xff]
    %v3780 = vld [vmem:[#allocation5 + $0x138] sm:$0xff]
    %v3781 = vld [vmem:[#allocation6 + $0x130] sm:$0xff]
    %v3782 = vld [vmem:[#allocation6 + $0x138] sm:$0xff]
    %v3783 = vld [vmem:[#allocation7 + $0x130] sm:$0xff]
    %v3784 = vld [vmem:[#allocation7 + $0x138] sm:$0xff]
    %v3785 = vsub.f32 %v3779, %v3781
    %v3786 = vsub.f32 %v3780, %v3782
    %v3787 = vsub.f32 %v3783, %v3779
    %v3788 = vsub.f32 %v3784, %v3780
    %v3789 = vsub.f32 %v3787, %v3781
    %v3790 = vsub.f32 %v3788, %v3782
    %v3791 = vld [vmem:[#allocation8 + $0x10] sm:$0xff]
    %v3792 = vld [vmem:[#allocation8 + $0x18] sm:$0xff]
    %v3793 = vld [vmem:[#allocation9 + $0x10] sm:$0xff]
    %v3794 = vld [vmem:[#allocation9 + $0x18] sm:$0xff]
    %v3795 = vmul.f32 %v3791, %v3785
    %v3796 = vmul.f32 %v3792, %v3786
    %v3797 = vmul.f32 %v3793, %v3789
    %v3798 = vmul.f32 %v3794, %v3790
    %v3799 = vadd.f32 %v3795, %v3797
    %v3800 = vadd.f32 %v3796, %v3798
    %v3801 = vadd.f32 %v3777, %v3799
    %v3802 = vadd.f32 %v3778, %v3800
    %v3803 = vld [vmem:[#allocation5 + $0x140] sm:$0xff]
    %v3804 = vld [vmem:[#allocation5 + $0x148] sm:$0xff]
    %v3805 = vld [vmem:[#allocation6 + $0x140] sm:$0xff]
    %v3806 = vld [vmem:[#allocation6 + $0x148] sm:$0xff]
    %v3807 = vld [vmem:[#allocation7 + $0x140] sm:$0xff]
    %v3808 = vld [vmem:[#allocation7 + $0x148] sm:$0xff]
    %v3809 = vsub.f32 %v3803, %v3805
    %v3810 = vsub.f32 %v3804, %v3806
    %v3811 = vsub.f32 %v3807, %v3803
    %v3812 = vsub.f32 %v3808, %v3804
    %v3813 = vsub.f32 %v3811, %v3805
    %v3814 = vsub.f32 %v3812, %v3806
    %v3815 = vld [vmem:[#allocation8 + $0x20] sm:$0xff]
    %v3816 = vld [vmem:[#allocation8 + $0x28] sm:$0xff]
    %v3817 = vld [vmem:[#allocation9 + $0x20] sm:$0xff]
    %v3818 = vld [vmem:[#allocation9 + $0x28] sm:$0xff]
    %v3819 = vmul.f32 %v3815, %v3809
    %v3820 = vmul.f32 %v3816, %v3810
    %v3821 = vmul.f32 %v3817, %v3813
    %v3822 = vmul.f32 %v3818, %v3814
    %v3823 = vadd.f32 %v3819, %v3821
    %v3824 = vadd.f32 %v3820, %v3822
    %v3825 = vadd.f32 %v3801, %v3823
    %v3826 = vadd.f32 %v3802, %v3824
    %v3827 = vld [vmem:[#allocation5 + $0x150] sm:$0xff]
    %v3828 = vld [vmem:[#allocation5 + $0x158] sm:$0xff]
    %v3829 = vld [vmem:[#allocation6 + $0x150] sm:$0xff]
    %v3830 = vld [vmem:[#allocation6 + $0x158] sm:$0xff]
    %v3831 = vld [vmem:[#allocation7 + $0x150] sm:$0xff]
    %v3832 = vld [vmem:[#allocation7 + $0x158] sm:$0xff]
    %v3833 = vsub.f32 %v3827, %v3829
    %v3834 = vsub.f32 %v3828, %v3830
    %v3835 = vsub.f32 %v3831, %v3827
    %v3836 = vsub.f32 %v3832, %v3828
    %v3837 = vsub.f32 %v3835, %v3829
    %v3838 = vsub.f32 %v3836, %v3830
    %v3839 = vld [vmem:[#allocation8 + $0x30] sm:$0xff]
    %v3840 = vld [vmem:[#allocation8 + $0x38] sm:$0xff]
    %v3841 = vld [vmem:[#allocation9 + $0x30] sm:$0xff]
    %v3842 = vld [vmem:[#allocation9 + $0x38] sm:$0xff]
    %v3843 = vmul.f32 %v3839, %v3833
    %v3844 = vmul.f32 %v3840, %v3834
    %v3845 = vmul.f32 %v3841, %v3837
    %v3846 = vmul.f32 %v3842, %v3838
    %v3847 = vadd.f32 %v3843, %v3845
    %v3848 = vadd.f32 %v3844, %v3846
    %v3849 = vadd.f32 %v3825, %v3847
    %v3850 = vadd.f32 %v3826, %v3848
    %v3851 = vld [vmem:[#allocation5 + $0x160] sm:$0xff]
    %v3852 = vld [vmem:[#allocation5 + $0x168] sm:$0xff]
    %v3853 = vld [vmem:[#allocation6 + $0x160] sm:$0xff]
    %v3854 = vld [vmem:[#allocation6 + $0x168] sm:$0xff]
    %v3855 = vld [vmem:[#allocation7 + $0x160] sm:$0xff]
    %v3856 = vld [vmem:[#allocation7 + $0x168] sm:$0xff]
    %v3857 = vsub.f32 %v3851, %v3853
    %v3858 = vsub.f32 %v3852, %v3854
    %v3859 = vsub.f32 %v3855, %v3851
    %v3860 = vsub.f32 %v3856, %v3852
    %v3861 = vsub.f32 %v3859, %v3853
    %v3862 = vsub.f32 %v3860, %v3854
    %v3863 = vld [vmem:[#allocation8 + $0x40] sm:$0xff]
    %v3864 = vld [vmem:[#allocation8 + $0x48] sm:$0xff]
    %v3865 = vld [vmem:[#allocation9 + $0x40] sm:$0xff]
    %v3866 = vld [vmem:[#allocation9 + $0x48] sm:$0xff]
    %v3867 = vmul.f32 %v3863, %v3857
    %v3868 = vmul.f32 %v3864, %v3858
    %v3869 = vmul.f32 %v3865, %v3861
    %v3870 = vmul.f32 %v3866, %v3862
    %v3871 = vadd.f32 %v3867, %v3869
    %v3872 = vadd.f32 %v3868, %v3870
    %v3873 = vadd.f32 %v3849, %v3871
    %v3874 = vadd.f32 %v3850, %v3872
    %v3875 = vld [vmem:[#allocation5 + $0x170] sm:$0xff]
    %v3876 = vld [vmem:[#allocation5 + $0x178] sm:$0xff]
    %v3877 = vld [vmem:[#allocation6 + $0x170] sm:$0xff]
    %v3878 = vld [vmem:[#allocation6 + $0x178] sm:$0xff]
    %v3879 = vld [vmem:[#allocation7 + $0x170] sm:$0xff]
    %v3880 = vld [vmem:[#allocation7 + $0x178] sm:$0xff]
    %v3881 = vsub.f32 %v3875, %v3877
    %v3882 = vsub.f32 %v3876, %v3878
    %v3883 = vsub.f32 %v3879, %v3875
    %v3884 = vsub.f32 %v3880, %v3876
    %v3885 = vsub.f32 %v3883, %v3877
    %v3886 = vsub.f32 %v3884, %v3878
    %v3887 = vld [vmem:[#allocation8 + $0x50] sm:$0xff]
    %v3888 = vld [vmem:[#allocation8 + $0x58] sm:$0xff]
    %v3889 = vld [vmem:[#allocation9 + $0x50] sm:$0xff]
    %v3890 = vld [vmem:[#allocation9 + $0x58] sm:$0xff]
    %v3891 = vmul.f32 %v3887, %v3881
    %v3892 = vmul.f32 %v3888, %v3882
    %v3893 = vmul.f32 %v3889, %v3885
    %v3894 = vmul.f32 %v3890, %v3886
    %v3895 = vadd.f32 %v3891, %v3893
    %v3896 = vadd.f32 %v3892, %v3894
    %v3897 = vadd.f32 %v3873, %v3895
    %v3898 = vadd.f32 %v3874, %v3896
    %v3899 = vmul.f32 %v3897, %v3602
    %v3900 = vmul.f32 %v3898, %v3602
    %v3901 = vmul.f32 %v3445, %v3899
    %v3902 = vmul.f32 %v3445, %v3900
    %3903 = vst [vmem:[#allocation25 + $0x30] sm:$0xff] %v3901
    %3904 = vst [vmem:[#allocation25 + $0x38] sm:$0xff] %v3902
    // Predicated region
    $region70: #{tpu_custom_call.1} parent=1 // pred_check
      _
    $region71: #{tpu_custom_call.1} parent=1 // pred_check_branch
      %3906 = sbr.rel (0) target = $region73
    $region72: #{tpu_custom_call.1} parent=1 // pred_region
      %3908 = vsyncadd [#allocation13], 0
      %s3910 = sshll.u32 [#allocation25], 4
      %s3911 = int_to_ptr.vmem [resolvable:$true] %s3910
      %s3912 = sshll.u32 %s9, 4
      %s3913 = int_to_ptr.hbm [resolvable:$true] %s3912
      %3915 = dma.vmem_to_hbm [thread:$0]  %s3911, 1280, %s3913, [#allocation13]
    $region73: #{tpu_custom_call.1} parent=1 // pred_fallthru
      _
    // Predicated region
    $region74: #{tpu_custom_call.1} parent=1 // pred_check
      _
    $region75: #{tpu_custom_call.1} parent=1 // pred_check_branch
      %3917 = sbr.rel (0) target = $region77
    $region76: #{tpu_custom_call.1} parent=1 // pred_region
      %3919 = dma.done [#allocation13], 1280
    $region77: #{tpu_custom_call.1} parent=1 // pred_fallthru
      _
    %3920 = vsyncpa [#allocation12], 1
    %3921 = vsyncpa [#allocation15], 1
    %3922 = vsyncpa [#allocation18], 1
    %3923 = vsyncpa [#allocation21], 1
    %3924 = vsyncpa [#allocation24], 1
    %3925 = vsyncpa [#allocation13], 1

</llo_original>
